<compile_context>
chip_gen: v7x
topology: tpu7x:2x2x1
jax: 0.10.0
libtpu: 0.0.40
codegen_flags: <defaults>
</compile_context>

<pallas_src>
import functools

import jax
import jax.numpy as jnp
from jax.experimental import pallas as pl
from jax.experimental.pallas import tpu as pltpu


# ---------------------------------------------------------------------------
# Gauss-form complex matrix products on the MXU (3 real matmuls each).
# DFT constants arrive already in `md` dtype; data operands are cast to `md`
# here, accumulation is always f32.
# ---------------------------------------------------------------------------
def _gauss_lmul(fr, fi, fs, br, bi, md):
    """(fr + i*fi) @ (br + i*bi);  fs = fr + fi (precomputed)."""
    br_m = br.astype(md)
    bi_m = bi.astype(md)
    bs_m = (br + bi).astype(md)
    rr = jnp.dot(fr, br_m, preferred_element_type=jnp.float32)
    ii = jnp.dot(fi, bi_m, preferred_element_type=jnp.float32)
    mm = jnp.dot(fs, bs_m, preferred_element_type=jnp.float32)
    return rr - ii, mm - rr - ii


def _gauss_lmul_conj(fr, fi, fd, br, bi, md):
    """conj(fr + i*fi) @ (br + i*bi);  fd = fr - fi (precomputed)."""
    br_m = br.astype(md)
    bi_m = bi.astype(md)
    bs_m = (br + bi).astype(md)
    rr = jnp.dot(fr, br_m, preferred_element_type=jnp.float32)
    ii = jnp.dot(fi, bi_m, preferred_element_type=jnp.float32)
    mm = jnp.dot(fd, bs_m, preferred_element_type=jnp.float32)
    return rr + ii, mm - rr + ii


def _gauss_rmul(ar, ai, wr, wi, ws, md):
    """(ar + i*ai) @ (wr + i*wi);  ws = wr + wi (precomputed)."""
    ar_m = ar.astype(md)
    ai_m = ai.astype(md)
    as_m = (ar + ai).astype(md)
    rr = jnp.dot(ar_m, wr, preferred_element_type=jnp.float32)
    ii = jnp.dot(ai_m, wi, preferred_element_type=jnp.float32)
    mm = jnp.dot(as_m, ws, preferred_element_type=jnp.float32)
    return rr - ii, mm - rr - ii


def _gauss_rmul_conj(ar, ai, wr, wi, ws, md):
    """(ar + i*ai) @ conj(wr + i*wi);  ws = wr + wi (precomputed)."""
    ar_m = ar.astype(md)
    ai_m = ai.astype(md)
    ad_m = (ai - ar).astype(md)
    rr = jnp.dot(ar_m, wr, preferred_element_type=jnp.float32)
    ii = jnp.dot(ai_m, wi, preferred_element_type=jnp.float32)
    mm = jnp.dot(ad_m, ws, preferred_element_type=jnp.float32)
    return rr + ii, mm + rr - ii


# ---------------------------------------------------------------------------
# Coil-chunk layout shuffles (static K; no-ops when K == 1, i.e. large W).
# ---------------------------------------------------------------------------
def _rows_to_lanes(a, K, H, W):
    """(K*H, W) row-stacked -> (H, K*W) lane-stacked."""
    if K == 1:
        return a
    return jnp.concatenate([a[k * H:(k + 1) * H, :] for k in range(K)], axis=1)


def _lanes_to_rows(a, K, H, W):
    """(H, K*W) lane-stacked -> (K*H, W) row-stacked."""
    if K == 1:
        return a
    return jnp.concatenate([a[:, k * W:(k + 1) * W] for k in range(K)], axis=0)


# ---------------------------------------------------------------------------
# Kernel: one (batch b, coil-chunk cc) tile per grid step.  K = coils / chunk.
# ---------------------------------------------------------------------------
def _data_vs_kernel(md, K, M, H, W,
                    x_re_ref, x_im_ref, s_re_ref, s_im_ref,
                    y_re_ref, y_im_ref, mask_ref,
                    fh_re_ref, fh_im_ref, fh_sum_ref, fh_dif_ref,
                    fw_re_ref, fw_im_ref, fw_sum_ref,
                    ab_ref,
                    o_re_ref, o_im_ref):
    cc = pl.program_id(1)
    last_cc = pl.num_programs(1) - 1
    f32 = jnp.float32

    alpha = ab_ref[0]
    beta = ab_ref[1]

    x_re = x_re_ref[0]                                        # (M, H, W) f32
    x_im = x_im_ref[0]
    s_re = s_re_ref[0].astype(f32).reshape(K, M, H, W)        # chunk's smaps
    s_im = s_im_ref[0].astype(f32).reshape(K, M, H, W)

    # ---- forward SoftSense (image domain): ci_k = sum_m x_m * smap_{k,m}
    ci_re = jnp.sum(x_re[None] * s_re - x_im[None] * s_im, axis=1)   # (K, H, W)
    ci_im = jnp.sum(x_re[None] * s_im + x_im[None] * s_re, axis=1)

    fh_re = fh_re_ref[...]
    fh_im = fh_im_ref[...]
    fh_sum = fh_sum_ref[...]
    fh_dif = fh_dif_ref[...]
    fw_re = fw_re_ref[...]
    fw_im = fw_im_ref[...]
    fw_sum = fw_sum_ref[...]

    # ---- ortho 2-D DFT, coil-chunked so the MXU stays fed:
    #   FW-side right-multiplies on the row-stacked (K*H, W) slab,
    #   FH-side left-multiplies on the lane-stacked (H, K*W) slab.
    t_re, t_im = _gauss_rmul(ci_re.reshape(K * H, W), ci_im.reshape(K * H, W),
                             fw_re, fw_im, fw_sum, md)               # (K*H, W)
    t_re = _rows_to_lanes(t_re, K, H, W)                             # (H, K*W)
    t_im = _rows_to_lanes(t_im, K, H, W)
    k_re, k_im = _gauss_lmul(fh_re, fh_im, fh_sum, t_re, t_im, md)   # (H, K*W)

    # ---- variable-splitting data consistency (DCB), lane-stacked layout:
    # k_dc = (1-mask)*A_x + mask*(alpha*A_x + (1-alpha)*y)
    #      = A_x + (1-alpha)*mask*(y - A_x)        (identical for any real mask)
    wgt = (1.0 - alpha) * mask_ref[0]                                # (H, K*W)
    kdc_re = k_re + wgt * (y_re_ref[0, 0].astype(f32) - k_re)
    kdc_im = k_im + wgt * (y_im_ref[0, 0].astype(f32) - k_im)

    # ---- ortho 2-D inverse DFT: img = conj(FH) @ k_dc @ conj(FW)
    v_re, v_im = _gauss_lmul_conj(fh_re, fh_im, fh_dif, kdc_re, kdc_im, md)
    v_re = _lanes_to_rows(v_re, K, H, W)                             # (K*H, W)
    v_im = _lanes_to_rows(v_im, K, H, W)
    i_re, i_im = _gauss_rmul_conj(v_re, v_im, fw_re, fw_im, fw_sum, md)
    img_re = i_re.reshape(K, H, W)
    img_im = i_im.reshape(K, H, W)

    # ---- adjoint coil combine for this chunk: sum_k conj(smap_{k,m}) * img_k
    contrib_re = jnp.sum(s_re * img_re[:, None] + s_im * img_im[:, None], axis=0)
    contrib_im = jnp.sum(s_re * img_im[:, None] - s_im * img_re[:, None], axis=0)

    # x_dc accumulates directly in the coil-axis-resident output block.
    @pl.when(cc == 0)
    def _():
        o_re_ref[0] = contrib_re
        o_im_ref[0] = contrib_im

    @pl.when(cc > 0)
    def _():
        o_re_ref[0] = o_re_ref[0] + contrib_re
        o_im_ref[0] = o_im_ref[0] + contrib_im

    # ---- weighted-averaging block (WAB) on the last coil chunk
    @pl.when(cc == last_cc)
    def _():
        omb = 1.0 - beta
        o_re_ref[0] = beta * x_re + omb * o_re_ref[0]
        o_im_ref[0] = beta * x_im + omb * o_im_ref[0]


# ---------------------------------------------------------------------------
# Wrapper helpers
# ---------------------------------------------------------------------------
def _dft_matrix(n):
    """Ortho-normalised DFT matrix (real, imag), float32."""
    k = jnp.arange(n, dtype=jnp.float32)
    ang = -2.0 * jnp.pi * jnp.outer(k, k) / n
    scale = 1.0 / jnp.sqrt(jnp.float32(n))
    return jnp.cos(ang) * scale, jnp.sin(ang) * scale


def _pick_chunk_c(C, M, H, W, stream_bytes, target_lanes=256,
                  smaps_budget_bytes=12 << 20):
    """Smallest divisor k of C with k*W >= target_lanes, subject to the
    double-buffered per-chunk smaps stream staying inside a VMEM budget."""
    divisors = [k for k in range(1, C + 1) if C % k == 0]

    def fits(k):
        return 2 * 2 * k * M * H * W * stream_bytes <= smaps_budget_bytes

    pick = divisors[0]
    for k in divisors:
        if not fits(k):
            break
        pick = k
        if k * W >= target_lanes:
            break
    return pick


def _vmem_limit_bytes(M, H, W, K, md, sd):
    """Per-step VMEM: double-buffered pipelined blocks + in-kernel temporaries
    + compiler scratch headroom, capped generation-aware."""
    f32 = 4
    mdb = jnp.dtype(md).itemsize
    sdb = jnp.dtype(sd).itemsize
    dbl = 2                                           # Pallas double-buffering
    blocks = 0
    blocks += dbl * 2 * M * H * W * f32               # x re/im blocks
    blocks += dbl * 2 * K * M * H * W * sdb           # smaps re/im per-chunk blocks
    blocks += dbl * 2 * K * H * W * sdb               # y re/im per-chunk blocks
    blocks += dbl * K * H * W * f32                   # mask block (lane-tiled)
    blocks += dbl * (4 * H * H + 3 * W * W) * mdb     # DFT constants
    blocks += dbl * 2 * M * H * W * f32               # output blocks (resident)
    # In-kernel f32 temporaries: upcast smaps / ci / img / combine products
    # (~6 K*M*H*W planes live) plus T/k/kdc/V/... (~16 K*H*W planes).
    temps = (6 * K * M * H * W + 16 * K * H * W) * f32
    limit = blocks + temps + (8 << 20)                # Mosaic internal scratch headroom
    try:
        cap = int(pltpu.get_tpu_info().vmem_capacity_bytes * 0.85)  # ~54 MiB v7x, ~109 MiB v5e/v6e
    except Exception:
        cap = 48 << 20                                # safe everywhere
    return int(min(max(limit, 24 << 20), cap))


# ---------------------------------------------------------------------------
# Public wrapper
# ---------------------------------------------------------------------------
def data_vs_layer(x_re, x_im, y_re, y_im, s_re, s_im, mask, alpha, beta,
                  *, matmul_dtype=jnp.bfloat16, stream_dtype=jnp.bfloat16):
    """Pallas implementation of DataVSLayer.forward (real/imag carried separately).

    matmul_dtype: MXU operand dtype (bf16 is native on v5e/v6e/v7x; accumulation
                  is always f32). Pass float32 for bit-accurate DFT matmuls.
    stream_dtype: HBM streaming dtype for smaps and y (the dominant per-coil
                  traffic). Elementwise math runs in f32 regardless.
    """
    B, M, H, W = x_re.shape
    C = y_re.shape[1]
    md = jnp.dtype(matmul_dtype)
    sd = jnp.dtype(stream_dtype)

    K = _pick_chunk_c(C, M, H, W, sd.itemsize)        # coils per grid step
    CC = C // K

    # smaps: [B, C, M, H, W] -> [B, C*M, H, W]; per-chunk block is (1, K*M, H, W).
    s_re_f = s_re.reshape(B, C * M, H, W).astype(sd)
    s_im_f = s_im.reshape(B, C * M, H, W).astype(sd)

    # y: lane-stack each chunk's coils -> [B, CC, H, K*W]; this is the layout
    # the k-space DC step runs in (dense lanes, no in-kernel relayout of y).
    def _lane_stack_y(y):
        return (y.reshape(B, CC, K, H, W).transpose(0, 1, 3, 2, 4)
                 .reshape(B, CC, H, K * W).astype(sd))

    y_re_f = _lane_stack_y(y_re)
    y_im_f = _lane_stack_y(y_im)

    # mask is coil-invariant: tile along the chunk's lane axis once, outside.
    mask_f = jnp.broadcast_to(mask[:, :, None, :], (B, H, K, W))
    mask_f = mask_f.reshape(B, H, K * W).astype(jnp.float32)

    fh_re, fh_im = _dft_matrix(H)
    fw_re, fw_im = _dft_matrix(W)
    fh_sum = (fh_re + fh_im).astype(md)
    fh_dif = (fh_re - fh_im).astype(md)
    fw_sum = (fw_re + fw_im).astype(md)
    fh_re = fh_re.astype(md)
    fh_im = fh_im.astype(md)
    fw_re = fw_re.astype(md)
    fw_im = fw_im.astype(md)

    ab = jnp.asarray([alpha, beta], dtype=jnp.float32)   # [alpha, beta] -> SMEM

    kernel = functools.partial(_data_vs_kernel, md, K, M, H, W)

    grid_spec = pltpu.PrefetchScalarGridSpec(
        num_scalar_prefetch=0,
        grid=(B, CC),                                       # coil-chunk axis last
        in_specs=[
            pl.BlockSpec((1, M, H, W), lambda b, c: (b, 0, 0, 0)),      # x_re (coil-invariant)
            pl.BlockSpec((1, M, H, W), lambda b, c: (b, 0, 0, 0)),      # x_im
            pl.BlockSpec((1, K * M, H, W), lambda b, c: (b, c, 0, 0)),  # smaps_re chunk
            pl.BlockSpec((1, K * M, H, W), lambda b, c: (b, c, 0, 0)),  # smaps_im chunk
            pl.BlockSpec((1, 1, H, K * W), lambda b, c: (b, c, 0, 0)),  # y_re chunk (lane-stacked)
            pl.BlockSpec((1, 1, H, K * W), lambda b, c: (b, c, 0, 0)),  # y_im chunk
            pl.BlockSpec((1, H, K * W), lambda b, c: (b, 0, 0)),        # mask (lane-tiled)
            pl.BlockSpec((H, H), lambda b, c: (0, 0)),                  # FH_re
            pl.BlockSpec((H, H), lambda b, c: (0, 0)),                  # FH_im
            pl.BlockSpec((H, H), lambda b, c: (0, 0)),                  # FH_re + FH_im
            pl.BlockSpec((H, H), lambda b, c: (0, 0)),                  # FH_re - FH_im
            pl.BlockSpec((W, W), lambda b, c: (0, 0)),                  # FW_re
            pl.BlockSpec((W, W), lambda b, c: (0, 0)),                  # FW_im
            pl.BlockSpec((W, W), lambda b, c: (0, 0)),                  # FW_re + FW_im
            pl.BlockSpec(memory_space=pltpu.MemorySpace.SMEM),          # [alpha, beta]
        ],
        out_specs=[
            pl.BlockSpec((1, M, H, W), lambda b, c: (b, 0, 0, 0)),      # out_re (coil-resident acc)
            pl.BlockSpec((1, M, H, W), lambda b, c: (b, 0, 0, 0)),      # out_im
        ],
    )

    out_re, out_im = pl.pallas_call(
        kernel,
        out_shape=(jax.ShapeDtypeStruct((B, M, H, W), jnp.float32),
                   jax.ShapeDtypeStruct((B, M, H, W), jnp.float32)),
        grid_spec=grid_spec,
        compiler_params=pltpu.CompilerParams(
            dimension_semantics=("parallel", "arbitrary"),
            vmem_limit_bytes=_vmem_limit_bytes(M, H, W, K, md, sd),
        ),
    )(x_re, x_im, s_re_f, s_im_f, y_re_f, y_im_f, mask_f,
      fh_re, fh_im, fh_sum, fh_dif, fw_re, fw_im, fw_sum, ab)
    return out_re, out_im


# ---------------------------------------------------------------------------
# Pure-JAX complex reference of DataVSLayer.forward (for verification)
# ---------------------------------------------------------------------------
def _reference(x, y, smaps, mask, alpha, beta):
    A_x = jnp.fft.fft2(jnp.sum(x[:, None] * smaps, axis=2), norm="ortho")   # [B,C,H,W]
    m = mask[:, None]
    k_dc = (1.0 - m) * A_x + m * (alpha * A_x + (1.0 - alpha) * y)
    img = jnp.fft.ifft2(k_dc, norm="ortho")                                  # [B,C,H,W]
    x_dc = jnp.sum(jnp.conj(smaps) * img[:, :, None], axis=1)                # [B,M,H,W]
    return beta * x + (1.0 - beta) * x_dc


if __name__ == "__main__":
    B, C, M, H, W = 2, 4, 2, 16, 16
    alpha_init, beta_init = 0.9, 0.1   # DCB / WAB parameters, shape (1,) each in torch

    key = jax.random.PRNGKey(0)
    kx, ky, ks, km = jax.random.split(key, 4)
    x_re = jax.random.normal(kx, (B, M, H, W), jnp.float32)
    x_im = jax.random.normal(jax.random.fold_in(kx, 1), (B, M, H, W), jnp.float32)
    y_re = jax.random.normal(ky, (B, C, H, W), jnp.float32)
    y_im = jax.random.normal(jax.random.fold_in(ky, 1), (B, C, H, W), jnp.float32)
    s_re = jax.random.normal(ks, (B, C, M, H, W), jnp.float32) * 0.5
    s_im = jax.random.normal(jax.random.fold_in(ks, 1), (B, C, M, H, W), jnp.float32) * 0.5
    # column (phase-encode) undersampling mask, broadcast over rows
    line_mask = (jax.random.uniform(km, (B, 1, W)) > 0.5).astype(jnp.float32)
    mask = jnp.broadcast_to(line_mask, (B, H, W))

    ref = _reference(x_re + 1j * x_im, y_re + 1j * y_im,
                     s_re + 1j * s_im, mask, alpha_init, beta_init)

    # ---- f32 MXU + f32 streaming: tight accuracy check
    out_re, out_im = data_vs_layer(x_re, x_im, y_re, y_im, s_re, s_im, mask,
                                   alpha_init, beta_init,
                                   matmul_dtype=jnp.float32,
                                   stream_dtype=jnp.float32)
    out_re = jax.block_until_ready(out_re)
    out_im = jax.block_until_ready(out_im)
    assert jnp.allclose(out_re, jnp.real(ref), atol=1e-3, rtol=1e-3)
    assert jnp.allclose(out_im, jnp.imag(ref), atol=1e-3, rtol=1e-3)

    # ---- default fast path: bf16 MXU operands + bf16 smaps/y streaming
    bf_re, bf_im = data_vs_layer(x_re, x_im, y_re, y_im, s_re, s_im, mask,
                                 alpha_init, beta_init)
    bf_re = jax.block_until_ready(bf_re)
    bf_im = jax.block_until_ready(bf_im)
    rel = jnp.linalg.norm((bf_re + 1j * bf_im) - ref) / jnp.linalg.norm(ref)
    assert float(rel) < 1e-1, f"bf16 path relative L2 error too large: {float(rel)}"

    print("KERNEL_OK")
</pallas_src>

<mosaic_0001>
module attributes {stable_mosaic.version = 11 : i64} {
  func.func @_data_vs_kernel(%arg0: i32, %arg1: i32, %arg2: memref<1x2x16x16xf32, #tpu.memory_space<vmem>>, %arg3: memref<1x2x16x16xf32, #tpu.memory_space<vmem>>, %arg4: memref<1x8x16x16xf32, #tpu.memory_space<vmem>>, %arg5: memref<1x8x16x16xf32, #tpu.memory_space<vmem>>, %arg6: memref<1x1x16x64xf32, #tpu.memory_space<vmem>>, %arg7: memref<1x1x16x64xf32, #tpu.memory_space<vmem>>, %arg8: memref<1x16x64xf32, #tpu.memory_space<vmem>>, %arg9: memref<16x16xf32, #tpu.memory_space<vmem>>, %arg10: memref<16x16xf32, #tpu.memory_space<vmem>>, %arg11: memref<16x16xf32, #tpu.memory_space<vmem>>, %arg12: memref<16x16xf32, #tpu.memory_space<vmem>>, %arg13: memref<16x16xf32, #tpu.memory_space<vmem>>, %arg14: memref<16x16xf32, #tpu.memory_space<vmem>>, %arg15: memref<16x16xf32, #tpu.memory_space<vmem>>, %arg16: memref<2xf32, #tpu.memory_space<smem>>, %arg17: memref<1x2x16x16xf32, #tpu.memory_space<vmem>>, %arg18: memref<1x2x16x16xf32, #tpu.memory_space<vmem>>) attributes {dimension_semantics = [#tpu.dimension_semantics<parallel>, #tpu.dimension_semantics<arbitrary>], iteration_bounds = array<i64: 2, 1>, scalar_prefetch = 0 : i64, scratch_operands = 0 : i64, tpu.core_type = #tpu.core_type<tc>, window_params = [{transform_indices = @transform_0, window_bounds = array<i64: 1, 2, 16, 16>}, {transform_indices = @transform_1, window_bounds = array<i64: 1, 2, 16, 16>}, {transform_indices = @transform_2, window_bounds = array<i64: 1, 8, 16, 16>}, {transform_indices = @transform_3, window_bounds = array<i64: 1, 8, 16, 16>}, {transform_indices = @transform_4, window_bounds = array<i64: 1, 1, 16, 64>}, {transform_indices = @transform_5, window_bounds = array<i64: 1, 1, 16, 64>}, {transform_indices = @transform_6, window_bounds = array<i64: 1, 16, 64>}, {pipeline_mode = #tpu.pipeline_mode<synchronous>, transform_indices = @transform_7, window_bounds = array<i64: 16, 16>}, {pipeline_mode = #tpu.pipeline_mode<synchronous>, transform_indices = @transform_8, window_bounds = array<i64: 16, 16>}, {pipeline_mode = #tpu.pipeline_mode<synchronous>, transform_indices = @transform_9, window_bounds = array<i64: 16, 16>}, {pipeline_mode = #tpu.pipeline_mode<synchronous>, transform_indices = @transform_10, window_bounds = array<i64: 16, 16>}, {pipeline_mode = #tpu.pipeline_mode<synchronous>, transform_indices = @transform_11, window_bounds = array<i64: 16, 16>}, {pipeline_mode = #tpu.pipeline_mode<synchronous>, transform_indices = @transform_12, window_bounds = array<i64: 16, 16>}, {pipeline_mode = #tpu.pipeline_mode<synchronous>, transform_indices = @transform_13, window_bounds = array<i64: 16, 16>}, {transform_indices = @transform_14, window_bounds = array<i64: 2>}, {transform_indices = @transform_15, window_bounds = array<i64: 1, 2, 16, 16>}, {transform_indices = @transform_16, window_bounds = array<i64: 1, 2, 16, 16>}]} {
    %c0 = arith.constant 0 : index
    %0 = memref.load %arg16[%c0] : memref<2xf32, #tpu.memory_space<smem>>
    %c1 = arith.constant 1 : index
    %1 = memref.load %arg16[%c1] : memref<2xf32, #tpu.memory_space<smem>>
    %c0_0 = arith.constant 0 : index
    %c0_1 = arith.constant 0 : index
    %c0_2 = arith.constant 0 : index
    %c0_3 = arith.constant 0 : index
    %2 = vector.load %arg2[%c0_0, %c0_1, %c0_2, %c0_3] : memref<1x2x16x16xf32, #tpu.memory_space<vmem>>, vector<1x2x16x16xf32>
    %3 = vector.shape_cast %2 : vector<1x2x16x16xf32> to vector<2x16x16xf32>
    %c0_4 = arith.constant 0 : index
    %c0_5 = arith.constant 0 : index
    %c0_6 = arith.constant 0 : index
    %c0_7 = arith.constant 0 : index
    %4 = vector.load %arg3[%c0_4, %c0_5, %c0_6, %c0_7] : memref<1x2x16x16xf32, #tpu.memory_space<vmem>>, vector<1x2x16x16xf32>
    %5 = vector.shape_cast %4 : vector<1x2x16x16xf32> to vector<2x16x16xf32>
    %c0_8 = arith.constant 0 : index
    %c0_9 = arith.constant 0 : index
    %c0_10 = arith.constant 0 : index
    %c0_11 = arith.constant 0 : index
    %6 = vector.load %arg4[%c0_8, %c0_9, %c0_10, %c0_11] : memref<1x8x16x16xf32, #tpu.memory_space<vmem>>, vector<1x8x16x16xf32>
    %7 = vector.shape_cast %6 : vector<1x8x16x16xf32> to vector<8x16x16xf32>
    %8 = vector.shape_cast %7 : vector<8x16x16xf32> to vector<4x2x16x16xf32>
    %c0_12 = arith.constant 0 : index
    %c0_13 = arith.constant 0 : index
    %c0_14 = arith.constant 0 : index
    %c0_15 = arith.constant 0 : index
    %9 = vector.load %arg5[%c0_12, %c0_13, %c0_14, %c0_15] : memref<1x8x16x16xf32, #tpu.memory_space<vmem>>, vector<1x8x16x16xf32>
    %10 = vector.shape_cast %9 : vector<1x8x16x16xf32> to vector<8x16x16xf32>
    %11 = vector.shape_cast %10 : vector<8x16x16xf32> to vector<4x2x16x16xf32>
    %12 = vector.shape_cast %3 : vector<2x16x16xf32> to vector<1x2x16x16xf32>
    %13 = vector.broadcast %12 : vector<1x2x16x16xf32> to vector<4x2x16x16xf32>
    %14 = arith.mulf %13, %8 : vector<4x2x16x16xf32>
    %15 = vector.shape_cast %5 : vector<2x16x16xf32> to vector<1x2x16x16xf32>
    %16 = vector.broadcast %15 : vector<1x2x16x16xf32> to vector<4x2x16x16xf32>
    %17 = arith.mulf %16, %11 : vector<4x2x16x16xf32>
    %18 = arith.subf %14, %17 : vector<4x2x16x16xf32>
    %cst = arith.constant dense<0.000000e+00> : vector<4x16x16xf32>
    %19 = vector.multi_reduction <add>, %18, %cst [1] : vector<4x2x16x16xf32> to vector<4x16x16xf32>
    %20 = vector.shape_cast %3 : vector<2x16x16xf32> to vector<1x2x16x16xf32>
    %21 = vector.broadcast %20 : vector<1x2x16x16xf32> to vector<4x2x16x16xf32>
    %22 = arith.mulf %21, %11 : vector<4x2x16x16xf32>
    %23 = vector.shape_cast %5 : vector<2x16x16xf32> to vector<1x2x16x16xf32>
    %24 = vector.broadcast %23 : vector<1x2x16x16xf32> to vector<4x2x16x16xf32>
    %25 = arith.mulf %24, %8 : vector<4x2x16x16xf32>
    %26 = arith.addf %22, %25 : vector<4x2x16x16xf32>
    %cst_16 = arith.constant dense<0.000000e+00> : vector<4x16x16xf32>
    %27 = vector.multi_reduction <add>, %26, %cst_16 [1] : vector<4x2x16x16xf32> to vector<4x16x16xf32>
    %c0_17 = arith.constant 0 : index
    %c0_18 = arith.constant 0 : index
    %28 = vector.load %arg9[%c0_17, %c0_18] : memref<16x16xf32, #tpu.memory_space<vmem>>, vector<16x16xf32>
    %c0_19 = arith.constant 0 : index
    %c0_20 = arith.constant 0 : index
    %29 = vector.load %arg10[%c0_19, %c0_20] : memref<16x16xf32, #tpu.memory_space<vmem>>, vector<16x16xf32>
    %c0_21 = arith.constant 0 : index
    %c0_22 = arith.constant 0 : index
    %30 = vector.load %arg11[%c0_21, %c0_22] : memref<16x16xf32, #tpu.memory_space<vmem>>, vector<16x16xf32>
    %c0_23 = arith.constant 0 : index
    %c0_24 = arith.constant 0 : index
    %31 = vector.load %arg12[%c0_23, %c0_24] : memref<16x16xf32, #tpu.memory_space<vmem>>, vector<16x16xf32>
    %c0_25 = arith.constant 0 : index
    %c0_26 = arith.constant 0 : index
    %32 = vector.load %arg13[%c0_25, %c0_26] : memref<16x16xf32, #tpu.memory_space<vmem>>, vector<16x16xf32>
    %c0_27 = arith.constant 0 : index
    %c0_28 = arith.constant 0 : index
    %33 = vector.load %arg14[%c0_27, %c0_28] : memref<16x16xf32, #tpu.memory_space<vmem>>, vector<16x16xf32>
    %c0_29 = arith.constant 0 : index
    %c0_30 = arith.constant 0 : index
    %34 = vector.load %arg15[%c0_29, %c0_30] : memref<16x16xf32, #tpu.memory_space<vmem>>, vector<16x16xf32>
    %35 = vector.shape_cast %19 : vector<4x16x16xf32> to vector<64x16xf32>
    %36 = vector.shape_cast %27 : vector<4x16x16xf32> to vector<64x16xf32>
    %37 = arith.addf %35, %36 : vector<64x16xf32>
    %cst_31 = arith.constant dense<0.000000e+00> : vector<64x16xf32>
    %38 = tpu.matmul %35, %32, %cst_31 {dimension_numbers = #tpu.dot_dimension_numbers<[1], [0], [0], [1], [0, 0, 1, 1], [], []>} : vector<64x16xf32>, vector<16x16xf32>, vector<64x16xf32> -> vector<64x16xf32>
    %cst_32 = arith.constant dense<0.000000e+00> : vector<64x16xf32>
    %39 = tpu.matmul %36, %33, %cst_32 {dimension_numbers = #tpu.dot_dimension_numbers<[1], [0], [0], [1], [0, 0, 1, 1], [], []>} : vector<64x16xf32>, vector<16x16xf32>, vector<64x16xf32> -> vector<64x16xf32>
    %cst_33 = arith.constant dense<0.000000e+00> : vector<64x16xf32>
    %40 = tpu.matmul %37, %34, %cst_33 {dimension_numbers = #tpu.dot_dimension_numbers<[1], [0], [0], [1], [0, 0, 1, 1], [], []>} : vector<64x16xf32>, vector<16x16xf32>, vector<64x16xf32> -> vector<64x16xf32>
    %41 = arith.subf %38, %39 : vector<64x16xf32>
    %42 = arith.subf %40, %38 : vector<64x16xf32>
    %43 = arith.subf %42, %39 : vector<64x16xf32>
    %44 = vector.extract_strided_slice %41 {offsets = [0, 0], sizes = [16, 16], strides = [1, 1]} : vector<64x16xf32> to vector<16x16xf32>
    %45 = vector.extract_strided_slice %41 {offsets = [16, 0], sizes = [16, 16], strides = [1, 1]} : vector<64x16xf32> to vector<16x16xf32>
    %46 = vector.extract_strided_slice %41 {offsets = [32, 0], sizes = [16, 16], strides = [1, 1]} : vector<64x16xf32> to vector<16x16xf32>
    %47 = vector.extract_strided_slice %41 {offsets = [48, 0], sizes = [16, 16], strides = [1, 1]} : vector<64x16xf32> to vector<16x16xf32>
    %48 = tpu.concatenate %44, %45, %46, %47 in 1 : vector<16x16xf32>, vector<16x16xf32>, vector<16x16xf32>, vector<16x16xf32> -> vector<16x64xf32>
    %49 = vector.extract_strided_slice %43 {offsets = [0, 0], sizes = [16, 16], strides = [1, 1]} : vector<64x16xf32> to vector<16x16xf32>
    %50 = vector.extract_strided_slice %43 {offsets = [16, 0], sizes = [16, 16], strides = [1, 1]} : vector<64x16xf32> to vector<16x16xf32>
    %51 = vector.extract_strided_slice %43 {offsets = [32, 0], sizes = [16, 16], strides = [1, 1]} : vector<64x16xf32> to vector<16x16xf32>
    %52 = vector.extract_strided_slice %43 {offsets = [48, 0], sizes = [16, 16], strides = [1, 1]} : vector<64x16xf32> to vector<16x16xf32>
    %53 = tpu.concatenate %49, %50, %51, %52 in 1 : vector<16x16xf32>, vector<16x16xf32>, vector<16x16xf32>, vector<16x16xf32> -> vector<16x64xf32>
    %54 = arith.addf %48, %53 : vector<16x64xf32>
    %cst_34 = arith.constant dense<0.000000e+00> : vector<16x64xf32>
    %55 = tpu.matmul %28, %48, %cst_34 {dimension_numbers = #tpu.dot_dimension_numbers<[1], [0], [0], [1], [0, 0, 1, 1], [], []>} : vector<16x16xf32>, vector<16x64xf32>, vector<16x64xf32> -> vector<16x64xf32>
    %cst_35 = arith.constant dense<0.000000e+00> : vector<16x64xf32>
    %56 = tpu.matmul %29, %53, %cst_35 {dimension_numbers = #tpu.dot_dimension_numbers<[1], [0], [0], [1], [0, 0, 1, 1], [], []>} : vector<16x16xf32>, vector<16x64xf32>, vector<16x64xf32> -> vector<16x64xf32>
    %cst_36 = arith.constant dense<0.000000e+00> : vector<16x64xf32>
    %57 = tpu.matmul %30, %54, %cst_36 {dimension_numbers = #tpu.dot_dimension_numbers<[1], [0], [0], [1], [0, 0, 1, 1], [], []>} : vector<16x16xf32>, vector<16x64xf32>, vector<16x64xf32> -> vector<16x64xf32>
    %58 = arith.subf %55, %56 : vector<16x64xf32>
    %59 = arith.subf %57, %55 : vector<16x64xf32>
    %60 = arith.subf %59, %56 : vector<16x64xf32>
    %cst_37 = arith.constant 1.000000e+00 : f32
    %61 = arith.subf %cst_37, %0 : f32
    %c0_38 = arith.constant 0 : index
    %c0_39 = arith.constant 0 : index
    %c0_40 = arith.constant 0 : index
    %62 = vector.load %arg8[%c0_38, %c0_39, %c0_40] : memref<1x16x64xf32, #tpu.memory_space<vmem>>, vector<1x16x64xf32>
    %63 = vector.shape_cast %62 : vector<1x16x64xf32> to vector<16x64xf32>
    %64 = vector.broadcast %61 : f32 to vector<16x64xf32>
    %65 = arith.mulf %64, %63 : vector<16x64xf32>
    %c0_41 = arith.constant 0 : index
    %c0_42 = arith.constant 0 : index
    %c0_43 = arith.constant 0 : index
    %c0_44 = arith.constant 0 : index
    %66 = vector.load %arg6[%c0_41, %c0_42, %c0_43, %c0_44] : memref<1x1x16x64xf32, #tpu.memory_space<vmem>>, vector<1x1x16x64xf32>
    %67 = vector.shape_cast %66 : vector<1x1x16x64xf32> to vector<16x64xf32>
    %68 = arith.subf %67, %58 : vector<16x64xf32>
    %69 = arith.mulf %65, %68 : vector<16x64xf32>
    %70 = arith.addf %58, %69 : vector<16x64xf32>
    %c0_45 = arith.constant 0 : index
    %c0_46 = arith.constant 0 : index
    %c0_47 = arith.constant 0 : index
    %c0_48 = arith.constant 0 : index
    %71 = vector.load %arg7[%c0_45, %c0_46, %c0_47, %c0_48] : memref<1x1x16x64xf32, #tpu.memory_space<vmem>>, vector<1x1x16x64xf32>
    %72 = vector.shape_cast %71 : vector<1x1x16x64xf32> to vector<16x64xf32>
    %73 = arith.subf %72, %60 : vector<16x64xf32>
    %74 = arith.mulf %65, %73 : vector<16x64xf32>
    %75 = arith.addf %60, %74 : vector<16x64xf32>
    %76 = arith.addf %70, %75 : vector<16x64xf32>
    %cst_49 = arith.constant dense<0.000000e+00> : vector<16x64xf32>
    %77 = tpu.matmul %28, %70, %cst_49 {dimension_numbers = #tpu.dot_dimension_numbers<[1], [0], [0], [1], [0, 0, 1, 1], [], []>} : vector<16x16xf32>, vector<16x64xf32>, vector<16x64xf32> -> vector<16x64xf32>
    %cst_50 = arith.constant dense<0.000000e+00> : vector<16x64xf32>
    %78 = tpu.matmul %29, %75, %cst_50 {dimension_numbers = #tpu.dot_dimension_numbers<[1], [0], [0], [1], [0, 0, 1, 1], [], []>} : vector<16x16xf32>, vector<16x64xf32>, vector<16x64xf32> -> vector<16x64xf32>
    %cst_51 = arith.constant dense<0.000000e+00> : vector<16x64xf32>
    %79 = tpu.matmul %31, %76, %cst_51 {dimension_numbers = #tpu.dot_dimension_numbers<[1], [0], [0], [1], [0, 0, 1, 1], [], []>} : vector<16x16xf32>, vector<16x64xf32>, vector<16x64xf32> -> vector<16x64xf32>
    %80 = arith.addf %77, %78 : vector<16x64xf32>
    %81 = arith.subf %79, %77 : vector<16x64xf32>
    %82 = arith.addf %81, %78 : vector<16x64xf32>
    %83 = vector.extract_strided_slice %80 {offsets = [0, 0], sizes = [16, 16], strides = [1, 1]} : vector<16x64xf32> to vector<16x16xf32>
    %84 = vector.extract_strided_slice %80 {offsets = [0, 16], sizes = [16, 16], strides = [1, 1]} : vector<16x64xf32> to vector<16x16xf32>
    %85 = vector.extract_strided_slice %80 {offsets = [0, 32], sizes = [16, 16], strides = [1, 1]} : vector<16x64xf32> to vector<16x16xf32>
    %86 = vector.extract_strided_slice %80 {offsets = [0, 48], sizes = [16, 16], strides = [1, 1]} : vector<16x64xf32> to vector<16x16xf32>
    %87 = tpu.concatenate %83, %84, %85, %86 in 0 : vector<16x16xf32>, vector<16x16xf32>, vector<16x16xf32>, vector<16x16xf32> -> vector<64x16xf32>
    %88 = vector.extract_strided_slice %82 {offsets = [0, 0], sizes = [16, 16], strides = [1, 1]} : vector<16x64xf32> to vector<16x16xf32>
    %89 = vector.extract_strided_slice %82 {offsets = [0, 16], sizes = [16, 16], strides = [1, 1]} : vector<16x64xf32> to vector<16x16xf32>
    %90 = vector.extract_strided_slice %82 {offsets = [0, 32], sizes = [16, 16], strides = [1, 1]} : vector<16x64xf32> to vector<16x16xf32>
    %91 = vector.extract_strided_slice %82 {offsets = [0, 48], sizes = [16, 16], strides = [1, 1]} : vector<16x64xf32> to vector<16x16xf32>
    %92 = tpu.concatenate %88, %89, %90, %91 in 0 : vector<16x16xf32>, vector<16x16xf32>, vector<16x16xf32>, vector<16x16xf32> -> vector<64x16xf32>
    %93 = arith.subf %92, %87 : vector<64x16xf32>
    %cst_52 = arith.constant dense<0.000000e+00> : vector<64x16xf32>
    %94 = tpu.matmul %87, %32, %cst_52 {dimension_numbers = #tpu.dot_dimension_numbers<[1], [0], [0], [1], [0, 0, 1, 1], [], []>} : vector<64x16xf32>, vector<16x16xf32>, vector<64x16xf32> -> vector<64x16xf32>
    %cst_53 = arith.constant dense<0.000000e+00> : vector<64x16xf32>
    %95 = tpu.matmul %92, %33, %cst_53 {dimension_numbers = #tpu.dot_dimension_numbers<[1], [0], [0], [1], [0, 0, 1, 1], [], []>} : vector<64x16xf32>, vector<16x16xf32>, vector<64x16xf32> -> vector<64x16xf32>
    %cst_54 = arith.constant dense<0.000000e+00> : vector<64x16xf32>
    %96 = tpu.matmul %93, %34, %cst_54 {dimension_numbers = #tpu.dot_dimension_numbers<[1], [0], [0], [1], [0, 0, 1, 1], [], []>} : vector<64x16xf32>, vector<16x16xf32>, vector<64x16xf32> -> vector<64x16xf32>
    %97 = arith.addf %94, %95 : vector<64x16xf32>
    %98 = arith.addf %96, %94 : vector<64x16xf32>
    %99 = arith.subf %98, %95 : vector<64x16xf32>
    %100 = vector.shape_cast %97 : vector<64x16xf32> to vector<4x16x16xf32>
    %101 = vector.shape_cast %99 : vector<64x16xf32> to vector<4x16x16xf32>
    %102 = vector.shape_cast %100 : vector<4x16x16xf32> to vector<4x1x16x16xf32>
    %103 = vector.broadcast %102 : vector<4x1x16x16xf32> to vector<4x2x16x16xf32>
    %104 = arith.mulf %8, %103 : vector<4x2x16x16xf32>
    %105 = vector.shape_cast %101 : vector<4x16x16xf32> to vector<4x1x16x16xf32>
    %106 = vector.broadcast %105 : vector<4x1x16x16xf32> to vector<4x2x16x16xf32>
    %107 = arith.mulf %11, %106 : vector<4x2x16x16xf32>
    %108 = arith.addf %104, %107 : vector<4x2x16x16xf32>
    %cst_55 = arith.constant dense<0.000000e+00> : vector<2x16x16xf32>
    %109 = vector.multi_reduction <add>, %108, %cst_55 [0] : vector<4x2x16x16xf32> to vector<2x16x16xf32>
    %110 = vector.shape_cast %101 : vector<4x16x16xf32> to vector<4x1x16x16xf32>
    %111 = vector.broadcast %110 : vector<4x1x16x16xf32> to vector<4x2x16x16xf32>
    %112 = arith.mulf %8, %111 : vector<4x2x16x16xf32>
    %113 = vector.shape_cast %100 : vector<4x16x16xf32> to vector<4x1x16x16xf32>
    %114 = vector.broadcast %113 : vector<4x1x16x16xf32> to vector<4x2x16x16xf32>
    %115 = arith.mulf %11, %114 : vector<4x2x16x16xf32>
    %116 = arith.subf %112, %115 : vector<4x2x16x16xf32>
    %cst_56 = arith.constant dense<0.000000e+00> : vector<2x16x16xf32>
    %117 = vector.multi_reduction <add>, %116, %cst_56 [0] : vector<4x2x16x16xf32> to vector<2x16x16xf32>
    %c0_i32 = arith.constant 0 : i32
    %118 = arith.cmpi eq, %arg1, %c0_i32 : i32
    %119 = arith.extui %118 : i1 to i32
    %c0_i32_57 = arith.constant 0 : i32
    %120 = arith.cmpi ne, %119, %c0_i32_57 : i32
    scf.if %120 {
      %c0_62 = arith.constant 0 : index
      %c0_63 = arith.constant 0 : index
      %c0_64 = arith.constant 0 : index
      %c0_65 = arith.constant 0 : index
      %127 = vector.load %arg17[%c0_62, %c0_63, %c0_64, %c0_65] : memref<1x2x16x16xf32, #tpu.memory_space<vmem>>, vector<1x2x16x16xf32>
      %128 = vector.shape_cast %127 : vector<1x2x16x16xf32> to vector<2x16x16xf32>
      %129 = vector.shape_cast %109 : vector<2x16x16xf32> to vector<1x2x16x16xf32>
      tpu.vector_store %arg17[%c0_62, %c0_63, %c0_64, %c0_65], %129 {strides = array<i32>} : memref<1x2x16x16xf32, #tpu.memory_space<vmem>>, vector<1x2x16x16xf32>,
      %c0_66 = arith.constant 0 : index
      %c0_67 = arith.constant 0 : index
      %c0_68 = arith.constant 0 : index
      %c0_69 = arith.constant 0 : index
      %130 = vector.load %arg18[%c0_66, %c0_67, %c0_68, %c0_69] : memref<1x2x16x16xf32, #tpu.memory_space<vmem>>, vector<1x2x16x16xf32>
      %131 = vector.shape_cast %130 : vector<1x2x16x16xf32> to vector<2x16x16xf32>
      %132 = vector.shape_cast %117 : vector<2x16x16xf32> to vector<1x2x16x16xf32>
      tpu.vector_store %arg18[%c0_66, %c0_67, %c0_68, %c0_69], %132 {strides = array<i32>} : memref<1x2x16x16xf32, #tpu.memory_space<vmem>>, vector<1x2x16x16xf32>,
    } else {
    }
    %c0_i32_58 = arith.constant 0 : i32
    %121 = arith.cmpi sgt, %arg1, %c0_i32_58 : i32
    %122 = arith.extui %121 : i1 to i32
    %c0_i32_59 = arith.constant 0 : i32
    %123 = arith.cmpi ne, %122, %c0_i32_59 : i32
    scf.if %123 {
      %c0_62 = arith.constant 0 : index
      %c0_63 = arith.constant 0 : index
      %c0_64 = arith.constant 0 : index
      %c0_65 = arith.constant 0 : index
      %127 = vector.load %arg17[%c0_62, %c0_63, %c0_64, %c0_65] : memref<1x2x16x16xf32, #tpu.memory_space<vmem>>, vector<1x2x16x16xf32>
      %128 = vector.shape_cast %127 : vector<1x2x16x16xf32> to vector<2x16x16xf32>
      %129 = arith.addf %128, %109 : vector<2x16x16xf32>
      %c0_66 = arith.constant 0 : index
      %c0_67 = arith.constant 0 : index
      %c0_68 = arith.constant 0 : index
      %c0_69 = arith.constant 0 : index
      %130 = vector.load %arg17[%c0_66, %c0_67, %c0_68, %c0_69] : memref<1x2x16x16xf32, #tpu.memory_space<vmem>>, vector<1x2x16x16xf32>
      %131 = vector.shape_cast %130 : vector<1x2x16x16xf32> to vector<2x16x16xf32>
      %132 = vector.shape_cast %129 : vector<2x16x16xf32> to vector<1x2x16x16xf32>
      tpu.vector_store %arg17[%c0_66, %c0_67, %c0_68, %c0_69], %132 {strides = array<i32>} : memref<1x2x16x16xf32, #tpu.memory_space<vmem>>, vector<1x2x16x16xf32>,
      %c0_70 = arith.constant 0 : index
      %c0_71 = arith.constant 0 : index
      %c0_72 = arith.constant 0 : index
      %c0_73 = arith.constant 0 : index
      %133 = vector.load %arg18[%c0_70, %c0_71, %c0_72, %c0_73] : memref<1x2x16x16xf32, #tpu.memory_space<vmem>>, vector<1x2x16x16xf32>
      %134 = vector.shape_cast %133 : vector<1x2x16x16xf32> to vector<2x16x16xf32>
      %135 = arith.addf %134, %117 : vector<2x16x16xf32>
      %c0_74 = arith.constant 0 : index
      %c0_75 = arith.constant 0 : index
      %c0_76 = arith.constant 0 : index
      %c0_77 = arith.constant 0 : index
      %136 = vector.load %arg18[%c0_74, %c0_75, %c0_76, %c0_77] : memref<1x2x16x16xf32, #tpu.memory_space<vmem>>, vector<1x2x16x16xf32>
      %137 = vector.shape_cast %136 : vector<1x2x16x16xf32> to vector<2x16x16xf32>
      %138 = vector.shape_cast %135 : vector<2x16x16xf32> to vector<1x2x16x16xf32>
      tpu.vector_store %arg18[%c0_74, %c0_75, %c0_76, %c0_77], %138 {strides = array<i32>} : memref<1x2x16x16xf32, #tpu.memory_space<vmem>>, vector<1x2x16x16xf32>,
    } else {
    }
    %c0_i32_60 = arith.constant 0 : i32
    %124 = arith.cmpi eq, %arg1, %c0_i32_60 : i32
    %125 = arith.extui %124 : i1 to i32
    %c0_i32_61 = arith.constant 0 : i32
    %126 = arith.cmpi ne, %125, %c0_i32_61 : i32
    scf.if %126 {
      %cst_62 = arith.constant 1.000000e+00 : f32
      %127 = arith.subf %cst_62, %1 : f32
      %128 = vector.broadcast %1 : f32 to vector<2x16x16xf32>
      %129 = arith.mulf %128, %3 : vector<2x16x16xf32>
      %c0_63 = arith.constant 0 : index
      %c0_64 = arith.constant 0 : index
      %c0_65 = arith.constant 0 : index
      %c0_66 = arith.constant 0 : index
      %130 = vector.load %arg17[%c0_63, %c0_64, %c0_65, %c0_66] : memref<1x2x16x16xf32, #tpu.memory_space<vmem>>, vector<1x2x16x16xf32>
      %131 = vector.shape_cast %130 : vector<1x2x16x16xf32> to vector<2x16x16xf32>
      %132 = vector.broadcast %127 : f32 to vector<2x16x16xf32>
      %133 = arith.mulf %132, %131 : vector<2x16x16xf32>
      %134 = arith.addf %129, %133 : vector<2x16x16xf32>
      %c0_67 = arith.constant 0 : index
      %c0_68 = arith.constant 0 : index
      %c0_69 = arith.constant 0 : index
      %c0_70 = arith.constant 0 : index
      %135 = vector.load %arg17[%c0_67, %c0_68, %c0_69, %c0_70] : memref<1x2x16x16xf32, #tpu.memory_space<vmem>>, vector<1x2x16x16xf32>
      %136 = vector.shape_cast %135 : vector<1x2x16x16xf32> to vector<2x16x16xf32>
      %137 = vector.shape_cast %134 : vector<2x16x16xf32> to vector<1x2x16x16xf32>
      tpu.vector_store %arg17[%c0_67, %c0_68, %c0_69, %c0_70], %137 {strides = array<i32>} : memref<1x2x16x16xf32, #tpu.memory_space<vmem>>, vector<1x2x16x16xf32>,
      %138 = vector.broadcast %1 : f32 to vector<2x16x16xf32>
      %139 = arith.mulf %138, %5 : vector<2x16x16xf32>
      %c0_71 = arith.constant 0 : index
      %c0_72 = arith.constant 0 : index
      %c0_73 = arith.constant 0 : index
      %c0_74 = arith.constant 0 : index
      %140 = vector.load %arg18[%c0_71, %c0_72, %c0_73, %c0_74] : memref<1x2x16x16xf32, #tpu.memory_space<vmem>>, vector<1x2x16x16xf32>
      %141 = vector.shape_cast %140 : vector<1x2x16x16xf32> to vector<2x16x16xf32>
      %142 = vector.broadcast %127 : f32 to vector<2x16x16xf32>
      %143 = arith.mulf %142, %141 : vector<2x16x16xf32>
      %144 = arith.addf %139, %143 : vector<2x16x16xf32>
      %c0_75 = arith.constant 0 : index
      %c0_76 = arith.constant 0 : index
      %c0_77 = arith.constant 0 : index
      %c0_78 = arith.constant 0 : index
      %145 = vector.load %arg18[%c0_75, %c0_76, %c0_77, %c0_78] : memref<1x2x16x16xf32, #tpu.memory_space<vmem>>, vector<1x2x16x16xf32>
      %146 = vector.shape_cast %145 : vector<1x2x16x16xf32> to vector<2x16x16xf32>
      %147 = vector.shape_cast %144 : vector<2x16x16xf32> to vector<1x2x16x16xf32>
      tpu.vector_store %arg18[%c0_75, %c0_76, %c0_77, %c0_78], %147 {strides = array<i32>} : memref<1x2x16x16xf32, #tpu.memory_space<vmem>>, vector<1x2x16x16xf32>,
    } else {
    }
    return
  }
  func.func @transform_0(%arg0: i32, %arg1: i32) -> (i32, i32, i32, i32) {
    %c0_i32 = arith.constant 0 : i32
    %c0_i32_0 = arith.constant 0 : i32
    %c0_i32_1 = arith.constant 0 : i32
    %c0_i32_2 = arith.constant 0 : i32
    return %arg0, %c0_i32, %c0_i32_0, %c0_i32_1 : i32, i32, i32, i32
  }
  func.func @transform_1(%arg0: i32, %arg1: i32) -> (i32, i32, i32, i32) {
    %c0_i32 = arith.constant 0 : i32
    %c0_i32_0 = arith.constant 0 : i32
    %c0_i32_1 = arith.constant 0 : i32
    %c0_i32_2 = arith.constant 0 : i32
    return %arg0, %c0_i32, %c0_i32_0, %c0_i32_1 : i32, i32, i32, i32
  }
  func.func @transform_2(%arg0: i32, %arg1: i32) -> (i32, i32, i32, i32) {
    %c0_i32 = arith.constant 0 : i32
    %c0_i32_0 = arith.constant 0 : i32
    %c0_i32_1 = arith.constant 0 : i32
    return %arg0, %arg1, %c0_i32, %c0_i32_0 : i32, i32, i32, i32
  }
  func.func @transform_3(%arg0: i32, %arg1: i32) -> (i32, i32, i32, i32) {
    %c0_i32 = arith.constant 0 : i32
    %c0_i32_0 = arith.constant 0 : i32
    %c0_i32_1 = arith.constant 0 : i32
    return %arg0, %arg1, %c0_i32, %c0_i32_0 : i32, i32, i32, i32
  }
  func.func @transform_4(%arg0: i32, %arg1: i32) -> (i32, i32, i32, i32) {
    %c0_i32 = arith.constant 0 : i32
    %c0_i32_0 = arith.constant 0 : i32
    %c0_i32_1 = arith.constant 0 : i32
    return %arg0, %arg1, %c0_i32, %c0_i32_0 : i32, i32, i32, i32
  }
  func.func @transform_5(%arg0: i32, %arg1: i32) -> (i32, i32, i32, i32) {
    %c0_i32 = arith.constant 0 : i32
    %c0_i32_0 = arith.constant 0 : i32
    %c0_i32_1 = arith.constant 0 : i32
    return %arg0, %arg1, %c0_i32, %c0_i32_0 : i32, i32, i32, i32
  }
  func.func @transform_6(%arg0: i32, %arg1: i32) -> (i32, i32, i32) {
    %c0_i32 = arith.constant 0 : i32
    %c0_i32_0 = arith.constant 0 : i32
    %c0_i32_1 = arith.constant 0 : i32
    return %arg0, %c0_i32, %c0_i32_0 : i32, i32, i32
  }
  func.func @transform_7(%arg0: i32, %arg1: i32) -> (i32, i32) {
    %c0_i32 = arith.constant 0 : i32
    %c0_i32_0 = arith.constant 0 : i32
    %c0_i32_1 = arith.constant 0 : i32
    return %c0_i32, %c0_i32_0 : i32, i32
  }
  func.func @transform_8(%arg0: i32, %arg1: i32) -> (i32, i32) {
    %c0_i32 = arith.constant 0 : i32
    %c0_i32_0 = arith.constant 0 : i32
    %c0_i32_1 = arith.constant 0 : i32
    return %c0_i32, %c0_i32_0 : i32, i32
  }
  func.func @transform_9(%arg0: i32, %arg1: i32) -> (i32, i32) {
    %c0_i32 = arith.constant 0 : i32
    %c0_i32_0 = arith.constant 0 : i32
    %c0_i32_1 = arith.constant 0 : i32
    return %c0_i32, %c0_i32_0 : i32, i32
  }
  func.func @transform_10(%arg0: i32, %arg1: i32) -> (i32, i32) {
    %c0_i32 = arith.constant 0 : i32
    %c0_i32_0 = arith.constant 0 : i32
    %c0_i32_1 = arith.constant 0 : i32
    return %c0_i32, %c0_i32_0 : i32, i32
  }
  func.func @transform_11(%arg0: i32, %arg1: i32) -> (i32, i32) {
    %c0_i32 = arith.constant 0 : i32
    %c0_i32_0 = arith.constant 0 : i32
    %c0_i32_1 = arith.constant 0 : i32
    return %c0_i32, %c0_i32_0 : i32, i32
  }
  func.func @transform_12(%arg0: i32, %arg1: i32) -> (i32, i32) {
    %c0_i32 = arith.constant 0 : i32
    %c0_i32_0 = arith.constant 0 : i32
    %c0_i32_1 = arith.constant 0 : i32
    return %c0_i32, %c0_i32_0 : i32, i32
  }
  func.func @transform_13(%arg0: i32, %arg1: i32) -> (i32, i32) {
    %c0_i32 = arith.constant 0 : i32
    %c0_i32_0 = arith.constant 0 : i32
    %c0_i32_1 = arith.constant 0 : i32
    return %c0_i32, %c0_i32_0 : i32, i32
  }
  func.func @transform_14(%arg0: i32, %arg1: i32) -> i32 {
    %c0_i32 = arith.constant 0 : i32
    %c0_i32_0 = arith.constant 0 : i32
    return %c0_i32 : i32
  }
  func.func @transform_15(%arg0: i32, %arg1: i32) -> (i32, i32, i32, i32) {
    %c0_i32 = arith.constant 0 : i32
    %c0_i32_0 = arith.constant 0 : i32
    %c0_i32_1 = arith.constant 0 : i32
    %c0_i32_2 = arith.constant 0 : i32
    return %arg0, %c0_i32, %c0_i32_0, %c0_i32_1 : i32, i32, i32, i32
  }
  func.func @transform_16(%arg0: i32, %arg1: i32) -> (i32, i32, i32, i32) {
    %c0_i32 = arith.constant 0 : i32
    %c0_i32_0 = arith.constant 0 : i32
    %c0_i32_1 = arith.constant 0 : i32
    %c0_i32_2 = arith.constant 0 : i32
    return %arg0, %c0_i32, %c0_i32_0, %c0_i32_1 : i32, i32, i32, i32
  }
}

</mosaic_0001>

<llo_original>
// kernel: tpu_custom_call.1
$region0: #{tpu_custom_call.1}
  #allocation0 [shape = 'u32[]', space=smem, size = 0x4, offset = 0x4, fixed_abs, tag = 'smem constant byte address 0x4 - core index']
  #allocation1 [shape = 'u32[144,128]{1,0:T(1,128)}', space=vmem, size = 0x12000, scoped, tag = 'internal scratch']
  %s0 = inlined_call_operand.hbm [shape: f32[2,2,16,16], index: 0, kind: input, shape index: {}]
  %s1 = inlined_call_operand.hbm [shape: f32[2,2,16,16], index: 1, kind: input, shape index: {}]
  %s2 = inlined_call_operand.hbm [shape: f32[2,8,16,16], index: 2, kind: input, shape index: {}]
  %s3 = inlined_call_operand.hbm [shape: f32[2,8,16,16], index: 3, kind: input, shape index: {}]
  %s4 = inlined_call_operand.hbm [shape: f32[2,1,16,64], index: 4, kind: input, shape index: {}]
  %s5 = inlined_call_operand.hbm [shape: f32[2,1,16,64], index: 5, kind: input, shape index: {}]
  %s6 = inlined_call_operand.hbm [shape: f32[2,16,64], index: 6, kind: input, shape index: {}]
  %s7 = inlined_call_operand.vmem [shape: f32[16,16], index: 7, kind: input, shape index: {}]
  %s8 = inlined_call_operand.hbm [shape: f32[16,16], index: 8, kind: input, shape index: {}]
  %s9 = inlined_call_operand.vmem [shape: f32[16,16], index: 9, kind: input, shape index: {}]
  %s10 = inlined_call_operand.hbm [shape: f32[16,16], index: 10, kind: input, shape index: {}]
  %s11 = inlined_call_operand.hbm [shape: f32[16,16], index: 11, kind: input, shape index: {}]
  %s12 = inlined_call_operand.hbm [shape: f32[16,16], index: 12, kind: input, shape index: {}]
  %s13 = inlined_call_operand.vmem [shape: f32[16,16], index: 13, kind: input, shape index: {}]
  %s14 = inlined_call_operand.vmem [shape: f32[2], index: 14, kind: input, shape index: {}]
  %s15 = inlined_call_operand.hbm [shape: f32[2,2,16,16], index: 15, kind: output, shape index: {0}]
  %s16 = inlined_call_operand.hbm [shape: f32[2,2,16,16], index: 16, kind: output, shape index: {1}]
  %17 = xla_tuple %s15, %s16
  %s18 = sld [smem:[#allocation0]]
  $region161: #{tpu_custom_call.1} parent=0
    _
  %s20 = ssub.s32 1, %s18
  %s21 = scalar_select 0, %s20, %s18
  $region1: #{tpu_custom_call.1} parent=0
    #allocation2 [shape = 'u8[32768]{0}', space=vmem, size = 0x8000, scoped, tag = 'input window, operand 0']
    #allocation3 [shape = 's32[2]{0}', space=sflag, size = 0x8, scoped, tag = 'scoped memory for tpu_custom_call.1']
    #allocation4 [shape = 's32[2]{0}', space=sflag, size = 0x8, scoped, tag = 'scoped memory for tpu_custom_call.1']
    #allocation5 [shape = 's32[2]{0}', space=sflag, size = 0x8, scoped, tag = 'scoped memory for tpu_custom_call.1']
    #allocation6 [shape = 'u8[32768]{0}', space=vmem, size = 0x8000, scoped, tag = 'input window, operand 1']
    #allocation7 [shape = 's32[2]{0}', space=sflag, size = 0x8, scoped, tag = 'scoped memory for tpu_custom_call.1']
    #allocation8 [shape = 'u8[131072]{0}', space=vmem, size = 0x20000, scoped, tag = 'input window, operand 2']
    #allocation9 [shape = 'u8[131072]{0}', space=vmem, size = 0x20000, scoped, tag = 'input window, operand 3']
    #allocation10 [shape = 's32[2]{0}', space=sflag, size = 0x8, scoped, tag = 'scoped memory for tpu_custom_call.1']
    #allocation11 [shape = 'u8[16384]{0}', space=vmem, size = 0x4000, scoped, tag = 'input window, operand 4']
    #allocation12 [shape = 'u8[16384]{0}', space=vmem, size = 0x4000, scoped, tag = 'input window, operand 5']
    #allocation13 [shape = 's32[2]{0}', space=sflag, size = 0x8, scoped, tag = 'scoped memory for tpu_custom_call.1']
    #allocation14 [shape = 'u8[16384]{0}', space=vmem, size = 0x4000, scoped, tag = 'input window, operand 6']
    #allocation15 [shape = 'u8[8192]{0}', space=vmem, size = 0x2000, scoped, tag = 'input window, operand 8, single buffered']
    #allocation16 [shape = 's32[1]{0}', space=sflag, size = 0x4, scoped, tag = 'scoped memory for tpu_custom_call.1']
    #allocation17 [shape = 'u8[8192]{0}', space=vmem, size = 0x2000, scoped, tag = 'input window, operand 10, single buffered']
    #allocation18 [shape = 'u8[8192]{0}', space=vmem, size = 0x2000, scoped, tag = 'input window, operand 11, single buffered']
    #allocation19 [shape = 's32[1]{0}', space=sflag, size = 0x4, scoped, tag = 'scoped memory for tpu_custom_call.1']
    #allocation20 [shape = 'u8[8192]{0}', space=vmem, size = 0x2000, scoped, tag = 'input window, operand 12, single buffered']
    #allocation21 [shape = 'u8[512]{0}', space=smem, size = 0x200, scoped, tag = 'input window, operand 14, single buffered']
    #allocation22 [shape = 'u8[32768]{0}', space=vmem, size = 0x8000, scoped, tag = 'output window, operand 0']
    #allocation23 [shape = 'u8[32768]{0}', space=vmem, size = 0x8000, scoped, tag = 'output window, operand 1']
    #allocation24 [shape = 's32[2]{0}', space=sflag, size = 0x8, scoped, tag = 'scoped memory for tpu_custom_call.1']
    %22 = vsyncpa [#allocation3], 0
    %s23 = scalar_lea.sflag [#allocation3], 1
    %24 = vsyncpa %s23, 0
    %25 = vsyncpa [#allocation7], 0
    %s26 = scalar_lea.sflag [#allocation7], 1
    %27 = vsyncpa %s26, 0
    %28 = vsyncpa [#allocation10], 0
    %s29 = scalar_lea.sflag [#allocation10], 1
    %30 = vsyncpa %s29, 0
    %31 = vsyncpa [#allocation13], 0
    %s32 = scalar_lea.sflag [#allocation13], 1
    %33 = vsyncpa %s32, 0
    %34 = vsyncpa [#allocation16], 0
    %35 = vsyncpa [#allocation19], 0
    %36 = vsyncpa [#allocation5], 0
    %37 = vsyncpa [#allocation4], 0
    %s38 = scalar_lea.sflag [#allocation4], 1
    %39 = vsyncpa %s38, 0
    %40 = vsyncpa [#allocation24], 0
    %s41 = scalar_lea.sflag [#allocation24], 1
    %42 = vsyncpa %s41, 0
    loop: start=0, step=1, limit=4
    $region2: #{tpu_custom_call.1} parent=1 // loop_pre_header
      _
    $region3: #{tpu_custom_call.1} parent=1 // loop_header
      %s44 = sphi 0, %s48
      %p45 = scmp.ge.s32.totalorder %s44, 4
      %s51 = sphi 0, %s63
      %s52 = sphi 0, %s59
      %s53 = sphi 0, %s51
      %s54 = sphi 0, %s52
      %s55 = sphi 0, %s53
      %s56 = sphi 0, %s54
      %s66 = sphi 0, %s68
      %s69 = sphi 0, %s66
      %s70 = sphi 0, %s69
      %s86 = sphi 0, %s70
      %s92 = sphi 0, %s94
      %s95 = sphi 0, %s92
      %s96 = sphi 0, %s95
      %s112 = sphi 0, %s96
      %s120 = sphi 0, %s122
      %s123 = sphi 0, %s120
      %s124 = sphi 0, %s123
      %s140 = sphi 0, %s124
      %s148 = sphi 0, %s150
      %s151 = sphi 0, %s148
      %s152 = sphi 0, %s151
      %s168 = sphi 0, %s152
      %s176 = sphi 0, %s178
      %s179 = sphi 0, %s176
      %s180 = sphi 0, %s179
      %s196 = sphi 0, %s180
      %s204 = sphi 0, %s206
      %s207 = sphi 0, %s204
      %s208 = sphi 0, %s207
      %s224 = sphi 0, %s208
      %s230 = sphi 0, %s232
      %s233 = sphi 0, %s230
      %s234 = sphi 0, %s233
      %s250 = sphi 0, %s234
      %s254 = sphi 0, %s254
      %s256 = sphi 0, %s254
      %s257 = sphi 0, %s256
      %s271 = sphi 0, %s257
      %s275 = sphi 0, %s275
      %s277 = sphi 0, %s275
      %s278 = sphi 0, %s277
      %s292 = sphi 0, %s278
      %s296 = sphi 0, %s296
      %s298 = sphi 0, %s296
      %s299 = sphi 0, %s298
      %s313 = sphi 0, %s299
      %s317 = sphi 0, %s317
      %s319 = sphi 0, %s317
      %s320 = sphi 0, %s319
      %s334 = sphi 0, %s320
      %s338 = sphi 0, %s338
      %s340 = sphi 0, %s338
      %s341 = sphi 0, %s340
      %s355 = sphi 0, %s341
      %s359 = sphi 0, %s359
      %s361 = sphi 0, %s359
      %s362 = sphi 0, %s361
      %s376 = sphi 0, %s362
      %s380 = sphi 0, %s380
      %s382 = sphi 0, %s380
      %s383 = sphi 0, %s382
      %s397 = sphi 0, %s383
      %s401 = sphi 0, %s401
      %s403 = sphi 0, %s401
      %s404 = sphi 0, %s403
      %s418 = sphi 0, %s404
      %s424 = sphi 0, %s426
      %s427 = sphi 0, %s424
      %s428 = sphi 0, %s427
      %s444 = sphi 0, %s428
      %s450 = sphi 0, %s452
      %s453 = sphi 0, %s450
      %s454 = sphi 0, %s453
      %s470 = sphi 0, %s454
    $region4: #{tpu_custom_call.1} parent=1 // loop_header_branch
      %47 = sbr.rel (%p45) target = $region8
    $region5: #{tpu_custom_call.1} parent=1 // loop_body
      %s49 = ssub.s32 %s44, 1
      %s50 = ssub.s32 %s44, 2
      %s57 = sadd.s32 1, %s52
      %p58 = scmp.ge.s32.totalorder %s57, 1
      %s59 = scalar_select %p58, 0, %s57
      %s60 = sadd.s32 1, %s51
      %s61 = scalar_select %p58, %s60, %s51
      %p62 = scmp.ge.s32.totalorder %s61, 2
      %s63 = scalar_select %p62, 0, %s61
      %s64 = ssub.s32 %s51, %s63
      %p65 = scmp.eq.s32.totalorder %s64, 0
      %s67 = sadd.s32 %s66, 1
      %s68 = scalar_select %p65, %s66, %s67
      %p71 = pneg %p65
      %p72 = scmp.eq.s32.totalorder %s44, 1
      %p73 = por %p71, %p72
      %p74 = scmp.ne.s32.totalorder %s66, %s69
      %p75 = scmp.eq.s32.totalorder %s44, 0
      %p76 = por %p74, %p75
      %p77 = scmp.ne.s32.totalorder %s66, %s69
      %p78 = scmp.eq.s32.totalorder %s49, 1
      %p79 = por %p77, %p78
      %p80 = scmp.ne.s32.totalorder %s69, %s70
      %p81 = scmp.eq.s32.totalorder %s49, 0
      %p82 = por %p80, %p81
      %p83 = scmp.ne.s32.totalorder %s69, %s70
      %p84 = scmp.eq.s32.totalorder %s50, 1
      %p85 = por %p83, %p84
      %p87 = scmp.ne.s32.totalorder %s70, %s86
      %p88 = scmp.eq.s32.totalorder %s50, 0
      %p89 = por %p87, %p88
      %s90 = ssub.s32 %s51, %s63
      %p91 = scmp.eq.s32.totalorder %s90, 0
      %s93 = sadd.s32 %s92, 1
      %s94 = scalar_select %p91, %s92, %s93
      %p97 = pneg %p91
      %p98 = scmp.eq.s32.totalorder %s44, 1
      %p99 = por %p97, %p98
      %p100 = scmp.ne.s32.totalorder %s92, %s95
      %p101 = scmp.eq.s32.totalorder %s44, 0
      %p102 = por %p100, %p101
      %p103 = scmp.ne.s32.totalorder %s92, %s95
      %p104 = scmp.eq.s32.totalorder %s49, 1
      %p105 = por %p103, %p104
      %p106 = scmp.ne.s32.totalorder %s95, %s96
      %p107 = scmp.eq.s32.totalorder %s49, 0
      %p108 = por %p106, %p107
      %p109 = scmp.ne.s32.totalorder %s95, %s96
      %p110 = scmp.eq.s32.totalorder %s50, 1
      %p111 = por %p109, %p110
      %p113 = scmp.ne.s32.totalorder %s96, %s112
      %p114 = scmp.eq.s32.totalorder %s50, 0
      %p115 = por %p113, %p114
      %s116 = ssub.s32 %s51, %s63
      %s117 = ssub.s32 %s52, %s59
      %s118 = sor.u32 %s116, %s117
      %p119 = scmp.eq.s32.totalorder %s118, 0
      %s121 = sadd.s32 %s120, 1
      %s122 = scalar_select %p119, %s120, %s121
      %p125 = pneg %p119
      %p126 = scmp.eq.s32.totalorder %s44, 1
      %p127 = por %p125, %p126
      %p128 = scmp.ne.s32.totalorder %s120, %s123
      %p129 = scmp.eq.s32.totalorder %s44, 0
      %p130 = por %p128, %p129
      %p131 = scmp.ne.s32.totalorder %s120, %s123
      %p132 = scmp.eq.s32.totalorder %s49, 1
      %p133 = por %p131, %p132
      %p134 = scmp.ne.s32.totalorder %s123, %s124
      %p135 = scmp.eq.s32.totalorder %s49, 0
      %p136 = por %p134, %p135
      %p137 = scmp.ne.s32.totalorder %s123, %s124
      %p138 = scmp.eq.s32.totalorder %s50, 1
      %p139 = por %p137, %p138
      %p141 = scmp.ne.s32.totalorder %s124, %s140
      %p142 = scmp.eq.s32.totalorder %s50, 0
      %p143 = por %p141, %p142
      %s144 = ssub.s32 %s51, %s63
      %s145 = ssub.s32 %s52, %s59
      %s146 = sor.u32 %s144, %s145
      %p147 = scmp.eq.s32.totalorder %s146, 0
      %s149 = sadd.s32 %s148, 1
      %s150 = scalar_select %p147, %s148, %s149
      %p153 = pneg %p147
      %p154 = scmp.eq.s32.totalorder %s44, 1
      %p155 = por %p153, %p154
      %p156 = scmp.ne.s32.totalorder %s148, %s151
      %p157 = scmp.eq.s32.totalorder %s44, 0
      %p158 = por %p156, %p157
      %p159 = scmp.ne.s32.totalorder %s148, %s151
      %p160 = scmp.eq.s32.totalorder %s49, 1
      %p161 = por %p159, %p160
      %p162 = scmp.ne.s32.totalorder %s151, %s152
      %p163 = scmp.eq.s32.totalorder %s49, 0
      %p164 = por %p162, %p163
      %p165 = scmp.ne.s32.totalorder %s151, %s152
      %p166 = scmp.eq.s32.totalorder %s50, 1
      %p167 = por %p165, %p166
      %p169 = scmp.ne.s32.totalorder %s152, %s168
      %p170 = scmp.eq.s32.totalorder %s50, 0
      %p171 = por %p169, %p170
      %s172 = ssub.s32 %s51, %s63
      %s173 = ssub.s32 %s52, %s59
      %s174 = sor.u32 %s172, %s173
      %p175 = scmp.eq.s32.totalorder %s174, 0
      %s177 = sadd.s32 %s176, 1
      %s178 = scalar_select %p175, %s176, %s177
      %p181 = pneg %p175
      %p182 = scmp.eq.s32.totalorder %s44, 1
      %p183 = por %p181, %p182
      %p184 = scmp.ne.s32.totalorder %s176, %s179
      %p185 = scmp.eq.s32.totalorder %s44, 0
      %p186 = por %p184, %p185
      %p187 = scmp.ne.s32.totalorder %s176, %s179
      %p188 = scmp.eq.s32.totalorder %s49, 1
      %p189 = por %p187, %p188
      %p190 = scmp.ne.s32.totalorder %s179, %s180
      %p191 = scmp.eq.s32.totalorder %s49, 0
      %p192 = por %p190, %p191
      %p193 = scmp.ne.s32.totalorder %s179, %s180
      %p194 = scmp.eq.s32.totalorder %s50, 1
      %p195 = por %p193, %p194
      %p197 = scmp.ne.s32.totalorder %s180, %s196
      %p198 = scmp.eq.s32.totalorder %s50, 0
      %p199 = por %p197, %p198
      %s200 = ssub.s32 %s51, %s63
      %s201 = ssub.s32 %s52, %s59
      %s202 = sor.u32 %s200, %s201
      %p203 = scmp.eq.s32.totalorder %s202, 0
      %s205 = sadd.s32 %s204, 1
      %s206 = scalar_select %p203, %s204, %s205
      %p209 = pneg %p203
      %p210 = scmp.eq.s32.totalorder %s44, 1
      %p211 = por %p209, %p210
      %p212 = scmp.ne.s32.totalorder %s204, %s207
      %p213 = scmp.eq.s32.totalorder %s44, 0
      %p214 = por %p212, %p213
      %p215 = scmp.ne.s32.totalorder %s204, %s207
      %p216 = scmp.eq.s32.totalorder %s49, 1
      %p217 = por %p215, %p216
      %p218 = scmp.ne.s32.totalorder %s207, %s208
      %p219 = scmp.eq.s32.totalorder %s49, 0
      %p220 = por %p218, %p219
      %p221 = scmp.ne.s32.totalorder %s207, %s208
      %p222 = scmp.eq.s32.totalorder %s50, 1
      %p223 = por %p221, %p222
      %p225 = scmp.ne.s32.totalorder %s208, %s224
      %p226 = scmp.eq.s32.totalorder %s50, 0
      %p227 = por %p225, %p226
      %s228 = ssub.s32 %s51, %s63
      %p229 = scmp.eq.s32.totalorder %s228, 0
      %s231 = sadd.s32 %s230, 1
      %s232 = scalar_select %p229, %s230, %s231
      %p235 = pneg %p229
      %p236 = scmp.eq.s32.totalorder %s44, 1
      %p237 = por %p235, %p236
      %p238 = scmp.ne.s32.totalorder %s230, %s233
      %p239 = scmp.eq.s32.totalorder %s44, 0
      %p240 = por %p238, %p239
      %p241 = scmp.ne.s32.totalorder %s230, %s233
      %p242 = scmp.eq.s32.totalorder %s49, 1
      %p243 = por %p241, %p242
      %p244 = scmp.ne.s32.totalorder %s233, %s234
      %p245 = scmp.eq.s32.totalorder %s49, 0
      %p246 = por %p244, %p245
      %p247 = scmp.ne.s32.totalorder %s233, %s234
      %p248 = scmp.eq.s32.totalorder %s50, 1
      %p249 = por %p247, %p248
      %p251 = scmp.ne.s32.totalorder %s234, %s250
      %p252 = scmp.eq.s32.totalorder %s50, 0
      %p253 = por %p251, %p252
      %s255 = sadd.s32 %s254, 1
      %p258 = scmp.eq.s32.totalorder %s44, 1
      %p259 = scmp.ne.s32.totalorder %s254, %s256
      %p260 = scmp.eq.s32.totalorder %s44, 0
      %p261 = por %p259, %p260
      %p262 = scmp.ne.s32.totalorder %s254, %s256
      %p263 = scmp.eq.s32.totalorder %s49, 1
      %p264 = por %p262, %p263
      %p265 = scmp.ne.s32.totalorder %s256, %s257
      %p266 = scmp.eq.s32.totalorder %s49, 0
      %p267 = por %p265, %p266
      %p268 = scmp.ne.s32.totalorder %s256, %s257
      %p269 = scmp.eq.s32.totalorder %s50, 1
      %p270 = por %p268, %p269
      %p272 = scmp.ne.s32.totalorder %s257, %s271
      %p273 = scmp.eq.s32.totalorder %s50, 0
      %p274 = por %p272, %p273
      %s276 = sadd.s32 %s275, 1
      %p279 = scmp.eq.s32.totalorder %s44, 1
      %p280 = scmp.ne.s32.totalorder %s275, %s277
      %p281 = scmp.eq.s32.totalorder %s44, 0
      %p282 = por %p280, %p281
      %p283 = scmp.ne.s32.totalorder %s275, %s277
      %p284 = scmp.eq.s32.totalorder %s49, 1
      %p285 = por %p283, %p284
      %p286 = scmp.ne.s32.totalorder %s277, %s278
      %p287 = scmp.eq.s32.totalorder %s49, 0
      %p288 = por %p286, %p287
      %p289 = scmp.ne.s32.totalorder %s277, %s278
      %p290 = scmp.eq.s32.totalorder %s50, 1
      %p291 = por %p289, %p290
      %p293 = scmp.ne.s32.totalorder %s278, %s292
      %p294 = scmp.eq.s32.totalorder %s50, 0
      %p295 = por %p293, %p294
      %s297 = sadd.s32 %s296, 1
      %p300 = scmp.eq.s32.totalorder %s44, 1
      %p301 = scmp.ne.s32.totalorder %s296, %s298
      %p302 = scmp.eq.s32.totalorder %s44, 0
      %p303 = por %p301, %p302
      %p304 = scmp.ne.s32.totalorder %s296, %s298
      %p305 = scmp.eq.s32.totalorder %s49, 1
      %p306 = por %p304, %p305
      %p307 = scmp.ne.s32.totalorder %s298, %s299
      %p308 = scmp.eq.s32.totalorder %s49, 0
      %p309 = por %p307, %p308
      %p310 = scmp.ne.s32.totalorder %s298, %s299
      %p311 = scmp.eq.s32.totalorder %s50, 1
      %p312 = por %p310, %p311
      %p314 = scmp.ne.s32.totalorder %s299, %s313
      %p315 = scmp.eq.s32.totalorder %s50, 0
      %p316 = por %p314, %p315
      %s318 = sadd.s32 %s317, 1
      %p321 = scmp.eq.s32.totalorder %s44, 1
      %p322 = scmp.ne.s32.totalorder %s317, %s319
      %p323 = scmp.eq.s32.totalorder %s44, 0
      %p324 = por %p322, %p323
      %p325 = scmp.ne.s32.totalorder %s317, %s319
      %p326 = scmp.eq.s32.totalorder %s49, 1
      %p327 = por %p325, %p326
      %p328 = scmp.ne.s32.totalorder %s319, %s320
      %p329 = scmp.eq.s32.totalorder %s49, 0
      %p330 = por %p328, %p329
      %p331 = scmp.ne.s32.totalorder %s319, %s320
      %p332 = scmp.eq.s32.totalorder %s50, 1
      %p333 = por %p331, %p332
      %p335 = scmp.ne.s32.totalorder %s320, %s334
      %p336 = scmp.eq.s32.totalorder %s50, 0
      %p337 = por %p335, %p336
      %s339 = sadd.s32 %s338, 1
      %p342 = scmp.eq.s32.totalorder %s44, 1
      %p343 = scmp.ne.s32.totalorder %s338, %s340
      %p344 = scmp.eq.s32.totalorder %s44, 0
      %p345 = por %p343, %p344
      %p346 = scmp.ne.s32.totalorder %s338, %s340
      %p347 = scmp.eq.s32.totalorder %s49, 1
      %p348 = por %p346, %p347
      %p349 = scmp.ne.s32.totalorder %s340, %s341
      %p350 = scmp.eq.s32.totalorder %s49, 0
      %p351 = por %p349, %p350
      %p352 = scmp.ne.s32.totalorder %s340, %s341
      %p353 = scmp.eq.s32.totalorder %s50, 1
      %p354 = por %p352, %p353
      %p356 = scmp.ne.s32.totalorder %s341, %s355
      %p357 = scmp.eq.s32.totalorder %s50, 0
      %p358 = por %p356, %p357
      %s360 = sadd.s32 %s359, 1
      %p363 = scmp.eq.s32.totalorder %s44, 1
      %p364 = scmp.ne.s32.totalorder %s359, %s361
      %p365 = scmp.eq.s32.totalorder %s44, 0
      %p366 = por %p364, %p365
      %p367 = scmp.ne.s32.totalorder %s359, %s361
      %p368 = scmp.eq.s32.totalorder %s49, 1
      %p369 = por %p367, %p368
      %p370 = scmp.ne.s32.totalorder %s361, %s362
      %p371 = scmp.eq.s32.totalorder %s49, 0
      %p372 = por %p370, %p371
      %p373 = scmp.ne.s32.totalorder %s361, %s362
      %p374 = scmp.eq.s32.totalorder %s50, 1
      %p375 = por %p373, %p374
      %p377 = scmp.ne.s32.totalorder %s362, %s376
      %p378 = scmp.eq.s32.totalorder %s50, 0
      %p379 = por %p377, %p378
      %s381 = sadd.s32 %s380, 1
      %p384 = scmp.eq.s32.totalorder %s44, 1
      %p385 = scmp.ne.s32.totalorder %s380, %s382
      %p386 = scmp.eq.s32.totalorder %s44, 0
      %p387 = por %p385, %p386
      %p388 = scmp.ne.s32.totalorder %s380, %s382
      %p389 = scmp.eq.s32.totalorder %s49, 1
      %p390 = por %p388, %p389
      %p391 = scmp.ne.s32.totalorder %s382, %s383
      %p392 = scmp.eq.s32.totalorder %s49, 0
      %p393 = por %p391, %p392
      %p394 = scmp.ne.s32.totalorder %s382, %s383
      %p395 = scmp.eq.s32.totalorder %s50, 1
      %p396 = por %p394, %p395
      %p398 = scmp.ne.s32.totalorder %s383, %s397
      %p399 = scmp.eq.s32.totalorder %s50, 0
      %p400 = por %p398, %p399
      %s402 = sadd.s32 %s401, 1
      %p405 = scmp.eq.s32.totalorder %s44, 1
      %p406 = scmp.ne.s32.totalorder %s401, %s403
      %p407 = scmp.eq.s32.totalorder %s44, 0
      %p408 = por %p406, %p407
      %p409 = scmp.ne.s32.totalorder %s401, %s403
      %p410 = scmp.eq.s32.totalorder %s49, 1
      %p411 = por %p409, %p410
      %p412 = scmp.ne.s32.totalorder %s403, %s404
      %p413 = scmp.eq.s32.totalorder %s49, 0
      %p414 = por %p412, %p413
      %p415 = scmp.ne.s32.totalorder %s403, %s404
      %p416 = scmp.eq.s32.totalorder %s50, 1
      %p417 = por %p415, %p416
      %p419 = scmp.ne.s32.totalorder %s404, %s418
      %p420 = scmp.eq.s32.totalorder %s50, 0
      %p421 = por %p419, %p420
      %s422 = ssub.s32 %s51, %s63
      %p423 = scmp.eq.s32.totalorder %s422, 0
      %s425 = sadd.s32 %s424, 1
      %s426 = scalar_select %p423, %s424, %s425
      %p429 = pneg %p423
      %p430 = scmp.eq.s32.totalorder %s44, 1
      %p431 = por %p429, %p430
      %p432 = scmp.ne.s32.totalorder %s424, %s427
      %p433 = scmp.eq.s32.totalorder %s44, 0
      %p434 = por %p432, %p433
      %p435 = scmp.ne.s32.totalorder %s424, %s427
      %p436 = scmp.eq.s32.totalorder %s49, 1
      %p437 = por %p435, %p436
      %p438 = scmp.ne.s32.totalorder %s427, %s428
      %p439 = scmp.eq.s32.totalorder %s49, 0
      %p440 = por %p438, %p439
      %p441 = scmp.ne.s32.totalorder %s427, %s428
      %p442 = scmp.eq.s32.totalorder %s50, 1
      %p443 = por %p441, %p442
      %p445 = scmp.ne.s32.totalorder %s428, %s444
      %p446 = scmp.eq.s32.totalorder %s50, 0
      %p447 = por %p445, %p446
      %s448 = ssub.s32 %s51, %s63
      %p449 = scmp.eq.s32.totalorder %s448, 0
      %s451 = sadd.s32 %s450, 1
      %s452 = scalar_select %p449, %s450, %s451
      %p455 = pneg %p449
      %p456 = scmp.eq.s32.totalorder %s44, 1
      %p457 = por %p455, %p456
      %p458 = scmp.ne.s32.totalorder %s450, %s453
      %p459 = scmp.eq.s32.totalorder %s44, 0
      %p460 = por %p458, %p459
      %p461 = scmp.ne.s32.totalorder %s450, %s453
      %p462 = scmp.eq.s32.totalorder %s49, 1
      %p463 = por %p461, %p462
      %p464 = scmp.ne.s32.totalorder %s453, %s454
      %p465 = scmp.eq.s32.totalorder %s49, 0
      %p466 = por %p464, %p465
      %p467 = scmp.ne.s32.totalorder %s453, %s454
      %p468 = scmp.eq.s32.totalorder %s50, 1
      %p469 = por %p467, %p468
      %p471 = scmp.ne.s32.totalorder %s454, %s470
      %p472 = scmp.eq.s32.totalorder %s50, 0
      %p473 = por %p471, %p472
      %p474 = scmp.le.s32.totalorder 1, %s44
      %p475 = scmp.lt.s32.totalorder %s44, 3
      %p476 = pnand %p474, %p475
      %p477 = pneg %p476
      // Predicated region
      $region9: #{tpu_custom_call.1} parent=5 // pred_check
        _
      $region10: #{tpu_custom_call.1} parent=5 // pred_check_branch
        %479 = sbr.rel (%p476) target = $region12
      $region11: #{tpu_custom_call.1} parent=5 // pred_region
        %s480 = ssub.s32 %s44, 1
        // Predicated region
        $region13: #{tpu_custom_call.1} parent=11 // pred_check
          %p481 = pneg %p267
        $region14: #{tpu_custom_call.1} parent=11 // pred_check_branch
          %483 = sbr.rel (%p481) target = $region16
        $region15: #{tpu_custom_call.1} parent=11 // pred_region
          _
        $region16: #{tpu_custom_call.1} parent=11 // pred_fallthru
          _
        // Predicated region
        $region17: #{tpu_custom_call.1} parent=11 // pred_check
          %p484 = pneg %p288
        $region18: #{tpu_custom_call.1} parent=11 // pred_check_branch
          %486 = sbr.rel (%p484) target = $region20
        $region19: #{tpu_custom_call.1} parent=11 // pred_region
          %s488 = ssub.s32 256, 256
          %489 = vsyncadd [#allocation16], %s488
          %s490 = sshll.u32 [#allocation15], 4
          %s491 = int_to_ptr.vmem [resolvable:$true] %s490
          %496 = dma.hbm_to_vmem [thread:$0]  %s8, 256, %s491, [#allocation16], 128, 128, 8
        $region20: #{tpu_custom_call.1} parent=11 // pred_fallthru
          _
        // Predicated region
        $region21: #{tpu_custom_call.1} parent=11 // pred_check
          %p497 = pneg %p309
        $region22: #{tpu_custom_call.1} parent=11 // pred_check_branch
          %499 = sbr.rel (%p497) target = $region24
        $region23: #{tpu_custom_call.1} parent=11 // pred_region
          _
        $region24: #{tpu_custom_call.1} parent=11 // pred_fallthru
          _
        // Predicated region
        $region25: #{tpu_custom_call.1} parent=11 // pred_check
          %p500 = pneg %p330
        $region26: #{tpu_custom_call.1} parent=11 // pred_check_branch
          %502 = sbr.rel (%p500) target = $region28
        $region27: #{tpu_custom_call.1} parent=11 // pred_region
          %s504 = ssub.s32 256, 256
          %505 = vsyncadd [#allocation16], %s504
          %s506 = sshll.u32 [#allocation17], 4
          %s507 = int_to_ptr.vmem [resolvable:$true] %s506
          %512 = dma.hbm_to_vmem [thread:$0]  %s10, 256, %s507, [#allocation16], 128, 128, 8
        $region28: #{tpu_custom_call.1} parent=11 // pred_fallthru
          _
        // Predicated region
        $region29: #{tpu_custom_call.1} parent=11 // pred_check
          %p513 = pneg %p351
        $region30: #{tpu_custom_call.1} parent=11 // pred_check_branch
          %515 = sbr.rel (%p513) target = $region32
        $region31: #{tpu_custom_call.1} parent=11 // pred_region
          %s517 = ssub.s32 256, 256
          %518 = vsyncadd [#allocation19], %s517
          %s519 = sshll.u32 [#allocation18], 4
          %s520 = int_to_ptr.vmem [resolvable:$true] %s519
          %525 = dma.hbm_to_vmem [thread:$0]  %s11, 256, %s520, [#allocation19], 128, 128, 8
        $region32: #{tpu_custom_call.1} parent=11 // pred_fallthru
          _
        // Predicated region
        $region33: #{tpu_custom_call.1} parent=11 // pred_check
          %p526 = pneg %p372
        $region34: #{tpu_custom_call.1} parent=11 // pred_check_branch
          %528 = sbr.rel (%p526) target = $region36
        $region35: #{tpu_custom_call.1} parent=11 // pred_region
          %s530 = ssub.s32 256, 256
          %531 = vsyncadd [#allocation19], %s530
          %s532 = sshll.u32 [#allocation20], 4
          %s533 = int_to_ptr.vmem [resolvable:$true] %s532
          %538 = dma.hbm_to_vmem [thread:$0]  %s12, 256, %s533, [#allocation19], 128, 128, 8
        $region36: #{tpu_custom_call.1} parent=11 // pred_fallthru
          _
        // Predicated region
        $region37: #{tpu_custom_call.1} parent=11 // pred_check
          %p539 = pneg %p393
        $region38: #{tpu_custom_call.1} parent=11 // pred_check_branch
          %541 = sbr.rel (%p539) target = $region40
        $region39: #{tpu_custom_call.1} parent=11 // pred_region
          _
        $region40: #{tpu_custom_call.1} parent=11 // pred_fallthru
          _
        // Predicated region
        $region41: #{tpu_custom_call.1} parent=11 // pred_check
          %p542 = pneg %p414
        $region42: #{tpu_custom_call.1} parent=11 // pred_check_branch
          %544 = sbr.rel (%p542) target = $region44
        $region43: #{tpu_custom_call.1} parent=11 // pred_region
          %s546 = ssub.s32 16, 16
          %547 = vsyncadd [#allocation5], %s546
          %s549 = sshll.u32 %s14, 4
          %s550 = int_to_ptr.vmem [resolvable:$true] %s549
          %552 = dma.vmem_to_smem %s550, 16, [#allocation21], [#allocation5]
        $region44: #{tpu_custom_call.1} parent=11 // pred_fallthru
          _
      $region12: #{tpu_custom_call.1} parent=5 // pred_fallthru
        _
      %p553 = scmp.lt.s32.totalorder %s44, 2
      // Predicated region
      $region45: #{tpu_custom_call.1} parent=5 // pred_check
        %p554 = pneg %p553
      $region46: #{tpu_custom_call.1} parent=5 // pred_check_branch
        %556 = sbr.rel (%p554) target = $region48
      $region47: #{tpu_custom_call.1} parent=5 // pred_region
        // Predicated region
        $region49: #{tpu_custom_call.1} parent=47 // pred_check
          %p557 = pneg %p76
        $region50: #{tpu_custom_call.1} parent=47 // pred_check_branch
          %559 = sbr.rel (%p557) target = $region52
        $region51: #{tpu_custom_call.1} parent=47 // pred_region
          %s560 = sand.u32 %s66, 1
          %s561 = scalar_lea.sflag [#allocation3], %s560
          %s562 = sand.u32 %s66, 1
          %s563 = smul.addr %s562, 32
          %s564 = scalar_lea.vmem [#allocation2], %s563
          %s566 = ssub.s32 512, 512
          %567 = vsyncadd %s561, %s566
          %s568 = smul.addr %s51, 4
          %s569 = smul.addr %s568, 128
          %s570 = scalar_lea.hbm %s0, %s569
          %s571 = sshll.u32 %s564, 4
          %s572 = int_to_ptr.vmem [resolvable:$true] %s571
          %577 = dma.hbm_to_vmem [thread:$0]  %s570, 512, %s572, %s561, 128, 128, 8
        $region52: #{tpu_custom_call.1} parent=47 // pred_fallthru
          _
        // Predicated region
        $region53: #{tpu_custom_call.1} parent=47 // pred_check
          %p578 = pneg %p102
        $region54: #{tpu_custom_call.1} parent=47 // pred_check_branch
          %580 = sbr.rel (%p578) target = $region56
        $region55: #{tpu_custom_call.1} parent=47 // pred_region
          %s581 = sand.u32 %s44, 1
          %s582 = scalar_lea.sflag [#allocation7], %s581
          %s583 = sand.u32 %s92, 1
          %s584 = smul.addr %s583, 32
          %s585 = scalar_lea.vmem [#allocation6], %s584
          %s587 = ssub.s32 512, 512
          %588 = vsyncadd %s582, %s587
          %s589 = smul.addr %s51, 4
          %s590 = smul.addr %s589, 128
          %s591 = scalar_lea.hbm %s1, %s590
          %s592 = sshll.u32 %s585, 4
          %s593 = int_to_ptr.vmem [resolvable:$true] %s592
          %598 = dma.hbm_to_vmem [thread:$0]  %s591, 512, %s593, %s582, 128, 128, 8
        $region56: #{tpu_custom_call.1} parent=47 // pred_fallthru
          _
        // Predicated region
        $region57: #{tpu_custom_call.1} parent=47 // pred_check
          %p599 = pneg %p130
        $region58: #{tpu_custom_call.1} parent=47 // pred_check_branch
          %601 = sbr.rel (%p599) target = $region60
        $region59: #{tpu_custom_call.1} parent=47 // pred_region
          %s602 = sand.u32 %s44, 1
          %s603 = scalar_lea.sflag [#allocation7], %s602
          %s604 = sand.u32 %s120, 1
          %s605 = smul.addr %s604, 128
          %s606 = scalar_lea.vmem [#allocation8], %s605
          %s607 = smul.u32 8, %s52
          %s609 = ssub.s32 2048, 2048
          %610 = vsyncadd %s603, %s609
          %s611 = smul.addr %s607, 2
          %s612 = smul.addr %s51, 16
          %s613 = sadd.s32 %s611, %s612
          %s614 = smul.addr %s613, 128
          %s615 = scalar_lea.hbm %s2, %s614
          %s616 = sshll.u32 %s606, 4
          %s617 = int_to_ptr.vmem [resolvable:$true] %s616
          %622 = dma.hbm_to_vmem [thread:$0]  %s615, 2048, %s617, %s603, 128, 128, 8
        $region60: #{tpu_custom_call.1} parent=47 // pred_fallthru
          _
        // Predicated region
        $region61: #{tpu_custom_call.1} parent=47 // pred_check
          %p623 = pneg %p158
        $region62: #{tpu_custom_call.1} parent=47 // pred_check_branch
          %625 = sbr.rel (%p623) target = $region64
        $region63: #{tpu_custom_call.1} parent=47 // pred_region
          %s626 = sand.u32 %s44, 1
          %s627 = scalar_lea.sflag [#allocation10], %s626
          %s628 = sand.u32 %s148, 1
          %s629 = smul.addr %s628, 128
          %s630 = scalar_lea.vmem [#allocation9], %s629
          %s631 = smul.u32 8, %s52
          %s633 = ssub.s32 2048, 2048
          %634 = vsyncadd %s627, %s633
          %s635 = smul.addr %s631, 2
          %s636 = smul.addr %s51, 16
          %s637 = sadd.s32 %s635, %s636
          %s638 = smul.addr %s637, 128
          %s639 = scalar_lea.hbm %s3, %s638
          %s640 = sshll.u32 %s630, 4
          %s641 = int_to_ptr.vmem [resolvable:$true] %s640
          %646 = dma.hbm_to_vmem [thread:$0]  %s639, 2048, %s641, %s627, 128, 128, 8
        $region64: #{tpu_custom_call.1} parent=47 // pred_fallthru
          _
        // Predicated region
        $region65: #{tpu_custom_call.1} parent=47 // pred_check
          %p647 = pneg %p186
        $region66: #{tpu_custom_call.1} parent=47 // pred_check_branch
          %649 = sbr.rel (%p647) target = $region68
        $region67: #{tpu_custom_call.1} parent=47 // pred_region
          %s650 = sand.u32 %s44, 1
          %s651 = scalar_lea.sflag [#allocation10], %s650
          %s652 = sand.u32 %s176, 1
          %s653 = smul.addr %s652, 16
          %s654 = scalar_lea.vmem [#allocation11], %s653
          %s656 = ssub.s32 256, 256
          %657 = vsyncadd %s651, %s656
          %s658 = smul.addr %s52, 2
          %s659 = smul.addr %s51, 2
          %s660 = sadd.s32 %s658, %s659
          %s661 = smul.addr %s660, 128
          %s662 = scalar_lea.hbm %s4, %s661
          %s663 = sshll.u32 %s654, 4
          %s664 = int_to_ptr.vmem [resolvable:$true] %s663
          %669 = dma.hbm_to_vmem [thread:$0]  %s662, 256, %s664, %s651, 128, 128, 8
        $region68: #{tpu_custom_call.1} parent=47 // pred_fallthru
          _
        // Predicated region
        $region69: #{tpu_custom_call.1} parent=47 // pred_check
          %p670 = pneg %p214
        $region70: #{tpu_custom_call.1} parent=47 // pred_check_branch
          %672 = sbr.rel (%p670) target = $region72
        $region71: #{tpu_custom_call.1} parent=47 // pred_region
          %s673 = sand.u32 %s44, 1
          %s674 = scalar_lea.sflag [#allocation13], %s673
          %s675 = sand.u32 %s204, 1
          %s676 = smul.addr %s675, 16
          %s677 = scalar_lea.vmem [#allocation12], %s676
          %s679 = ssub.s32 256, 256
          %680 = vsyncadd %s674, %s679
          %s681 = smul.addr %s52, 2
          %s682 = smul.addr %s51, 2
          %s683 = sadd.s32 %s681, %s682
          %s684 = smul.addr %s683, 128
          %s685 = scalar_lea.hbm %s5, %s684
          %s686 = sshll.u32 %s677, 4
          %s687 = int_to_ptr.vmem [resolvable:$true] %s686
          %692 = dma.hbm_to_vmem [thread:$0]  %s685, 256, %s687, %s674, 128, 128, 8
        $region72: #{tpu_custom_call.1} parent=47 // pred_fallthru
          _
        // Predicated region
        $region73: #{tpu_custom_call.1} parent=47 // pred_check
          %p693 = pneg %p240
        $region74: #{tpu_custom_call.1} parent=47 // pred_check_branch
          %695 = sbr.rel (%p693) target = $region76
        $region75: #{tpu_custom_call.1} parent=47 // pred_region
          %s696 = sand.u32 %s44, 1
          %s697 = scalar_lea.sflag [#allocation13], %s696
          %s698 = sand.u32 %s230, 1
          %s699 = smul.addr %s698, 16
          %s700 = scalar_lea.vmem [#allocation14], %s699
          %s702 = ssub.s32 256, 256
          %703 = vsyncadd %s697, %s702
          %s704 = smul.addr %s51, 2
          %s705 = smul.addr %s704, 128
          %s706 = scalar_lea.hbm %s6, %s705
          %s707 = sshll.u32 %s700, 4
          %s708 = int_to_ptr.vmem [resolvable:$true] %s707
          %713 = dma.hbm_to_vmem [thread:$0]  %s706, 256, %s708, %s697, 128, 128, 8
        $region76: #{tpu_custom_call.1} parent=47 // pred_fallthru
          _
      $region48: #{tpu_custom_call.1} parent=5 // pred_fallthru
        _
      %p714 = scmp.le.s32.totalorder 1, %s44
      %p715 = scmp.lt.s32.totalorder %s44, 3
      %p716 = pnand %p714, %p715
      %p717 = pneg %p716
      // Predicated region
      $region77: #{tpu_custom_call.1} parent=5 // pred_check
        _
      $region78: #{tpu_custom_call.1} parent=5 // pred_check_branch
        %719 = sbr.rel (%p716) target = $region80
      $region79: #{tpu_custom_call.1} parent=5 // pred_region
        %s720 = ssub.s32 %s44, 1
        %s721 = sand.u32 %s69, 1
        %s722 = scalar_lea.sflag [#allocation3], %s721
        %s723 = sand.u32 %s69, 1
        %s724 = smul.addr %s723, 32
        %s725 = scalar_lea.vmem [#allocation2], %s724
        // Predicated region
        $region81: #{tpu_custom_call.1} parent=79 // pred_check
          %p726 = pneg %p82
        $region82: #{tpu_custom_call.1} parent=79 // pred_check_branch
          %728 = sbr.rel (%p726) target = $region84
        $region83: #{tpu_custom_call.1} parent=79 // pred_region
          %729 = dma.done %s722, 512
        $region84: #{tpu_custom_call.1} parent=79 // pred_fallthru
          _
        %s730 = sand.u32 %s49, 1
        %s731 = scalar_lea.sflag [#allocation7], %s730
        %s732 = sand.u32 %s95, 1
        %s733 = smul.addr %s732, 32
        %s734 = scalar_lea.vmem [#allocation6], %s733
        // Predicated region
        $region85: #{tpu_custom_call.1} parent=79 // pred_check
          %p735 = pneg %p108
        $region86: #{tpu_custom_call.1} parent=79 // pred_check_branch
          %737 = sbr.rel (%p735) target = $region88
        $region87: #{tpu_custom_call.1} parent=79 // pred_region
          %738 = dma.done %s731, 512
        $region88: #{tpu_custom_call.1} parent=79 // pred_fallthru
          _
        %s739 = sand.u32 %s49, 1
        %s740 = scalar_lea.sflag [#allocation7], %s739
        %s741 = sand.u32 %s123, 1
        %s742 = smul.addr %s741, 128
        %s743 = scalar_lea.vmem [#allocation8], %s742
        // Predicated region
        $region89: #{tpu_custom_call.1} parent=79 // pred_check
          %p744 = pneg %p136
        $region90: #{tpu_custom_call.1} parent=79 // pred_check_branch
          %746 = sbr.rel (%p744) target = $region92
        $region91: #{tpu_custom_call.1} parent=79 // pred_region
          %747 = dma.done %s740, 2048
        $region92: #{tpu_custom_call.1} parent=79 // pred_fallthru
          _
        %s748 = sand.u32 %s49, 1
        %s749 = scalar_lea.sflag [#allocation10], %s748
        %s750 = sand.u32 %s151, 1
        %s751 = smul.addr %s750, 128
        %s752 = scalar_lea.vmem [#allocation9], %s751
        // Predicated region
        $region93: #{tpu_custom_call.1} parent=79 // pred_check
          %p753 = pneg %p164
        $region94: #{tpu_custom_call.1} parent=79 // pred_check_branch
          %755 = sbr.rel (%p753) target = $region96
        $region95: #{tpu_custom_call.1} parent=79 // pred_region
          %756 = dma.done %s749, 2048
        $region96: #{tpu_custom_call.1} parent=79 // pred_fallthru
          _
        %s757 = sand.u32 %s49, 1
        %s758 = scalar_lea.sflag [#allocation10], %s757
        %s759 = sand.u32 %s179, 1
        %s760 = smul.addr %s759, 16
        %s761 = scalar_lea.vmem [#allocation11], %s760
        // Predicated region
        $region97: #{tpu_custom_call.1} parent=79 // pred_check
          %p762 = pneg %p192
        $region98: #{tpu_custom_call.1} parent=79 // pred_check_branch
          %764 = sbr.rel (%p762) target = $region100
        $region99: #{tpu_custom_call.1} parent=79 // pred_region
          %765 = dma.done %s758, 256
        $region100: #{tpu_custom_call.1} parent=79 // pred_fallthru
          _
        %s766 = sand.u32 %s49, 1
        %s767 = scalar_lea.sflag [#allocation13], %s766
        %s768 = sand.u32 %s207, 1
        %s769 = smul.addr %s768, 16
        %s770 = scalar_lea.vmem [#allocation12], %s769
        // Predicated region
        $region101: #{tpu_custom_call.1} parent=79 // pred_check
          %p771 = pneg %p220
        $region102: #{tpu_custom_call.1} parent=79 // pred_check_branch
          %773 = sbr.rel (%p771) target = $region104
        $region103: #{tpu_custom_call.1} parent=79 // pred_region
          %774 = dma.done %s767, 256
        $region104: #{tpu_custom_call.1} parent=79 // pred_fallthru
          _
        %s775 = sand.u32 %s49, 1
        %s776 = scalar_lea.sflag [#allocation13], %s775
        %s777 = sand.u32 %s233, 1
        %s778 = smul.addr %s777, 16
        %s779 = scalar_lea.vmem [#allocation14], %s778
        // Predicated region
        $region105: #{tpu_custom_call.1} parent=79 // pred_check
          %p780 = pneg %p246
        $region106: #{tpu_custom_call.1} parent=79 // pred_check_branch
          %782 = sbr.rel (%p780) target = $region108
        $region107: #{tpu_custom_call.1} parent=79 // pred_region
          %783 = dma.done %s776, 256
        $region108: #{tpu_custom_call.1} parent=79 // pred_fallthru
          _
        // Predicated region
        $region109: #{tpu_custom_call.1} parent=79 // pred_check
          %p784 = pneg %p288
        $region110: #{tpu_custom_call.1} parent=79 // pred_check_branch
          %786 = sbr.rel (%p784) target = $region112
        $region111: #{tpu_custom_call.1} parent=79 // pred_region
          %787 = dma.done [#allocation16], 256
        $region112: #{tpu_custom_call.1} parent=79 // pred_fallthru
          _
        // Predicated region
        $region113: #{tpu_custom_call.1} parent=79 // pred_check
          %p788 = pneg %p330
        $region114: #{tpu_custom_call.1} parent=79 // pred_check_branch
          %790 = sbr.rel (%p788) target = $region116
        $region115: #{tpu_custom_call.1} parent=79 // pred_region
          %791 = dma.done [#allocation16], 256
        $region116: #{tpu_custom_call.1} parent=79 // pred_fallthru
          _
        // Predicated region
        $region117: #{tpu_custom_call.1} parent=79 // pred_check
          %p792 = pneg %p351
        $region118: #{tpu_custom_call.1} parent=79 // pred_check_branch
          %794 = sbr.rel (%p792) target = $region120
        $region119: #{tpu_custom_call.1} parent=79 // pred_region
          %795 = dma.done [#allocation19], 256
        $region120: #{tpu_custom_call.1} parent=79 // pred_fallthru
          _
        // Predicated region
        $region121: #{tpu_custom_call.1} parent=79 // pred_check
          %p796 = pneg %p372
        $region122: #{tpu_custom_call.1} parent=79 // pred_check_branch
          %798 = sbr.rel (%p796) target = $region124
        $region123: #{tpu_custom_call.1} parent=79 // pred_region
          %799 = dma.done [#allocation19], 256
        $region124: #{tpu_custom_call.1} parent=79 // pred_fallthru
          _
        // Predicated region
        $region125: #{tpu_custom_call.1} parent=79 // pred_check
          %p800 = pneg %p414
        $region126: #{tpu_custom_call.1} parent=79 // pred_check_branch
          %802 = sbr.rel (%p800) target = $region128
        $region127: #{tpu_custom_call.1} parent=79 // pred_region
          %803 = dma.done [#allocation5], 16
        $region128: #{tpu_custom_call.1} parent=79 // pred_fallthru
          _
        %804 = sfence
        %s805 = sand.u32 %s69, 1
        %s806 = scalar_lea.sflag [#allocation3], %s805
        %s807 = sand.u32 %s69, 1
        %s808 = smul.addr %s807, 32
        %s809 = scalar_lea.vmem [#allocation2], %s808
        %p810 = pneg %p82
        %p811 = pneg %p79
        %s812 = sand.u32 %s49, 1
        %s813 = scalar_lea.sflag [#allocation7], %s812
        %s814 = sand.u32 %s95, 1
        %s815 = smul.addr %s814, 32
        %s816 = scalar_lea.vmem [#allocation6], %s815
        %p817 = pneg %p108
        %p818 = pneg %p105
        %s819 = sand.u32 %s49, 1
        %s820 = scalar_lea.sflag [#allocation7], %s819
        %s821 = sand.u32 %s123, 1
        %s822 = smul.addr %s821, 128
        %s823 = scalar_lea.vmem [#allocation8], %s822
        %p824 = pneg %p136
        %p825 = pneg %p133
        %s826 = sand.u32 %s49, 1
        %s827 = scalar_lea.sflag [#allocation10], %s826
        %s828 = sand.u32 %s151, 1
        %s829 = smul.addr %s828, 128
        %s830 = scalar_lea.vmem [#allocation9], %s829
        %p831 = pneg %p164
        %p832 = pneg %p161
        %s833 = sand.u32 %s49, 1
        %s834 = scalar_lea.sflag [#allocation10], %s833
        %s835 = sand.u32 %s179, 1
        %s836 = smul.addr %s835, 16
        %s837 = scalar_lea.vmem [#allocation11], %s836
        %p838 = pneg %p192
        %p839 = pneg %p189
        %s840 = sand.u32 %s49, 1
        %s841 = scalar_lea.sflag [#allocation13], %s840
        %s842 = sand.u32 %s207, 1
        %s843 = smul.addr %s842, 16
        %s844 = scalar_lea.vmem [#allocation12], %s843
        %p845 = pneg %p220
        %p846 = pneg %p217
        %s847 = sand.u32 %s49, 1
        %s848 = scalar_lea.sflag [#allocation13], %s847
        %s849 = sand.u32 %s233, 1
        %s850 = smul.addr %s849, 16
        %s851 = scalar_lea.vmem [#allocation14], %s850
        %p852 = pneg %p246
        %p853 = pneg %p243
        %p854 = pneg %p267
        %p855 = pneg %p264
        %p856 = pneg %p288
        %p857 = pneg %p285
        %p858 = pneg %p309
        %p859 = pneg %p306
        %p860 = pneg %p330
        %p861 = pneg %p327
        %p862 = pneg %p351
        %p863 = pneg %p348
        %p864 = pneg %p372
        %p865 = pneg %p369
        %p866 = pneg %p393
        %p867 = pneg %p390
        %p868 = pneg %p414
        %p869 = pneg %p411
        %p870 = pneg %p440
        %p871 = pneg %p437
        %s872 = sand.u32 %s427, 1
        %s873 = scalar_lea.sflag [#allocation4], %s872
        %s874 = sand.u32 %s427, 1
        %s875 = smul.addr %s874, 32
        %s876 = scalar_lea.vmem [#allocation22], %s875
        %p877 = pneg %p466
        %p878 = pneg %p463
        %s879 = sand.u32 %s453, 1
        %s880 = scalar_lea.sflag [#allocation24], %s879
        %s881 = sand.u32 %s453, 1
        %s882 = smul.addr %s881, 32
        %s883 = scalar_lea.vmem [#allocation23], %s882
        %s884 = smul.u32 8, %s54
        %s885 = smul.u32 8, %s54
        %s886 = sld [smem:[#allocation21]]
        %s887 = sld [smem:[#allocation21 + $0x1]]
        %v888 = vld [vmem:[%s725] sm:$0xff]
        %v889 = vld [vmem:[%s725 + $0x8] sm:$0xff]
        %v890 = vld [vmem:[%s725 + $0x10] sm:$0xff]
        %v891 = vld [vmem:[%s725 + $0x18] sm:$0xff]
        %v892 = vld [vmem:[%s734] sm:$0xff]
        %v893 = vld [vmem:[%s734 + $0x8] sm:$0xff]
        %v894 = vld [vmem:[%s734 + $0x10] sm:$0xff]
        %v895 = vld [vmem:[%s734 + $0x18] sm:$0xff]
        %v896 = vld [vmem:[%s743] sm:$0xff]
        %v897 = vld [vmem:[%s743 + $0x8] sm:$0xff]
        %v898 = vld [vmem:[%s743 + $0x10] sm:$0xff]
        %v899 = vld [vmem:[%s743 + $0x18] sm:$0xff]
        %v900 = vld [vmem:[%s743 + $0x20] sm:$0xff]
        %v901 = vld [vmem:[%s743 + $0x28] sm:$0xff]
        %v902 = vld [vmem:[%s743 + $0x30] sm:$0xff]
        %v903 = vld [vmem:[%s743 + $0x38] sm:$0xff]
        %v904 = vld [vmem:[%s743 + $0x40] sm:$0xff]
        %v905 = vld [vmem:[%s743 + $0x48] sm:$0xff]
        %v906 = vld [vmem:[%s743 + $0x50] sm:$0xff]
        %v907 = vld [vmem:[%s743 + $0x58] sm:$0xff]
        %v908 = vld [vmem:[%s743 + $0x60] sm:$0xff]
        %v909 = vld [vmem:[%s743 + $0x68] sm:$0xff]
        %v910 = vld [vmem:[%s743 + $0x70] sm:$0xff]
        %v911 = vld [vmem:[%s743 + $0x78] sm:$0xff]
        %v912 = vld [vmem:[%s752] sm:$0xff]
        %v913 = vld [vmem:[%s752 + $0x8] sm:$0xff]
        %v914 = vld [vmem:[%s752 + $0x10] sm:$0xff]
        %v915 = vld [vmem:[%s752 + $0x18] sm:$0xff]
        %v916 = vld [vmem:[%s752 + $0x20] sm:$0xff]
        %v917 = vld [vmem:[%s752 + $0x28] sm:$0xff]
        %v918 = vld [vmem:[%s752 + $0x30] sm:$0xff]
        %v919 = vld [vmem:[%s752 + $0x38] sm:$0xff]
        %v920 = vld [vmem:[%s752 + $0x40] sm:$0xff]
        %v921 = vld [vmem:[%s752 + $0x48] sm:$0xff]
        %v922 = vld [vmem:[%s752 + $0x50] sm:$0xff]
        %v923 = vld [vmem:[%s752 + $0x58] sm:$0xff]
        %v924 = vld [vmem:[%s752 + $0x60] sm:$0xff]
        %v925 = vld [vmem:[%s752 + $0x68] sm:$0xff]
        %v926 = vld [vmem:[%s752 + $0x70] sm:$0xff]
        %v927 = vld [vmem:[%s752 + $0x78] sm:$0xff]
        %v928 = vmul.f32 %v888, %v896
        %v929 = vmul.f32 %v889, %v897
        %v930 = vmul.f32 %v890, %v898
        %v931 = vmul.f32 %v891, %v899
        %v932 = vmul.f32 %v888, %v900
        %v933 = vmul.f32 %v889, %v901
        %v934 = vmul.f32 %v890, %v902
        %v935 = vmul.f32 %v891, %v903
        %v936 = vmul.f32 %v888, %v904
        %v937 = vmul.f32 %v889, %v905
        %v938 = vmul.f32 %v890, %v906
        %v939 = vmul.f32 %v891, %v907
        %v940 = vmul.f32 %v888, %v908
        %v941 = vmul.f32 %v889, %v909
        %v942 = vmul.f32 %v890, %v910
        %v943 = vmul.f32 %v891, %v911
        %v944 = vmul.f32 %v892, %v912
        %v945 = vmul.f32 %v893, %v913
        %v946 = vmul.f32 %v894, %v914
        %v947 = vmul.f32 %v895, %v915
        %v948 = vmul.f32 %v892, %v916
        %v949 = vmul.f32 %v893, %v917
        %v950 = vmul.f32 %v894, %v918
        %v951 = vmul.f32 %v895, %v919
        %v952 = vmul.f32 %v892, %v920
        %v953 = vmul.f32 %v893, %v921
        %v954 = vmul.f32 %v894, %v922
        %v955 = vmul.f32 %v895, %v923
        %v956 = vmul.f32 %v892, %v924
        %v957 = vmul.f32 %v893, %v925
        %v958 = vmul.f32 %v894, %v926
        %v959 = vmul.f32 %v895, %v927
        %v960 = vsub.f32 %v928, %v944
        %v961 = vsub.f32 %v929, %v945
        %v962 = vsub.f32 %v930, %v946
        %v963 = vsub.f32 %v931, %v947
        %v964 = vsub.f32 %v932, %v948
        %v965 = vsub.f32 %v933, %v949
        %v966 = vsub.f32 %v934, %v950
        %v967 = vsub.f32 %v935, %v951
        %v968 = vsub.f32 %v936, %v952
        %v969 = vsub.f32 %v937, %v953
        %v970 = vsub.f32 %v938, %v954
        %v971 = vsub.f32 %v939, %v955
        %v972 = vsub.f32 %v940, %v956
        %v973 = vsub.f32 %v941, %v957
        %v974 = vsub.f32 %v942, %v958
        %v975 = vsub.f32 %v943, %v959
        %vm976 = vcmask 130048
        %v977 = vsel %vm976, %v960, 0.0
        %v978 = vsel %vm976, %v962, 0.0
        %v979 = vadd.f32 %v977, %v978
        %v980 = vsel %vm976, %v961, 0.0
        %v981 = vsel %vm976, %v963, 0.0
        %v982 = vadd.f32 %v980, %v981
        %v983 = vsel %vm976, %v964, 0.0
        %v984 = vsel %vm976, %v966, 0.0
        %v985 = vadd.f32 %v983, %v984
        %v986 = vsel %vm976, %v965, 0.0
        %v987 = vsel %vm976, %v967, 0.0
        %v988 = vadd.f32 %v986, %v987
        %v989 = vsel %vm976, %v968, 0.0
        %v990 = vsel %vm976, %v970, 0.0
        %v991 = vadd.f32 %v989, %v990
        %v992 = vsel %vm976, %v969, 0.0
        %v993 = vsel %vm976, %v971, 0.0
        %v994 = vadd.f32 %v992, %v993
        %v995 = vsel %vm976, %v972, 0.0
        %v996 = vsel %vm976, %v974, 0.0
        %v997 = vadd.f32 %v995, %v996
        %v998 = vsel %vm976, %v973, 0.0
        %v999 = vsel %vm976, %v975, 0.0
        %v1000 = vadd.f32 %v998, %v999
        %v1001 = vmul.f32 %v888, %v912
        %v1002 = vmul.f32 %v889, %v913
        %v1003 = vmul.f32 %v890, %v914
        %v1004 = vmul.f32 %v891, %v915
        %v1005 = vmul.f32 %v888, %v916
        %v1006 = vmul.f32 %v889, %v917
        %v1007 = vmul.f32 %v890, %v918
        %v1008 = vmul.f32 %v891, %v919
        %v1009 = vmul.f32 %v888, %v920
        %v1010 = vmul.f32 %v889, %v921
        %v1011 = vmul.f32 %v890, %v922
        %v1012 = vmul.f32 %v891, %v923
        %v1013 = vmul.f32 %v888, %v924
        %v1014 = vmul.f32 %v889, %v925
        %v1015 = vmul.f32 %v890, %v926
        %v1016 = vmul.f32 %v891, %v927
        %v1017 = vmul.f32 %v892, %v896
        %v1018 = vmul.f32 %v893, %v897
        %v1019 = vmul.f32 %v894, %v898
        %v1020 = vmul.f32 %v895, %v899
        %v1021 = vmul.f32 %v892, %v900
        %v1022 = vmul.f32 %v893, %v901
        %v1023 = vmul.f32 %v894, %v902
        %v1024 = vmul.f32 %v895, %v903
        %v1025 = vmul.f32 %v892, %v904
        %v1026 = vmul.f32 %v893, %v905
        %v1027 = vmul.f32 %v894, %v906
        %v1028 = vmul.f32 %v895, %v907
        %v1029 = vmul.f32 %v892, %v908
        %v1030 = vmul.f32 %v893, %v909
        %v1031 = vmul.f32 %v894, %v910
        %v1032 = vmul.f32 %v895, %v911
        %v1033 = vadd.f32 %v1001, %v1017
        %v1034 = vadd.f32 %v1002, %v1018
        %v1035 = vadd.f32 %v1003, %v1019
        %v1036 = vadd.f32 %v1004, %v1020
        %v1037 = vadd.f32 %v1005, %v1021
        %v1038 = vadd.f32 %v1006, %v1022
        %v1039 = vadd.f32 %v1007, %v1023
        %v1040 = vadd.f32 %v1008, %v1024
        %v1041 = vadd.f32 %v1009, %v1025
        %v1042 = vadd.f32 %v1010, %v1026
        %v1043 = vadd.f32 %v1011, %v1027
        %v1044 = vadd.f32 %v1012, %v1028
        %v1045 = vadd.f32 %v1013, %v1029
        %v1046 = vadd.f32 %v1014, %v1030
        %v1047 = vadd.f32 %v1015, %v1031
        %v1048 = vadd.f32 %v1016, %v1032
        %v1049 = vsel %vm976, %v1033, 0.0
        %v1050 = vsel %vm976, %v1035, 0.0
        %v1051 = vadd.f32 %v1049, %v1050
        %v1052 = vsel %vm976, %v1034, 0.0
        %v1053 = vsel %vm976, %v1036, 0.0
        %v1054 = vadd.f32 %v1052, %v1053
        %v1055 = vsel %vm976, %v1037, 0.0
        %v1056 = vsel %vm976, %v1039, 0.0
        %v1057 = vadd.f32 %v1055, %v1056
        %v1058 = vsel %vm976, %v1038, 0.0
        %v1059 = vsel %vm976, %v1040, 0.0
        %v1060 = vadd.f32 %v1058, %v1059
        %v1061 = vsel %vm976, %v1041, 0.0
        %v1062 = vsel %vm976, %v1043, 0.0
        %v1063 = vadd.f32 %v1061, %v1062
        %v1064 = vsel %vm976, %v1042, 0.0
        %v1065 = vsel %vm976, %v1044, 0.0
        %v1066 = vadd.f32 %v1064, %v1065
        %v1067 = vsel %vm976, %v1045, 0.0
        %v1068 = vsel %vm976, %v1047, 0.0
        %v1069 = vadd.f32 %v1067, %v1068
        %v1070 = vsel %vm976, %v1046, 0.0
        %v1071 = vsel %vm976, %v1048, 0.0
        %v1072 = vadd.f32 %v1070, %v1071
        %v1073 = vld [vmem:[%s7] sm:$0xff]
        %v1074 = vld [vmem:[%s7 + $0x8] sm:$0xff]
        %v1075 = vld [vmem:[#allocation15] sm:$0xff]
        %v1076 = vld [vmem:[#allocation15 + $0x8] sm:$0xff]
        %v1077 = vld [vmem:[%s9] sm:$0xff]
        %v1078 = vld [vmem:[%s9 + $0x8] sm:$0xff]
        %v1079 = vld [vmem:[#allocation17] sm:$0xff]
        %v1080 = vld [vmem:[#allocation17 + $0x8] sm:$0xff]
        %v1081 = vld [vmem:[#allocation18] sm:$0xff]
        %v1082 = vld [vmem:[#allocation18 + $0x8] sm:$0xff]
        %v1083 = vld [vmem:[#allocation20] sm:$0xff]
        %v1084 = vld [vmem:[#allocation20 + $0x8] sm:$0xff]
        %v1085 = vld [vmem:[%s13] sm:$0xff]
        %v1086 = vld [vmem:[%s13 + $0x8] sm:$0xff]
        %v1087 = vadd.f32 %v979, %v1051
        %v1088 = vadd.f32 %v982, %v1054
        %v1089 = vadd.f32 %v985, %v1057
        %v1090 = vadd.f32 %v988, %v1060
        %v1091 = vadd.f32 %v991, %v1063
        %v1092 = vadd.f32 %v994, %v1066
        %v1093 = vadd.f32 %v997, %v1069
        %v1094 = vadd.f32 %v1000, %v1072
        %v1096 = vsel %vm976, %v979, 0
        %v1099 = vsel %vm976, %v982, 0
        %v1102 = vsel %vm976, %v985, 0
        %v1105 = vsel %vm976, %v988, 0
        %v1108 = vsel %vm976, %v991, 0
        %v1111 = vsel %vm976, %v994, 0
        %v1114 = vsel %vm976, %v997, 0
        %v1117 = vsel %vm976, %v1000, 0
        %1119 = vmatprep.subr.mxu0 0.0
        %1120 = vmatpush1.msra.mxu0 %v1081
        %1121 = vmatprep.subr.mxu0 0.0
        %1122 = vmatpush1.msra.mxu0 %v1082
        %1123 = vmatprep.subr.mxu0 0.0
        %1124 = vmatpush1.msra.mxu0 0.0
        %1125 = vmatprep.subr.mxu0 0.0
        %1126 = vmatpush1.msra.mxu0 0.0
        %1127 = vmatprep.subr.mxu0 0.0
        %1128 = vmatpush1.msra.mxu0 0.0
        %1129 = vmatprep.subr.mxu0 0.0
        %1130 = vmatpush1.msra.mxu0 0.0
        %1131 = vmatprep.subr.mxu0 0.0
        %1132 = vmatpush1.msra.mxu0 0.0
        %1133 = vmatprep.subr.mxu0 0.0
        %1134 = vmatpush1.msra.mxu0 0.0
        %1135 = vmatprep.subr.mxu0 0.0
        %1136 = vmatpush1.msra.mxu0 0.0
        %1137 = vmatprep.subr.mxu0 0.0
        %1138 = vmatpush1.msra.mxu0 0.0
        %1139 = vmatprep.subr.mxu0 0.0
        %1140 = vmatpush1.msra.mxu0 0.0
        %1141 = vmatprep.subr.mxu0 0.0
        %1142 = vmatpush1.msra.mxu0 0.0
        %1143 = vmatprep.subr.mxu0 0.0
        %1144 = vmatpush1.msra.mxu0 0.0
        %1145 = vmatprep.subr.mxu0 0.0
        %1146 = vmatpush1.msra.mxu0 0.0
        %1147 = vmatprep.subr.mxu0 0.0
        %1148 = vmatpush1.msra.mxu0 0.0
        %1149 = vmatprep.subr.mxu0 0.0
        %1150 = vmatpush1.msra.mxu0 0.0
        %1151 = vmatprep.subr.mxu0 0.0
        %1152 = vmatpush1.msra.mxu0 0.0
        %1153 = vmatprep.subr.mxu0 0.0
        %1154 = vmatpush1.msra.mxu0 0.0
        %1155 = vmatprep.subr.mxu0 0.0
        %1156 = vmatpush1.msra.mxu0 0.0
        %1157 = vmatprep.subr.mxu0 0.0
        %1158 = vmatpush1.msra.mxu0 0.0
        %1159 = vmatprep.subr.mxu0 0.0
        %1160 = vmatpush1.msra.mxu0 0.0
        %1161 = vmatprep.subr.mxu0 0.0
        %1162 = vmatpush1.msra.mxu0 0.0
        %1163 = vmatprep.subr.mxu0 0.0
        %1164 = vmatpush1.msra.mxu0 0.0
        %1165 = vmatprep.subr.mxu0 0.0
        %1166 = vmatpush1.msra.mxu0 0.0
        %1167 = vmatprep.subr.mxu0 0.0
        %1168 = vmatpush1.msra.mxu0 0.0
        %1169 = vmatprep.subr.mxu0 0.0
        %1170 = vmatpush1.msra.mxu0 0.0
        %1171 = vmatprep.subr.mxu0 0.0
        %1172 = vmatpush1.msra.mxu0 0.0
        %1173 = vmatprep.subr.mxu0 0.0
        %1174 = vmatpush1.msra.mxu0 0.0
        %1175 = vmatprep.subr.mxu0 0.0
        %1176 = vmatpush1.msra.mxu0 0.0
        %1177 = vmatprep.subr.mxu0 0.0
        %1178 = vmatpush1.msra.mxu0 0.0
        %1179 = vmatprep.subr.mxu0 0.0
        %1180 = vmatpush1.msra.mxu0 0.0
        %1181 = vmatprep.subr.mxu0 0.0
        %1182 = vmatpush1.msra.mxu0 0.0
        %1183 = vmatprep.mubr.f32.mxu0 0.0
        %1184 = vmatmul.mubr.f32.gmra.mrb[0].mxu0 %v1096
        %v1185 = vpop.f32.mrb[0].mxu0
        %v1186 = vadd.f32 0.0, %v1185
        %v1187 = vpop.f32.mrb[0].mxu0
        %1188 = vmatprep.mubr.f32.mxu0 0.0
        %1189 = vmatmul.mubr.f32.gmra.mrb[0].mxu0 %v1099
        %v1190 = vpop.f32.mrb[0].mxu0
        %v1191 = vadd.f32 0.0, %v1190
        %v1192 = vpop.f32.mrb[0].mxu0
        %1193 = vmatprep.mubr.f32.mxu0 0.0
        %1194 = vmatmul.mubr.f32.gmra.mrb[0].mxu0 %v1102
        %v1195 = vpop.f32.mrb[0].mxu0
        %v1196 = vadd.f32 0.0, %v1195
        %v1197 = vpop.f32.mrb[0].mxu0
        %1198 = vmatprep.mubr.f32.mxu0 0.0
        %1199 = vmatmul.mubr.f32.gmra.mrb[0].mxu0 %v1105
        %v1200 = vpop.f32.mrb[0].mxu0
        %v1201 = vadd.f32 0.0, %v1200
        %v1202 = vpop.f32.mrb[0].mxu0
        %1203 = vmatprep.mubr.f32.mxu0 0.0
        %1204 = vmatmul.mubr.f32.gmra.mrb[0].mxu0 %v1108
        %v1205 = vpop.f32.mrb[0].mxu0
        %v1206 = vadd.f32 0.0, %v1205
        %v1207 = vpop.f32.mrb[0].mxu0
        %1208 = vmatprep.mubr.f32.mxu0 0.0
        %1209 = vmatmul.mubr.f32.gmra.mrb[0].mxu0 %v1111
        %v1210 = vpop.f32.mrb[0].mxu0
        %v1211 = vadd.f32 0.0, %v1210
        %v1212 = vpop.f32.mrb[0].mxu0
        %1213 = vmatprep.mubr.f32.mxu0 0.0
        %1214 = vmatmul.mubr.f32.gmra.mrb[0].mxu0 %v1114
        %v1215 = vpop.f32.mrb[0].mxu0
        %v1216 = vadd.f32 0.0, %v1215
        %v1217 = vpop.f32.mrb[0].mxu0
        %1218 = vmatprep.mubr.f32.mxu0 0.0
        %1219 = vmatmul.mubr.f32.gmra.mrb[0].mxu0 %v1117
        %v1220 = vpop.f32.mrb[0].mxu0
        %v1221 = vadd.f32 0.0, %v1220
        %v1222 = vpop.f32.mrb[0].mxu0
        %1223 = vdwg.mxu0
        %v1225 = vsel %vm976, %v1051, 0
        %v1228 = vsel %vm976, %v1054, 0
        %v1231 = vsel %vm976, %v1057, 0
        %v1234 = vsel %vm976, %v1060, 0
        %v1237 = vsel %vm976, %v1063, 0
        %v1240 = vsel %vm976, %v1066, 0
        %v1243 = vsel %vm976, %v1069, 0
        %v1246 = vsel %vm976, %v1072, 0
        %1248 = vmatprep.subr.mxu0 0.0
        %1249 = vmatpush1.msra.mxu0 %v1083
        %1250 = vmatprep.subr.mxu0 0.0
        %1251 = vmatpush1.msra.mxu0 %v1084
        %1252 = vmatprep.subr.mxu0 0.0
        %1253 = vmatpush1.msra.mxu0 0.0
        %1254 = vmatprep.subr.mxu0 0.0
        %1255 = vmatpush1.msra.mxu0 0.0
        %1256 = vmatprep.subr.mxu0 0.0
        %1257 = vmatpush1.msra.mxu0 0.0
        %1258 = vmatprep.subr.mxu0 0.0
        %1259 = vmatpush1.msra.mxu0 0.0
        %1260 = vmatprep.subr.mxu0 0.0
        %1261 = vmatpush1.msra.mxu0 0.0
        %1262 = vmatprep.subr.mxu0 0.0
        %1263 = vmatpush1.msra.mxu0 0.0
        %1264 = vmatprep.subr.mxu0 0.0
        %1265 = vmatpush1.msra.mxu0 0.0
        %1266 = vmatprep.subr.mxu0 0.0
        %1267 = vmatpush1.msra.mxu0 0.0
        %1268 = vmatprep.subr.mxu0 0.0
        %1269 = vmatpush1.msra.mxu0 0.0
        %1270 = vmatprep.subr.mxu0 0.0
        %1271 = vmatpush1.msra.mxu0 0.0
        %1272 = vmatprep.subr.mxu0 0.0
        %1273 = vmatpush1.msra.mxu0 0.0
        %1274 = vmatprep.subr.mxu0 0.0
        %1275 = vmatpush1.msra.mxu0 0.0
        %1276 = vmatprep.subr.mxu0 0.0
        %1277 = vmatpush1.msra.mxu0 0.0
        %1278 = vmatprep.subr.mxu0 0.0
        %1279 = vmatpush1.msra.mxu0 0.0
        %1280 = vmatprep.subr.mxu0 0.0
        %1281 = vmatpush1.msra.mxu0 0.0
        %1282 = vmatprep.subr.mxu0 0.0
        %1283 = vmatpush1.msra.mxu0 0.0
        %1284 = vmatprep.subr.mxu0 0.0
        %1285 = vmatpush1.msra.mxu0 0.0
        %1286 = vmatprep.subr.mxu0 0.0
        %1287 = vmatpush1.msra.mxu0 0.0
        %1288 = vmatprep.subr.mxu0 0.0
        %1289 = vmatpush1.msra.mxu0 0.0
        %1290 = vmatprep.subr.mxu0 0.0
        %1291 = vmatpush1.msra.mxu0 0.0
        %1292 = vmatprep.subr.mxu0 0.0
        %1293 = vmatpush1.msra.mxu0 0.0
        %1294 = vmatprep.subr.mxu0 0.0
        %1295 = vmatpush1.msra.mxu0 0.0
        %1296 = vmatprep.subr.mxu0 0.0
        %1297 = vmatpush1.msra.mxu0 0.0
        %1298 = vmatprep.subr.mxu0 0.0
        %1299 = vmatpush1.msra.mxu0 0.0
        %1300 = vmatprep.subr.mxu0 0.0
        %1301 = vmatpush1.msra.mxu0 0.0
        %1302 = vmatprep.subr.mxu0 0.0
        %1303 = vmatpush1.msra.mxu0 0.0
        %1304 = vmatprep.subr.mxu0 0.0
        %1305 = vmatpush1.msra.mxu0 0.0
        %1306 = vmatprep.subr.mxu0 0.0
        %1307 = vmatpush1.msra.mxu0 0.0
        %1308 = vmatprep.subr.mxu0 0.0
        %1309 = vmatpush1.msra.mxu0 0.0
        %1310 = vmatprep.subr.mxu0 0.0
        %1311 = vmatpush1.msra.mxu0 0.0
        %1312 = vmatprep.mubr.f32.mxu0 0.0
        %1313 = vmatmul.mubr.f32.gmra.mrb[0].mxu0 %v1225
        %v1314 = vpop.f32.mrb[0].mxu0
        %v1315 = vadd.f32 0.0, %v1314
        %v1316 = vpop.f32.mrb[0].mxu0
        %1317 = vmatprep.mubr.f32.mxu0 0.0
        %1318 = vmatmul.mubr.f32.gmra.mrb[0].mxu0 %v1228
        %v1319 = vpop.f32.mrb[0].mxu0
        %v1320 = vadd.f32 0.0, %v1319
        %v1321 = vpop.f32.mrb[0].mxu0
        %1322 = vmatprep.mubr.f32.mxu0 0.0
        %1323 = vmatmul.mubr.f32.gmra.mrb[0].mxu0 %v1231
        %v1324 = vpop.f32.mrb[0].mxu0
        %v1325 = vadd.f32 0.0, %v1324
        %v1326 = vpop.f32.mrb[0].mxu0
        %1327 = vmatprep.mubr.f32.mxu0 0.0
        %1328 = vmatmul.mubr.f32.gmra.mrb[0].mxu0 %v1234
        %v1329 = vpop.f32.mrb[0].mxu0
        %v1330 = vadd.f32 0.0, %v1329
        %v1331 = vpop.f32.mrb[0].mxu0
        %1332 = vmatprep.mubr.f32.mxu0 0.0
        %1333 = vmatmul.mubr.f32.gmra.mrb[0].mxu0 %v1237
        %v1334 = vpop.f32.mrb[0].mxu0
        %v1335 = vadd.f32 0.0, %v1334
        %v1336 = vpop.f32.mrb[0].mxu0
        %1337 = vmatprep.mubr.f32.mxu0 0.0
        %1338 = vmatmul.mubr.f32.gmra.mrb[0].mxu0 %v1240
        %v1339 = vpop.f32.mrb[0].mxu0
        %v1340 = vadd.f32 0.0, %v1339
        %v1341 = vpop.f32.mrb[0].mxu0
        %1342 = vmatprep.mubr.f32.mxu0 0.0
        %1343 = vmatmul.mubr.f32.gmra.mrb[0].mxu0 %v1243
        %v1344 = vpop.f32.mrb[0].mxu0
        %v1345 = vadd.f32 0.0, %v1344
        %v1346 = vpop.f32.mrb[0].mxu0
        %1347 = vmatprep.mubr.f32.mxu0 0.0
        %1348 = vmatmul.mubr.f32.gmra.mrb[0].mxu0 %v1246
        %v1349 = vpop.f32.mrb[0].mxu0
        %v1350 = vadd.f32 0.0, %v1349
        %v1351 = vpop.f32.mrb[0].mxu0
        %1352 = vdwg.mxu0
        %v1354 = vsel %vm976, %v1087, 0
        %v1357 = vsel %vm976, %v1088, 0
        %v1360 = vsel %vm976, %v1089, 0
        %v1363 = vsel %vm976, %v1090, 0
        %v1366 = vsel %vm976, %v1091, 0
        %v1369 = vsel %vm976, %v1092, 0
        %v1372 = vsel %vm976, %v1093, 0
        %v1375 = vsel %vm976, %v1094, 0
        %1377 = vmatprep.subr.mxu0 0.0
        %1378 = vmatpush1.msra.mxu0 %v1085
        %1379 = vmatprep.subr.mxu0 0.0
        %1380 = vmatpush1.msra.mxu0 %v1086
        %1381 = vmatprep.subr.mxu0 0.0
        %1382 = vmatpush1.msra.mxu0 0.0
        %1383 = vmatprep.subr.mxu0 0.0
        %1384 = vmatpush1.msra.mxu0 0.0
        %1385 = vmatprep.subr.mxu0 0.0
        %1386 = vmatpush1.msra.mxu0 0.0
        %1387 = vmatprep.subr.mxu0 0.0
        %1388 = vmatpush1.msra.mxu0 0.0
        %1389 = vmatprep.subr.mxu0 0.0
        %1390 = vmatpush1.msra.mxu0 0.0
        %1391 = vmatprep.subr.mxu0 0.0
        %1392 = vmatpush1.msra.mxu0 0.0
        %1393 = vmatprep.subr.mxu0 0.0
        %1394 = vmatpush1.msra.mxu0 0.0
        %1395 = vmatprep.subr.mxu0 0.0
        %1396 = vmatpush1.msra.mxu0 0.0
        %1397 = vmatprep.subr.mxu0 0.0
        %1398 = vmatpush1.msra.mxu0 0.0
        %1399 = vmatprep.subr.mxu0 0.0
        %1400 = vmatpush1.msra.mxu0 0.0
        %1401 = vmatprep.subr.mxu0 0.0
        %1402 = vmatpush1.msra.mxu0 0.0
        %1403 = vmatprep.subr.mxu0 0.0
        %1404 = vmatpush1.msra.mxu0 0.0
        %1405 = vmatprep.subr.mxu0 0.0
        %1406 = vmatpush1.msra.mxu0 0.0
        %1407 = vmatprep.subr.mxu0 0.0
        %1408 = vmatpush1.msra.mxu0 0.0
        %1409 = vmatprep.subr.mxu0 0.0
        %1410 = vmatpush1.msra.mxu0 0.0
        %1411 = vmatprep.subr.mxu0 0.0
        %1412 = vmatpush1.msra.mxu0 0.0
        %1413 = vmatprep.subr.mxu0 0.0
        %1414 = vmatpush1.msra.mxu0 0.0
        %1415 = vmatprep.subr.mxu0 0.0
        %1416 = vmatpush1.msra.mxu0 0.0
        %1417 = vmatprep.subr.mxu0 0.0
        %1418 = vmatpush1.msra.mxu0 0.0
        %1419 = vmatprep.subr.mxu0 0.0
        %1420 = vmatpush1.msra.mxu0 0.0
        %1421 = vmatprep.subr.mxu0 0.0
        %1422 = vmatpush1.msra.mxu0 0.0
        %1423 = vmatprep.subr.mxu0 0.0
        %1424 = vmatpush1.msra.mxu0 0.0
        %1425 = vmatprep.subr.mxu0 0.0
        %1426 = vmatpush1.msra.mxu0 0.0
        %1427 = vmatprep.subr.mxu0 0.0
        %1428 = vmatpush1.msra.mxu0 0.0
        %1429 = vmatprep.subr.mxu0 0.0
        %1430 = vmatpush1.msra.mxu0 0.0
        %1431 = vmatprep.subr.mxu0 0.0
        %1432 = vmatpush1.msra.mxu0 0.0
        %1433 = vmatprep.subr.mxu0 0.0
        %1434 = vmatpush1.msra.mxu0 0.0
        %1435 = vmatprep.subr.mxu0 0.0
        %1436 = vmatpush1.msra.mxu0 0.0
        %1437 = vmatprep.subr.mxu0 0.0
        %1438 = vmatpush1.msra.mxu0 0.0
        %1439 = vmatprep.subr.mxu0 0.0
        %1440 = vmatpush1.msra.mxu0 0.0
        %1441 = vmatprep.mubr.f32.mxu0 0.0
        %1442 = vmatmul.mubr.f32.gmra.mrb[0].mxu0 %v1354
        %v1443 = vpop.f32.mrb[0].mxu0
        %v1444 = vadd.f32 0.0, %v1443
        %v1445 = vpop.f32.mrb[0].mxu0
        %1446 = vmatprep.mubr.f32.mxu0 0.0
        %1447 = vmatmul.mubr.f32.gmra.mrb[0].mxu0 %v1357
        %v1448 = vpop.f32.mrb[0].mxu0
        %v1449 = vadd.f32 0.0, %v1448
        %v1450 = vpop.f32.mrb[0].mxu0
        %1451 = vmatprep.mubr.f32.mxu0 0.0
        %1452 = vmatmul.mubr.f32.gmra.mrb[0].mxu0 %v1360
        %v1453 = vpop.f32.mrb[0].mxu0
        %v1454 = vadd.f32 0.0, %v1453
        %v1455 = vpop.f32.mrb[0].mxu0
        %1456 = vmatprep.mubr.f32.mxu0 0.0
        %1457 = vmatmul.mubr.f32.gmra.mrb[0].mxu0 %v1363
        %v1458 = vpop.f32.mrb[0].mxu0
        %v1459 = vadd.f32 0.0, %v1458
        %v1460 = vpop.f32.mrb[0].mxu0
        %1461 = vmatprep.mubr.f32.mxu0 0.0
        %1462 = vmatmul.mubr.f32.gmra.mrb[0].mxu0 %v1366
        %v1463 = vpop.f32.mrb[0].mxu0
        %v1464 = vadd.f32 0.0, %v1463
        %v1465 = vpop.f32.mrb[0].mxu0
        %1466 = vmatprep.mubr.f32.mxu0 0.0
        %1467 = vmatmul.mubr.f32.gmra.mrb[0].mxu0 %v1369
        %v1468 = vpop.f32.mrb[0].mxu0
        %v1469 = vadd.f32 0.0, %v1468
        %v1470 = vpop.f32.mrb[0].mxu0
        %1471 = vmatprep.mubr.f32.mxu0 0.0
        %1472 = vmatmul.mubr.f32.gmra.mrb[0].mxu0 %v1372
        %v1473 = vpop.f32.mrb[0].mxu0
        %v1474 = vadd.f32 0.0, %v1473
        %v1475 = vpop.f32.mrb[0].mxu0
        %1476 = vmatprep.mubr.f32.mxu0 0.0
        %1477 = vmatmul.mubr.f32.gmra.mrb[0].mxu0 %v1375
        %v1478 = vpop.f32.mrb[0].mxu0
        %v1479 = vadd.f32 0.0, %v1478
        %v1480 = vpop.f32.mrb[0].mxu0
        %1481 = vdwg.mxu0
        %v1482 = vsub.f32 %v1186, %v1315
        %v1483 = vsub.f32 %v1191, %v1320
        %v1484 = vsub.f32 %v1196, %v1325
        %v1485 = vsub.f32 %v1201, %v1330
        %v1486 = vsub.f32 %v1206, %v1335
        %v1487 = vsub.f32 %v1211, %v1340
        %v1488 = vsub.f32 %v1216, %v1345
        %v1489 = vsub.f32 %v1221, %v1350
        %v1490 = vsub.f32 %v1444, %v1186
        %v1491 = vsub.f32 %v1449, %v1191
        %v1492 = vsub.f32 %v1454, %v1196
        %v1493 = vsub.f32 %v1459, %v1201
        %v1494 = vsub.f32 %v1464, %v1206
        %v1495 = vsub.f32 %v1469, %v1211
        %v1496 = vsub.f32 %v1474, %v1216
        %v1497 = vsub.f32 %v1479, %v1221
        %v1498 = vsub.f32 %v1490, %v1315
        %v1499 = vsub.f32 %v1491, %v1320
        %v1500 = vsub.f32 %v1492, %v1325
        %v1501 = vsub.f32 %v1493, %v1330
        %v1502 = vsub.f32 %v1494, %v1335
        %v1503 = vsub.f32 %v1495, %v1340
        %v1504 = vsub.f32 %v1496, %v1345
        %v1505 = vsub.f32 %v1497, %v1350
        %1508 = vrot.lane.b32.xlu0 %v1484, 16
        %v1509 = vpop.permute.xlu0 %1508
        %1510 = vrot.lane.b32.xlu0 %v1485, 16
        %v1511 = vpop.permute.xlu0 %1510
        %1516 = vrot.lane.b32.xlu0 %v1486, 32
        %v1517 = vpop.permute.xlu0 %1516
        %1518 = vrot.lane.b32.xlu0 %v1487, 32
        %v1519 = vpop.permute.xlu0 %1518
        %1524 = vrot.lane.b32.xlu0 %v1488, 48
        %v1525 = vpop.permute.xlu0 %1524
        %1526 = vrot.lane.b32.xlu0 %v1489, 48
        %v1527 = vpop.permute.xlu0 %1526
        %v1530 = vsel %vm976, %v1482, %v1509
        %v1531 = vsel %vm976, %v1483, %v1511
        %vm1532 = vcmask 261120
        %v1533 = vsel %vm1532, %v1530, %v1517
        %v1534 = vsel %vm1532, %v1531, %v1519
        %vm1535 = vcmask 392192
        %v1536 = vsel %vm1535, %v1533, %v1525
        %v1537 = vsel %vm1535, %v1534, %v1527
        %1540 = vrot.lane.b32.xlu0 %v1500, 16
        %v1541 = vpop.permute.xlu0 %1540
        %1542 = vrot.lane.b32.xlu0 %v1501, 16
        %v1543 = vpop.permute.xlu0 %1542
        %1548 = vrot.lane.b32.xlu0 %v1502, 32
        %v1549 = vpop.permute.xlu0 %1548
        %1550 = vrot.lane.b32.xlu0 %v1503, 32
        %v1551 = vpop.permute.xlu0 %1550
        %1556 = vrot.lane.b32.xlu0 %v1504, 48
        %v1557 = vpop.permute.xlu0 %1556
        %1558 = vrot.lane.b32.xlu0 %v1505, 48
        %v1559 = vpop.permute.xlu0 %1558
        %v1562 = vsel %vm976, %v1498, %v1541
        %v1563 = vsel %vm976, %v1499, %v1543
        %v1564 = vsel %vm1532, %v1562, %v1549
        %v1565 = vsel %vm1532, %v1563, %v1551
        %v1566 = vsel %vm1535, %v1564, %v1557
        %v1567 = vsel %vm1535, %v1565, %v1559
        %v1568 = vadd.f32 %v1536, %v1566
        %v1569 = vadd.f32 %v1537, %v1567
        %v1571 = vsel %vm976, %v1073, 0
        %v1574 = vsel %vm976, %v1074, 0
        %1576 = vmatprep.subr.mxu0 0.0
        %1577 = vmatpush1.msra.mxu0 %v1536
        %1578 = vmatprep.subr.mxu0 0.0
        %1579 = vmatpush1.msra.mxu0 %v1537
        %1580 = vmatprep.subr.mxu0 0.0
        %1581 = vmatpush1.msra.mxu0 0.0
        %1582 = vmatprep.subr.mxu0 0.0
        %1583 = vmatpush1.msra.mxu0 0.0
        %1584 = vmatprep.subr.mxu0 0.0
        %1585 = vmatpush1.msra.mxu0 0.0
        %1586 = vmatprep.subr.mxu0 0.0
        %1587 = vmatpush1.msra.mxu0 0.0
        %1588 = vmatprep.subr.mxu0 0.0
        %1589 = vmatpush1.msra.mxu0 0.0
        %1590 = vmatprep.subr.mxu0 0.0
        %1591 = vmatpush1.msra.mxu0 0.0
        %1592 = vmatprep.subr.mxu0 0.0
        %1593 = vmatpush1.msra.mxu0 0.0
        %1594 = vmatprep.subr.mxu0 0.0
        %1595 = vmatpush1.msra.mxu0 0.0
        %1596 = vmatprep.subr.mxu0 0.0
        %1597 = vmatpush1.msra.mxu0 0.0
        %1598 = vmatprep.subr.mxu0 0.0
        %1599 = vmatpush1.msra.mxu0 0.0
        %1600 = vmatprep.subr.mxu0 0.0
        %1601 = vmatpush1.msra.mxu0 0.0
        %1602 = vmatprep.subr.mxu0 0.0
        %1603 = vmatpush1.msra.mxu0 0.0
        %1604 = vmatprep.subr.mxu0 0.0
        %1605 = vmatpush1.msra.mxu0 0.0
        %1606 = vmatprep.subr.mxu0 0.0
        %1607 = vmatpush1.msra.mxu0 0.0
        %1608 = vmatprep.subr.mxu0 0.0
        %1609 = vmatpush1.msra.mxu0 0.0
        %1610 = vmatprep.subr.mxu0 0.0
        %1611 = vmatpush1.msra.mxu0 0.0
        %1612 = vmatprep.subr.mxu0 0.0
        %1613 = vmatpush1.msra.mxu0 0.0
        %1614 = vmatprep.subr.mxu0 0.0
        %1615 = vmatpush1.msra.mxu0 0.0
        %1616 = vmatprep.subr.mxu0 0.0
        %1617 = vmatpush1.msra.mxu0 0.0
        %1618 = vmatprep.subr.mxu0 0.0
        %1619 = vmatpush1.msra.mxu0 0.0
        %1620 = vmatprep.subr.mxu0 0.0
        %1621 = vmatpush1.msra.mxu0 0.0
        %1622 = vmatprep.subr.mxu0 0.0
        %1623 = vmatpush1.msra.mxu0 0.0
        %1624 = vmatprep.subr.mxu0 0.0
        %1625 = vmatpush1.msra.mxu0 0.0
        %1626 = vmatprep.subr.mxu0 0.0
        %1627 = vmatpush1.msra.mxu0 0.0
        %1628 = vmatprep.subr.mxu0 0.0
        %1629 = vmatpush1.msra.mxu0 0.0
        %1630 = vmatprep.subr.mxu0 0.0
        %1631 = vmatpush1.msra.mxu0 0.0
        %1632 = vmatprep.subr.mxu0 0.0
        %1633 = vmatpush1.msra.mxu0 0.0
        %1634 = vmatprep.subr.mxu0 0.0
        %1635 = vmatpush1.msra.mxu0 0.0
        %1636 = vmatprep.subr.mxu0 0.0
        %1637 = vmatpush1.msra.mxu0 0.0
        %1638 = vmatprep.subr.mxu0 0.0
        %1639 = vmatpush1.msra.mxu0 0.0
        %1640 = vmatprep.mubr.f32.mxu0 0.0
        %1641 = vmatmul.mubr.f32.gmra.mrb[0].mxu0 %v1571
        %v1642 = vpop.f32.mrb[0].mxu0
        %v1643 = vadd.f32 0.0, %v1642
        %v1644 = vpop.f32.mrb[0].mxu0
        %1645 = vmatprep.mubr.f32.mxu0 0.0
        %1646 = vmatmul.mubr.f32.gmra.mrb[0].mxu0 %v1574
        %v1647 = vpop.f32.mrb[0].mxu0
        %v1648 = vadd.f32 0.0, %v1647
        %v1649 = vpop.f32.mrb[0].mxu0
        %1650 = vdwg.mxu0
        %v1652 = vsel %vm976, %v1075, 0
        %v1655 = vsel %vm976, %v1076, 0
        %1657 = vmatprep.subr.mxu0 0.0
        %1658 = vmatpush1.msra.mxu0 %v1566
        %1659 = vmatprep.subr.mxu0 0.0
        %1660 = vmatpush1.msra.mxu0 %v1567
        %1661 = vmatprep.subr.mxu0 0.0
        %1662 = vmatpush1.msra.mxu0 0.0
        %1663 = vmatprep.subr.mxu0 0.0
        %1664 = vmatpush1.msra.mxu0 0.0
        %1665 = vmatprep.subr.mxu0 0.0
        %1666 = vmatpush1.msra.mxu0 0.0
        %1667 = vmatprep.subr.mxu0 0.0
        %1668 = vmatpush1.msra.mxu0 0.0
        %1669 = vmatprep.subr.mxu0 0.0
        %1670 = vmatpush1.msra.mxu0 0.0
        %1671 = vmatprep.subr.mxu0 0.0
        %1672 = vmatpush1.msra.mxu0 0.0
        %1673 = vmatprep.subr.mxu0 0.0
        %1674 = vmatpush1.msra.mxu0 0.0
        %1675 = vmatprep.subr.mxu0 0.0
        %1676 = vmatpush1.msra.mxu0 0.0
        %1677 = vmatprep.subr.mxu0 0.0
        %1678 = vmatpush1.msra.mxu0 0.0
        %1679 = vmatprep.subr.mxu0 0.0
        %1680 = vmatpush1.msra.mxu0 0.0
        %1681 = vmatprep.subr.mxu0 0.0
        %1682 = vmatpush1.msra.mxu0 0.0
        %1683 = vmatprep.subr.mxu0 0.0
        %1684 = vmatpush1.msra.mxu0 0.0
        %1685 = vmatprep.subr.mxu0 0.0
        %1686 = vmatpush1.msra.mxu0 0.0
        %1687 = vmatprep.subr.mxu0 0.0
        %1688 = vmatpush1.msra.mxu0 0.0
        %1689 = vmatprep.subr.mxu0 0.0
        %1690 = vmatpush1.msra.mxu0 0.0
        %1691 = vmatprep.subr.mxu0 0.0
        %1692 = vmatpush1.msra.mxu0 0.0
        %1693 = vmatprep.subr.mxu0 0.0
        %1694 = vmatpush1.msra.mxu0 0.0
        %1695 = vmatprep.subr.mxu0 0.0
        %1696 = vmatpush1.msra.mxu0 0.0
        %1697 = vmatprep.subr.mxu0 0.0
        %1698 = vmatpush1.msra.mxu0 0.0
        %1699 = vmatprep.subr.mxu0 0.0
        %1700 = vmatpush1.msra.mxu0 0.0
        %1701 = vmatprep.subr.mxu0 0.0
        %1702 = vmatpush1.msra.mxu0 0.0
        %1703 = vmatprep.subr.mxu0 0.0
        %1704 = vmatpush1.msra.mxu0 0.0
        %1705 = vmatprep.subr.mxu0 0.0
        %1706 = vmatpush1.msra.mxu0 0.0
        %1707 = vmatprep.subr.mxu0 0.0
        %1708 = vmatpush1.msra.mxu0 0.0
        %1709 = vmatprep.subr.mxu0 0.0
        %1710 = vmatpush1.msra.mxu0 0.0
        %1711 = vmatprep.subr.mxu0 0.0
        %1712 = vmatpush1.msra.mxu0 0.0
        %1713 = vmatprep.subr.mxu0 0.0
        %1714 = vmatpush1.msra.mxu0 0.0
        %1715 = vmatprep.subr.mxu0 0.0
        %1716 = vmatpush1.msra.mxu0 0.0
        %1717 = vmatprep.subr.mxu0 0.0
        %1718 = vmatpush1.msra.mxu0 0.0
        %1719 = vmatprep.subr.mxu0 0.0
        %1720 = vmatpush1.msra.mxu0 0.0
        %1721 = vmatprep.mubr.f32.mxu0 0.0
        %1722 = vmatmul.mubr.f32.gmra.mrb[0].mxu0 %v1652
        %v1723 = vpop.f32.mrb[0].mxu0
        %v1724 = vadd.f32 0.0, %v1723
        %v1725 = vpop.f32.mrb[0].mxu0
        %1726 = vmatprep.mubr.f32.mxu0 0.0
        %1727 = vmatmul.mubr.f32.gmra.mrb[0].mxu0 %v1655
        %v1728 = vpop.f32.mrb[0].mxu0
        %v1729 = vadd.f32 0.0, %v1728
        %v1730 = vpop.f32.mrb[0].mxu0
        %1731 = vdwg.mxu0
        %v1733 = vsel %vm976, %v1077, 0
        %v1736 = vsel %vm976, %v1078, 0
        %1738 = vmatprep.subr.mxu0 0.0
        %1739 = vmatpush1.msra.mxu0 %v1568
        %1740 = vmatprep.subr.mxu0 0.0
        %1741 = vmatpush1.msra.mxu0 %v1569
        %1742 = vmatprep.subr.mxu0 0.0
        %1743 = vmatpush1.msra.mxu0 0.0
        %1744 = vmatprep.subr.mxu0 0.0
        %1745 = vmatpush1.msra.mxu0 0.0
        %1746 = vmatprep.subr.mxu0 0.0
        %1747 = vmatpush1.msra.mxu0 0.0
        %1748 = vmatprep.subr.mxu0 0.0
        %1749 = vmatpush1.msra.mxu0 0.0
        %1750 = vmatprep.subr.mxu0 0.0
        %1751 = vmatpush1.msra.mxu0 0.0
        %1752 = vmatprep.subr.mxu0 0.0
        %1753 = vmatpush1.msra.mxu0 0.0
        %1754 = vmatprep.subr.mxu0 0.0
        %1755 = vmatpush1.msra.mxu0 0.0
        %1756 = vmatprep.subr.mxu0 0.0
        %1757 = vmatpush1.msra.mxu0 0.0
        %1758 = vmatprep.subr.mxu0 0.0
        %1759 = vmatpush1.msra.mxu0 0.0
        %1760 = vmatprep.subr.mxu0 0.0
        %1761 = vmatpush1.msra.mxu0 0.0
        %1762 = vmatprep.subr.mxu0 0.0
        %1763 = vmatpush1.msra.mxu0 0.0
        %1764 = vmatprep.subr.mxu0 0.0
        %1765 = vmatpush1.msra.mxu0 0.0
        %1766 = vmatprep.subr.mxu0 0.0
        %1767 = vmatpush1.msra.mxu0 0.0
        %1768 = vmatprep.subr.mxu0 0.0
        %1769 = vmatpush1.msra.mxu0 0.0
        %1770 = vmatprep.subr.mxu0 0.0
        %1771 = vmatpush1.msra.mxu0 0.0
        %1772 = vmatprep.subr.mxu0 0.0
        %1773 = vmatpush1.msra.mxu0 0.0
        %1774 = vmatprep.subr.mxu0 0.0
        %1775 = vmatpush1.msra.mxu0 0.0
        %1776 = vmatprep.subr.mxu0 0.0
        %1777 = vmatpush1.msra.mxu0 0.0
        %1778 = vmatprep.subr.mxu0 0.0
        %1779 = vmatpush1.msra.mxu0 0.0
        %1780 = vmatprep.subr.mxu0 0.0
        %1781 = vmatpush1.msra.mxu0 0.0
        %1782 = vmatprep.subr.mxu0 0.0
        %1783 = vmatpush1.msra.mxu0 0.0
        %1784 = vmatprep.subr.mxu0 0.0
        %1785 = vmatpush1.msra.mxu0 0.0
        %1786 = vmatprep.subr.mxu0 0.0
        %1787 = vmatpush1.msra.mxu0 0.0
        %1788 = vmatprep.subr.mxu0 0.0
        %1789 = vmatpush1.msra.mxu0 0.0
        %1790 = vmatprep.subr.mxu0 0.0
        %1791 = vmatpush1.msra.mxu0 0.0
        %1792 = vmatprep.subr.mxu0 0.0
        %1793 = vmatpush1.msra.mxu0 0.0
        %1794 = vmatprep.subr.mxu0 0.0
        %1795 = vmatpush1.msra.mxu0 0.0
        %1796 = vmatprep.subr.mxu0 0.0
        %1797 = vmatpush1.msra.mxu0 0.0
        %1798 = vmatprep.subr.mxu0 0.0
        %1799 = vmatpush1.msra.mxu0 0.0
        %1800 = vmatprep.subr.mxu0 0.0
        %1801 = vmatpush1.msra.mxu0 0.0
        %1802 = vmatprep.mubr.f32.mxu0 0.0
        %1803 = vmatmul.mubr.f32.gmra.mrb[0].mxu0 %v1733
        %v1804 = vpop.f32.mrb[0].mxu0
        %v1805 = vadd.f32 0.0, %v1804
        %v1806 = vpop.f32.mrb[0].mxu0
        %1807 = vmatprep.mubr.f32.mxu0 0.0
        %1808 = vmatmul.mubr.f32.gmra.mrb[0].mxu0 %v1736
        %v1809 = vpop.f32.mrb[0].mxu0
        %v1810 = vadd.f32 0.0, %v1809
        %v1811 = vpop.f32.mrb[0].mxu0
        %1812 = vdwg.mxu0
        %v1813 = vsub.f32 %v1643, %v1724
        %v1814 = vsub.f32 %v1648, %v1729
        %v1815 = vsub.f32 %v1805, %v1643
        %v1816 = vsub.f32 %v1810, %v1648
        %v1817 = vsub.f32 %v1815, %v1724
        %v1818 = vsub.f32 %v1816, %v1729
        %s1819 = ssub.f32 1.0, %s886
        %v1820 = vld [vmem:[%s779] sm:$0xff]
        %v1821 = vld [vmem:[%s779 + $0x8] sm:$0xff]
        %v1822 = vstv %s1819
        %v1823 = vmul.f32 %v1822, %v1820
        %v1824 = vmul.f32 %v1822, %v1821
        %v1825 = vld [vmem:[%s761] sm:$0xff]
        %v1826 = vld [vmem:[%s761 + $0x8] sm:$0xff]
        %v1827 = vsub.f32 %v1825, %v1813
        %v1828 = vsub.f32 %v1826, %v1814
        %v1829 = vmul.f32 %v1823, %v1827
        %v1830 = vmul.f32 %v1824, %v1828
        %v1831 = vadd.f32 %v1813, %v1829
        %v1832 = vadd.f32 %v1814, %v1830
        %v1833 = vld [vmem:[%s770] sm:$0xff]
        %v1834 = vld [vmem:[%s770 + $0x8] sm:$0xff]
        %v1835 = vsub.f32 %v1833, %v1817
        %v1836 = vsub.f32 %v1834, %v1818
        %v1837 = vmul.f32 %v1823, %v1835
        %v1838 = vmul.f32 %v1824, %v1836
        %v1839 = vadd.f32 %v1817, %v1837
        %v1840 = vadd.f32 %v1818, %v1838
        %v1841 = vadd.f32 %v1831, %v1839
        %v1842 = vadd.f32 %v1832, %v1840
        %1843 = vmatprep.subr.mxu0 0.0
        %1844 = vmatpush1.msra.mxu0 %v1831
        %1845 = vmatprep.subr.mxu0 0.0
        %1846 = vmatpush1.msra.mxu0 %v1832
        %1847 = vmatprep.subr.mxu0 0.0
        %1848 = vmatpush1.msra.mxu0 0.0
        %1849 = vmatprep.subr.mxu0 0.0
        %1850 = vmatpush1.msra.mxu0 0.0
        %1851 = vmatprep.subr.mxu0 0.0
        %1852 = vmatpush1.msra.mxu0 0.0
        %1853 = vmatprep.subr.mxu0 0.0
        %1854 = vmatpush1.msra.mxu0 0.0
        %1855 = vmatprep.subr.mxu0 0.0
        %1856 = vmatpush1.msra.mxu0 0.0
        %1857 = vmatprep.subr.mxu0 0.0
        %1858 = vmatpush1.msra.mxu0 0.0
        %1859 = vmatprep.subr.mxu0 0.0
        %1860 = vmatpush1.msra.mxu0 0.0
        %1861 = vmatprep.subr.mxu0 0.0
        %1862 = vmatpush1.msra.mxu0 0.0
        %1863 = vmatprep.subr.mxu0 0.0
        %1864 = vmatpush1.msra.mxu0 0.0
        %1865 = vmatprep.subr.mxu0 0.0
        %1866 = vmatpush1.msra.mxu0 0.0
        %1867 = vmatprep.subr.mxu0 0.0
        %1868 = vmatpush1.msra.mxu0 0.0
        %1869 = vmatprep.subr.mxu0 0.0
        %1870 = vmatpush1.msra.mxu0 0.0
        %1871 = vmatprep.subr.mxu0 0.0
        %1872 = vmatpush1.msra.mxu0 0.0
        %1873 = vmatprep.subr.mxu0 0.0
        %1874 = vmatpush1.msra.mxu0 0.0
        %1875 = vmatprep.subr.mxu0 0.0
        %1876 = vmatpush1.msra.mxu0 0.0
        %1877 = vmatprep.subr.mxu0 0.0
        %1878 = vmatpush1.msra.mxu0 0.0
        %1879 = vmatprep.subr.mxu0 0.0
        %1880 = vmatpush1.msra.mxu0 0.0
        %1881 = vmatprep.subr.mxu0 0.0
        %1882 = vmatpush1.msra.mxu0 0.0
        %1883 = vmatprep.subr.mxu0 0.0
        %1884 = vmatpush1.msra.mxu0 0.0
        %1885 = vmatprep.subr.mxu0 0.0
        %1886 = vmatpush1.msra.mxu0 0.0
        %1887 = vmatprep.subr.mxu0 0.0
        %1888 = vmatpush1.msra.mxu0 0.0
        %1889 = vmatprep.subr.mxu0 0.0
        %1890 = vmatpush1.msra.mxu0 0.0
        %1891 = vmatprep.subr.mxu0 0.0
        %1892 = vmatpush1.msra.mxu0 0.0
        %1893 = vmatprep.subr.mxu0 0.0
        %1894 = vmatpush1.msra.mxu0 0.0
        %1895 = vmatprep.subr.mxu0 0.0
        %1896 = vmatpush1.msra.mxu0 0.0
        %1897 = vmatprep.subr.mxu0 0.0
        %1898 = vmatpush1.msra.mxu0 0.0
        %1899 = vmatprep.subr.mxu0 0.0
        %1900 = vmatpush1.msra.mxu0 0.0
        %1901 = vmatprep.subr.mxu0 0.0
        %1902 = vmatpush1.msra.mxu0 0.0
        %1903 = vmatprep.subr.mxu0 0.0
        %1904 = vmatpush1.msra.mxu0 0.0
        %1905 = vmatprep.subr.mxu0 0.0
        %1906 = vmatpush1.msra.mxu0 0.0
        %1907 = vmatprep.mubr.f32.mxu0 0.0
        %1908 = vmatmul.mubr.f32.gmra.mrb[0].mxu0 %v1571
        %v1909 = vpop.f32.mrb[0].mxu0
        %v1910 = vadd.f32 0.0, %v1909
        %v1911 = vpop.f32.mrb[0].mxu0
        %1912 = vmatprep.mubr.f32.mxu0 0.0
        %1913 = vmatmul.mubr.f32.gmra.mrb[0].mxu0 %v1574
        %v1914 = vpop.f32.mrb[0].mxu0
        %v1915 = vadd.f32 0.0, %v1914
        %v1916 = vpop.f32.mrb[0].mxu0
        %1917 = vdwg.mxu0
        %1918 = vmatprep.subr.mxu0 0.0
        %1919 = vmatpush1.msra.mxu0 %v1839
        %1920 = vmatprep.subr.mxu0 0.0
        %1921 = vmatpush1.msra.mxu0 %v1840
        %1922 = vmatprep.subr.mxu0 0.0
        %1923 = vmatpush1.msra.mxu0 0.0
        %1924 = vmatprep.subr.mxu0 0.0
        %1925 = vmatpush1.msra.mxu0 0.0
        %1926 = vmatprep.subr.mxu0 0.0
        %1927 = vmatpush1.msra.mxu0 0.0
        %1928 = vmatprep.subr.mxu0 0.0
        %1929 = vmatpush1.msra.mxu0 0.0
        %1930 = vmatprep.subr.mxu0 0.0
        %1931 = vmatpush1.msra.mxu0 0.0
        %1932 = vmatprep.subr.mxu0 0.0
        %1933 = vmatpush1.msra.mxu0 0.0
        %1934 = vmatprep.subr.mxu0 0.0
        %1935 = vmatpush1.msra.mxu0 0.0
        %1936 = vmatprep.subr.mxu0 0.0
        %1937 = vmatpush1.msra.mxu0 0.0
        %1938 = vmatprep.subr.mxu0 0.0
        %1939 = vmatpush1.msra.mxu0 0.0
        %1940 = vmatprep.subr.mxu0 0.0
        %1941 = vmatpush1.msra.mxu0 0.0
        %1942 = vmatprep.subr.mxu0 0.0
        %1943 = vmatpush1.msra.mxu0 0.0
        %1944 = vmatprep.subr.mxu0 0.0
        %1945 = vmatpush1.msra.mxu0 0.0
        %1946 = vmatprep.subr.mxu0 0.0
        %1947 = vmatpush1.msra.mxu0 0.0
        %1948 = vmatprep.subr.mxu0 0.0
        %1949 = vmatpush1.msra.mxu0 0.0
        %1950 = vmatprep.subr.mxu0 0.0
        %1951 = vmatpush1.msra.mxu0 0.0
        %1952 = vmatprep.subr.mxu0 0.0
        %1953 = vmatpush1.msra.mxu0 0.0
        %1954 = vmatprep.subr.mxu0 0.0
        %1955 = vmatpush1.msra.mxu0 0.0
        %1956 = vmatprep.subr.mxu0 0.0
        %1957 = vmatpush1.msra.mxu0 0.0
        %1958 = vmatprep.subr.mxu0 0.0
        %1959 = vmatpush1.msra.mxu0 0.0
        %1960 = vmatprep.subr.mxu0 0.0
        %1961 = vmatpush1.msra.mxu0 0.0
        %1962 = vmatprep.subr.mxu0 0.0
        %1963 = vmatpush1.msra.mxu0 0.0
        %1964 = vmatprep.subr.mxu0 0.0
        %1965 = vmatpush1.msra.mxu0 0.0
        %1966 = vmatprep.subr.mxu0 0.0
        %1967 = vmatpush1.msra.mxu0 0.0
        %1968 = vmatprep.subr.mxu0 0.0
        %1969 = vmatpush1.msra.mxu0 0.0
        %1970 = vmatprep.subr.mxu0 0.0
        %1971 = vmatpush1.msra.mxu0 0.0
        %1972 = vmatprep.subr.mxu0 0.0
        %1973 = vmatpush1.msra.mxu0 0.0
        %1974 = vmatprep.subr.mxu0 0.0
        %1975 = vmatpush1.msra.mxu0 0.0
        %1976 = vmatprep.subr.mxu0 0.0
        %1977 = vmatpush1.msra.mxu0 0.0
        %1978 = vmatprep.subr.mxu0 0.0
        %1979 = vmatpush1.msra.mxu0 0.0
        %1980 = vmatprep.subr.mxu0 0.0
        %1981 = vmatpush1.msra.mxu0 0.0
        %1982 = vmatprep.mubr.f32.mxu0 0.0
        %1983 = vmatmul.mubr.f32.gmra.mrb[0].mxu0 %v1652
        %v1984 = vpop.f32.mrb[0].mxu0
        %v1985 = vadd.f32 0.0, %v1984
        %v1986 = vpop.f32.mrb[0].mxu0
        %1987 = vmatprep.mubr.f32.mxu0 0.0
        %1988 = vmatmul.mubr.f32.gmra.mrb[0].mxu0 %v1655
        %v1989 = vpop.f32.mrb[0].mxu0
        %v1990 = vadd.f32 0.0, %v1989
        %v1991 = vpop.f32.mrb[0].mxu0
        %1992 = vdwg.mxu0
        %v1994 = vsel %vm976, %v1079, 0
        %v1997 = vsel %vm976, %v1080, 0
        %1999 = vmatprep.subr.mxu0 0.0
        %2000 = vmatpush1.msra.mxu0 %v1841
        %2001 = vmatprep.subr.mxu0 0.0
        %2002 = vmatpush1.msra.mxu0 %v1842
        %2003 = vmatprep.subr.mxu0 0.0
        %2004 = vmatpush1.msra.mxu0 0.0
        %2005 = vmatprep.subr.mxu0 0.0
        %2006 = vmatpush1.msra.mxu0 0.0
        %2007 = vmatprep.subr.mxu0 0.0
        %2008 = vmatpush1.msra.mxu0 0.0
        %2009 = vmatprep.subr.mxu0 0.0
        %2010 = vmatpush1.msra.mxu0 0.0
        %2011 = vmatprep.subr.mxu0 0.0
        %2012 = vmatpush1.msra.mxu0 0.0
        %2013 = vmatprep.subr.mxu0 0.0
        %2014 = vmatpush1.msra.mxu0 0.0
        %2015 = vmatprep.subr.mxu0 0.0
        %2016 = vmatpush1.msra.mxu0 0.0
        %2017 = vmatprep.subr.mxu0 0.0
        %2018 = vmatpush1.msra.mxu0 0.0
        %2019 = vmatprep.subr.mxu0 0.0
        %2020 = vmatpush1.msra.mxu0 0.0
        %2021 = vmatprep.subr.mxu0 0.0
        %2022 = vmatpush1.msra.mxu0 0.0
        %2023 = vmatprep.subr.mxu0 0.0
        %2024 = vmatpush1.msra.mxu0 0.0
        %2025 = vmatprep.subr.mxu0 0.0
        %2026 = vmatpush1.msra.mxu0 0.0
        %2027 = vmatprep.subr.mxu0 0.0
        %2028 = vmatpush1.msra.mxu0 0.0
        %2029 = vmatprep.subr.mxu0 0.0
        %2030 = vmatpush1.msra.mxu0 0.0
        %2031 = vmatprep.subr.mxu0 0.0
        %2032 = vmatpush1.msra.mxu0 0.0
        %2033 = vmatprep.subr.mxu0 0.0
        %2034 = vmatpush1.msra.mxu0 0.0
        %2035 = vmatprep.subr.mxu0 0.0
        %2036 = vmatpush1.msra.mxu0 0.0
        %2037 = vmatprep.subr.mxu0 0.0
        %2038 = vmatpush1.msra.mxu0 0.0
        %2039 = vmatprep.subr.mxu0 0.0
        %2040 = vmatpush1.msra.mxu0 0.0
        %2041 = vmatprep.subr.mxu0 0.0
        %2042 = vmatpush1.msra.mxu0 0.0
        %2043 = vmatprep.subr.mxu0 0.0
        %2044 = vmatpush1.msra.mxu0 0.0
        %2045 = vmatprep.subr.mxu0 0.0
        %2046 = vmatpush1.msra.mxu0 0.0
        %2047 = vmatprep.subr.mxu0 0.0
        %2048 = vmatpush1.msra.mxu0 0.0
        %2049 = vmatprep.subr.mxu0 0.0
        %2050 = vmatpush1.msra.mxu0 0.0
        %2051 = vmatprep.subr.mxu0 0.0
        %2052 = vmatpush1.msra.mxu0 0.0
        %2053 = vmatprep.subr.mxu0 0.0
        %2054 = vmatpush1.msra.mxu0 0.0
        %2055 = vmatprep.subr.mxu0 0.0
        %2056 = vmatpush1.msra.mxu0 0.0
        %2057 = vmatprep.subr.mxu0 0.0
        %2058 = vmatpush1.msra.mxu0 0.0
        %2059 = vmatprep.subr.mxu0 0.0
        %2060 = vmatpush1.msra.mxu0 0.0
        %2061 = vmatprep.subr.mxu0 0.0
        %2062 = vmatpush1.msra.mxu0 0.0
        %2063 = vmatprep.mubr.f32.mxu0 0.0
        %2064 = vmatmul.mubr.f32.gmra.mrb[0].mxu0 %v1994
        %v2065 = vpop.f32.mrb[0].mxu0
        %v2066 = vadd.f32 0.0, %v2065
        %v2067 = vpop.f32.mrb[0].mxu0
        %2068 = vmatprep.mubr.f32.mxu0 0.0
        %2069 = vmatmul.mubr.f32.gmra.mrb[0].mxu0 %v1997
        %v2070 = vpop.f32.mrb[0].mxu0
        %v2071 = vadd.f32 0.0, %v2070
        %v2072 = vpop.f32.mrb[0].mxu0
        %2073 = vdwg.mxu0
        %v2074 = vadd.f32 %v1910, %v1985
        %v2075 = vadd.f32 %v1915, %v1990
        %v2076 = vsub.f32 %v2066, %v1910
        %v2077 = vsub.f32 %v2071, %v1915
        %v2078 = vadd.f32 %v2076, %v1985
        %v2079 = vadd.f32 %v2077, %v1990
        %2082 = vrot.lane.b32.xlu0 %v2074, 112
        %v2083 = vpop.permute.xlu0 %2082
        %2084 = vrot.lane.b32.xlu0 %v2075, 112
        %v2085 = vpop.permute.xlu0 %2084
        %2088 = vrot.lane.b32.xlu0 %v2074, 96
        %v2089 = vpop.permute.xlu0 %2088
        %2090 = vrot.lane.b32.xlu0 %v2075, 96
        %v2091 = vpop.permute.xlu0 %2090
        %2094 = vrot.lane.b32.xlu0 %v2074, 80
        %v2095 = vpop.permute.xlu0 %2094
        %2096 = vrot.lane.b32.xlu0 %v2075, 80
        %v2097 = vpop.permute.xlu0 %2096
        %2102 = vrot.lane.b32.xlu0 %v2078, 112
        %v2103 = vpop.permute.xlu0 %2102
        %2104 = vrot.lane.b32.xlu0 %v2079, 112
        %v2105 = vpop.permute.xlu0 %2104
        %2108 = vrot.lane.b32.xlu0 %v2078, 96
        %v2109 = vpop.permute.xlu0 %2108
        %2110 = vrot.lane.b32.xlu0 %v2079, 96
        %v2111 = vpop.permute.xlu0 %2110
        %2114 = vrot.lane.b32.xlu0 %v2078, 80
        %v2115 = vpop.permute.xlu0 %2114
        %2116 = vrot.lane.b32.xlu0 %v2079, 80
        %v2117 = vpop.permute.xlu0 %2116
        %v2120 = vsub.f32 %v2078, %v2074
        %v2121 = vsub.f32 %v2079, %v2075
        %v2122 = vsub.f32 %v2103, %v2083
        %v2123 = vsub.f32 %v2105, %v2085
        %v2124 = vsub.f32 %v2109, %v2089
        %v2125 = vsub.f32 %v2111, %v2091
        %v2126 = vsub.f32 %v2115, %v2095
        %v2127 = vsub.f32 %v2117, %v2097
        %v2128 = vsel %vm976, %v2074, 0
        %v2130 = vsel %vm976, %v2075, 0
        %v2132 = vsel %vm976, %v2083, 0
        %v2134 = vsel %vm976, %v2085, 0
        %v2136 = vsel %vm976, %v2089, 0
        %v2138 = vsel %vm976, %v2091, 0
        %v2140 = vsel %vm976, %v2095, 0
        %v2142 = vsel %vm976, %v2097, 0
        %2144 = vmatprep.subr.mxu0 0.0
        %2145 = vmatpush1.msra.mxu0 %v1081
        %2146 = vmatprep.subr.mxu0 0.0
        %2147 = vmatpush1.msra.mxu0 %v1082
        %2148 = vmatprep.subr.mxu0 0.0
        %2149 = vmatpush1.msra.mxu0 0.0
        %2150 = vmatprep.subr.mxu0 0.0
        %2151 = vmatpush1.msra.mxu0 0.0
        %2152 = vmatprep.subr.mxu0 0.0
        %2153 = vmatpush1.msra.mxu0 0.0
        %2154 = vmatprep.subr.mxu0 0.0
        %2155 = vmatpush1.msra.mxu0 0.0
        %2156 = vmatprep.subr.mxu0 0.0
        %2157 = vmatpush1.msra.mxu0 0.0
        %2158 = vmatprep.subr.mxu0 0.0
        %2159 = vmatpush1.msra.mxu0 0.0
        %2160 = vmatprep.subr.mxu0 0.0
        %2161 = vmatpush1.msra.mxu0 0.0
        %2162 = vmatprep.subr.mxu0 0.0
        %2163 = vmatpush1.msra.mxu0 0.0
        %2164 = vmatprep.subr.mxu0 0.0
        %2165 = vmatpush1.msra.mxu0 0.0
        %2166 = vmatprep.subr.mxu0 0.0
        %2167 = vmatpush1.msra.mxu0 0.0
        %2168 = vmatprep.subr.mxu0 0.0
        %2169 = vmatpush1.msra.mxu0 0.0
        %2170 = vmatprep.subr.mxu0 0.0
        %2171 = vmatpush1.msra.mxu0 0.0
        %2172 = vmatprep.subr.mxu0 0.0
        %2173 = vmatpush1.msra.mxu0 0.0
        %2174 = vmatprep.subr.mxu0 0.0
        %2175 = vmatpush1.msra.mxu0 0.0
        %2176 = vmatprep.subr.mxu0 0.0
        %2177 = vmatpush1.msra.mxu0 0.0
        %2178 = vmatprep.subr.mxu0 0.0
        %2179 = vmatpush1.msra.mxu0 0.0
        %2180 = vmatprep.subr.mxu0 0.0
        %2181 = vmatpush1.msra.mxu0 0.0
        %2182 = vmatprep.subr.mxu0 0.0
        %2183 = vmatpush1.msra.mxu0 0.0
        %2184 = vmatprep.subr.mxu0 0.0
        %2185 = vmatpush1.msra.mxu0 0.0
        %2186 = vmatprep.subr.mxu0 0.0
        %2187 = vmatpush1.msra.mxu0 0.0
        %2188 = vmatprep.subr.mxu0 0.0
        %2189 = vmatpush1.msra.mxu0 0.0
        %2190 = vmatprep.subr.mxu0 0.0
        %2191 = vmatpush1.msra.mxu0 0.0
        %2192 = vmatprep.subr.mxu0 0.0
        %2193 = vmatpush1.msra.mxu0 0.0
        %2194 = vmatprep.subr.mxu0 0.0
        %2195 = vmatpush1.msra.mxu0 0.0
        %2196 = vmatprep.subr.mxu0 0.0
        %2197 = vmatpush1.msra.mxu0 0.0
        %2198 = vmatprep.subr.mxu0 0.0
        %2199 = vmatpush1.msra.mxu0 0.0
        %2200 = vmatprep.subr.mxu0 0.0
        %2201 = vmatpush1.msra.mxu0 0.0
        %2202 = vmatprep.subr.mxu0 0.0
        %2203 = vmatpush1.msra.mxu0 0.0
        %2204 = vmatprep.subr.mxu0 0.0
        %2205 = vmatpush1.msra.mxu0 0.0
        %2206 = vmatprep.subr.mxu0 0.0
        %2207 = vmatpush1.msra.mxu0 0.0
        %2208 = vmatprep.mubr.f32.mxu0 0.0
        %2209 = vmatmul.mubr.f32.gmra.mrb[0].mxu0 %v2128
        %v2210 = vpop.f32.mrb[0].mxu0
        %v2211 = vadd.f32 0.0, %v2210
        %v2212 = vpop.f32.mrb[0].mxu0
        %2213 = vmatprep.mubr.f32.mxu0 0.0
        %2214 = vmatmul.mubr.f32.gmra.mrb[0].mxu0 %v2130
        %v2215 = vpop.f32.mrb[0].mxu0
        %v2216 = vadd.f32 0.0, %v2215
        %v2217 = vpop.f32.mrb[0].mxu0
        %2218 = vmatprep.mubr.f32.mxu0 0.0
        %2219 = vmatmul.mubr.f32.gmra.mrb[0].mxu0 %v2132
        %v2220 = vpop.f32.mrb[0].mxu0
        %v2221 = vadd.f32 0.0, %v2220
        %v2222 = vpop.f32.mrb[0].mxu0
        %2223 = vmatprep.mubr.f32.mxu0 0.0
        %2224 = vmatmul.mubr.f32.gmra.mrb[0].mxu0 %v2134
        %v2225 = vpop.f32.mrb[0].mxu0
        %v2226 = vadd.f32 0.0, %v2225
        %v2227 = vpop.f32.mrb[0].mxu0
        %2228 = vmatprep.mubr.f32.mxu0 0.0
        %2229 = vmatmul.mubr.f32.gmra.mrb[0].mxu0 %v2136
        %v2230 = vpop.f32.mrb[0].mxu0
        %v2231 = vadd.f32 0.0, %v2230
        %v2232 = vpop.f32.mrb[0].mxu0
        %2233 = vmatprep.mubr.f32.mxu0 0.0
        %2234 = vmatmul.mubr.f32.gmra.mrb[0].mxu0 %v2138
        %v2235 = vpop.f32.mrb[0].mxu0
        %v2236 = vadd.f32 0.0, %v2235
        %v2237 = vpop.f32.mrb[0].mxu0
        %2238 = vmatprep.mubr.f32.mxu0 0.0
        %2239 = vmatmul.mubr.f32.gmra.mrb[0].mxu0 %v2140
        %v2240 = vpop.f32.mrb[0].mxu0
        %v2241 = vadd.f32 0.0, %v2240
        %v2242 = vpop.f32.mrb[0].mxu0
        %2243 = vmatprep.mubr.f32.mxu0 0.0
        %2244 = vmatmul.mubr.f32.gmra.mrb[0].mxu0 %v2142
        %v2245 = vpop.f32.mrb[0].mxu0
        %v2246 = vadd.f32 0.0, %v2245
        %v2247 = vpop.f32.mrb[0].mxu0
        %2248 = vdwg.mxu0
        %v2249 = vsel %vm976, %v2078, 0
        %v2251 = vsel %vm976, %v2079, 0
        %v2253 = vsel %vm976, %v2103, 0
        %v2255 = vsel %vm976, %v2105, 0
        %v2257 = vsel %vm976, %v2109, 0
        %v2259 = vsel %vm976, %v2111, 0
        %v2261 = vsel %vm976, %v2115, 0
        %v2263 = vsel %vm976, %v2117, 0
        %2265 = vmatprep.subr.mxu0 0.0
        %2266 = vmatpush1.msra.mxu0 %v1083
        %2267 = vmatprep.subr.mxu0 0.0
        %2268 = vmatpush1.msra.mxu0 %v1084
        %2269 = vmatprep.subr.mxu0 0.0
        %2270 = vmatpush1.msra.mxu0 0.0
        %2271 = vmatprep.subr.mxu0 0.0
        %2272 = vmatpush1.msra.mxu0 0.0
        %2273 = vmatprep.subr.mxu0 0.0
        %2274 = vmatpush1.msra.mxu0 0.0
        %2275 = vmatprep.subr.mxu0 0.0
        %2276 = vmatpush1.msra.mxu0 0.0
        %2277 = vmatprep.subr.mxu0 0.0
        %2278 = vmatpush1.msra.mxu0 0.0
        %2279 = vmatprep.subr.mxu0 0.0
        %2280 = vmatpush1.msra.mxu0 0.0
        %2281 = vmatprep.subr.mxu0 0.0
        %2282 = vmatpush1.msra.mxu0 0.0
        %2283 = vmatprep.subr.mxu0 0.0
        %2284 = vmatpush1.msra.mxu0 0.0
        %2285 = vmatprep.subr.mxu0 0.0
        %2286 = vmatpush1.msra.mxu0 0.0
        %2287 = vmatprep.subr.mxu0 0.0
        %2288 = vmatpush1.msra.mxu0 0.0
        %2289 = vmatprep.subr.mxu0 0.0
        %2290 = vmatpush1.msra.mxu0 0.0
        %2291 = vmatprep.subr.mxu0 0.0
        %2292 = vmatpush1.msra.mxu0 0.0
        %2293 = vmatprep.subr.mxu0 0.0
        %2294 = vmatpush1.msra.mxu0 0.0
        %2295 = vmatprep.subr.mxu0 0.0
        %2296 = vmatpush1.msra.mxu0 0.0
        %2297 = vmatprep.subr.mxu0 0.0
        %2298 = vmatpush1.msra.mxu0 0.0
        %2299 = vmatprep.subr.mxu0 0.0
        %2300 = vmatpush1.msra.mxu0 0.0
        %2301 = vmatprep.subr.mxu0 0.0
        %2302 = vmatpush1.msra.mxu0 0.0
        %2303 = vmatprep.subr.mxu0 0.0
        %2304 = vmatpush1.msra.mxu0 0.0
        %2305 = vmatprep.subr.mxu0 0.0
        %2306 = vmatpush1.msra.mxu0 0.0
        %2307 = vmatprep.subr.mxu0 0.0
        %2308 = vmatpush1.msra.mxu0 0.0
        %2309 = vmatprep.subr.mxu0 0.0
        %2310 = vmatpush1.msra.mxu0 0.0
        %2311 = vmatprep.subr.mxu0 0.0
        %2312 = vmatpush1.msra.mxu0 0.0
        %2313 = vmatprep.subr.mxu0 0.0
        %2314 = vmatpush1.msra.mxu0 0.0
        %2315 = vmatprep.subr.mxu0 0.0
        %2316 = vmatpush1.msra.mxu0 0.0
        %2317 = vmatprep.subr.mxu0 0.0
        %2318 = vmatpush1.msra.mxu0 0.0
        %2319 = vmatprep.subr.mxu0 0.0
        %2320 = vmatpush1.msra.mxu0 0.0
        %2321 = vmatprep.subr.mxu0 0.0
        %2322 = vmatpush1.msra.mxu0 0.0
        %2323 = vmatprep.subr.mxu0 0.0
        %2324 = vmatpush1.msra.mxu0 0.0
        %2325 = vmatprep.subr.mxu0 0.0
        %2326 = vmatpush1.msra.mxu0 0.0
        %2327 = vmatprep.subr.mxu0 0.0
        %2328 = vmatpush1.msra.mxu0 0.0
        %2329 = vmatprep.mubr.f32.mxu0 0.0
        %2330 = vmatmul.mubr.f32.gmra.mrb[0].mxu0 %v2249
        %v2331 = vpop.f32.mrb[0].mxu0
        %v2332 = vadd.f32 0.0, %v2331
        %v2333 = vpop.f32.mrb[0].mxu0
        %2334 = vmatprep.mubr.f32.mxu0 0.0
        %2335 = vmatmul.mubr.f32.gmra.mrb[0].mxu0 %v2251
        %v2336 = vpop.f32.mrb[0].mxu0
        %v2337 = vadd.f32 0.0, %v2336
        %v2338 = vpop.f32.mrb[0].mxu0
        %2339 = vmatprep.mubr.f32.mxu0 0.0
        %2340 = vmatmul.mubr.f32.gmra.mrb[0].mxu0 %v2253
        %v2341 = vpop.f32.mrb[0].mxu0
        %v2342 = vadd.f32 0.0, %v2341
        %v2343 = vpop.f32.mrb[0].mxu0
        %2344 = vmatprep.mubr.f32.mxu0 0.0
        %2345 = vmatmul.mubr.f32.gmra.mrb[0].mxu0 %v2255
        %v2346 = vpop.f32.mrb[0].mxu0
        %v2347 = vadd.f32 0.0, %v2346
        %v2348 = vpop.f32.mrb[0].mxu0
        %2349 = vmatprep.mubr.f32.mxu0 0.0
        %2350 = vmatmul.mubr.f32.gmra.mrb[0].mxu0 %v2257
        %v2351 = vpop.f32.mrb[0].mxu0
        %v2352 = vadd.f32 0.0, %v2351
        %v2353 = vpop.f32.mrb[0].mxu0
        %2354 = vmatprep.mubr.f32.mxu0 0.0
        %2355 = vmatmul.mubr.f32.gmra.mrb[0].mxu0 %v2259
        %v2356 = vpop.f32.mrb[0].mxu0
        %v2357 = vadd.f32 0.0, %v2356
        %v2358 = vpop.f32.mrb[0].mxu0
        %2359 = vmatprep.mubr.f32.mxu0 0.0
        %2360 = vmatmul.mubr.f32.gmra.mrb[0].mxu0 %v2261
        %v2361 = vpop.f32.mrb[0].mxu0
        %v2362 = vadd.f32 0.0, %v2361
        %v2363 = vpop.f32.mrb[0].mxu0
        %2364 = vmatprep.mubr.f32.mxu0 0.0
        %2365 = vmatmul.mubr.f32.gmra.mrb[0].mxu0 %v2263
        %v2366 = vpop.f32.mrb[0].mxu0
        %v2367 = vadd.f32 0.0, %v2366
        %v2368 = vpop.f32.mrb[0].mxu0
        %2369 = vdwg.mxu0
        %v2370 = vadd.f32 %v2211, %v2332
        %v2371 = vadd.f32 %v2216, %v2337
        %v2372 = vadd.f32 %v2221, %v2342
        %v2373 = vadd.f32 %v2226, %v2347
        %v2374 = vadd.f32 %v2231, %v2352
        %v2375 = vadd.f32 %v2236, %v2357
        %v2376 = vadd.f32 %v2241, %v2362
        %v2377 = vadd.f32 %v2246, %v2367
        %v2379 = vsel %vm976, %v2120, 0
        %v2382 = vsel %vm976, %v2121, 0
        %v2385 = vsel %vm976, %v2122, 0
        %v2388 = vsel %vm976, %v2123, 0
        %v2391 = vsel %vm976, %v2124, 0
        %v2394 = vsel %vm976, %v2125, 0
        %v2397 = vsel %vm976, %v2126, 0
        %v2400 = vsel %vm976, %v2127, 0
        %2402 = vmatprep.subr.mxu0 0.0
        %2403 = vmatpush1.msra.mxu0 %v1085
        %2404 = vmatprep.subr.mxu0 0.0
        %2405 = vmatpush1.msra.mxu0 %v1086
        %2406 = vmatprep.subr.mxu0 0.0
        %2407 = vmatpush1.msra.mxu0 0.0
        %2408 = vmatprep.subr.mxu0 0.0
        %2409 = vmatpush1.msra.mxu0 0.0
        %2410 = vmatprep.subr.mxu0 0.0
        %2411 = vmatpush1.msra.mxu0 0.0
        %2412 = vmatprep.subr.mxu0 0.0
        %2413 = vmatpush1.msra.mxu0 0.0
        %2414 = vmatprep.subr.mxu0 0.0
        %2415 = vmatpush1.msra.mxu0 0.0
        %2416 = vmatprep.subr.mxu0 0.0
        %2417 = vmatpush1.msra.mxu0 0.0
        %2418 = vmatprep.subr.mxu0 0.0
        %2419 = vmatpush1.msra.mxu0 0.0
        %2420 = vmatprep.subr.mxu0 0.0
        %2421 = vmatpush1.msra.mxu0 0.0
        %2422 = vmatprep.subr.mxu0 0.0
        %2423 = vmatpush1.msra.mxu0 0.0
        %2424 = vmatprep.subr.mxu0 0.0
        %2425 = vmatpush1.msra.mxu0 0.0
        %2426 = vmatprep.subr.mxu0 0.0
        %2427 = vmatpush1.msra.mxu0 0.0
        %2428 = vmatprep.subr.mxu0 0.0
        %2429 = vmatpush1.msra.mxu0 0.0
        %2430 = vmatprep.subr.mxu0 0.0
        %2431 = vmatpush1.msra.mxu0 0.0
        %2432 = vmatprep.subr.mxu0 0.0
        %2433 = vmatpush1.msra.mxu0 0.0
        %2434 = vmatprep.subr.mxu0 0.0
        %2435 = vmatpush1.msra.mxu0 0.0
        %2436 = vmatprep.subr.mxu0 0.0
        %2437 = vmatpush1.msra.mxu0 0.0
        %2438 = vmatprep.subr.mxu0 0.0
        %2439 = vmatpush1.msra.mxu0 0.0
        %2440 = vmatprep.subr.mxu0 0.0
        %2441 = vmatpush1.msra.mxu0 0.0
        %2442 = vmatprep.subr.mxu0 0.0
        %2443 = vmatpush1.msra.mxu0 0.0
        %2444 = vmatprep.subr.mxu0 0.0
        %2445 = vmatpush1.msra.mxu0 0.0
        %2446 = vmatprep.subr.mxu0 0.0
        %2447 = vmatpush1.msra.mxu0 0.0
        %2448 = vmatprep.subr.mxu0 0.0
        %2449 = vmatpush1.msra.mxu0 0.0
        %2450 = vmatprep.subr.mxu0 0.0
        %2451 = vmatpush1.msra.mxu0 0.0
        %2452 = vmatprep.subr.mxu0 0.0
        %2453 = vmatpush1.msra.mxu0 0.0
        %2454 = vmatprep.subr.mxu0 0.0
        %2455 = vmatpush1.msra.mxu0 0.0
        %2456 = vmatprep.subr.mxu0 0.0
        %2457 = vmatpush1.msra.mxu0 0.0
        %2458 = vmatprep.subr.mxu0 0.0
        %2459 = vmatpush1.msra.mxu0 0.0
        %2460 = vmatprep.subr.mxu0 0.0
        %2461 = vmatpush1.msra.mxu0 0.0
        %2462 = vmatprep.subr.mxu0 0.0
        %2463 = vmatpush1.msra.mxu0 0.0
        %2464 = vmatprep.subr.mxu0 0.0
        %2465 = vmatpush1.msra.mxu0 0.0
        %2466 = vmatprep.mubr.f32.mxu0 0.0
        %2467 = vmatmul.mubr.f32.gmra.mrb[0].mxu0 %v2379
        %v2468 = vpop.f32.mrb[0].mxu0
        %v2469 = vadd.f32 %v2211, %v2468
        %v2470 = vpop.f32.mrb[0].mxu0
        %2471 = vmatprep.mubr.f32.mxu0 0.0
        %2472 = vmatmul.mubr.f32.gmra.mrb[0].mxu0 %v2382
        %v2473 = vpop.f32.mrb[0].mxu0
        %v2474 = vadd.f32 %v2216, %v2473
        %v2475 = vpop.f32.mrb[0].mxu0
        %2476 = vmatprep.mubr.f32.mxu0 0.0
        %2477 = vmatmul.mubr.f32.gmra.mrb[0].mxu0 %v2385
        %v2478 = vpop.f32.mrb[0].mxu0
        %v2479 = vadd.f32 %v2221, %v2478
        %v2480 = vpop.f32.mrb[0].mxu0
        %2481 = vmatprep.mubr.f32.mxu0 0.0
        %2482 = vmatmul.mubr.f32.gmra.mrb[0].mxu0 %v2388
        %v2483 = vpop.f32.mrb[0].mxu0
        %v2484 = vadd.f32 %v2226, %v2483
        %v2485 = vpop.f32.mrb[0].mxu0
        %2486 = vmatprep.mubr.f32.mxu0 0.0
        %2487 = vmatmul.mubr.f32.gmra.mrb[0].mxu0 %v2391
        %v2488 = vpop.f32.mrb[0].mxu0
        %v2489 = vadd.f32 %v2231, %v2488
        %v2490 = vpop.f32.mrb[0].mxu0
        %2491 = vmatprep.mubr.f32.mxu0 0.0
        %2492 = vmatmul.mubr.f32.gmra.mrb[0].mxu0 %v2394
        %v2493 = vpop.f32.mrb[0].mxu0
        %v2494 = vadd.f32 %v2236, %v2493
        %v2495 = vpop.f32.mrb[0].mxu0
        %2496 = vmatprep.mubr.f32.mxu0 0.0
        %2497 = vmatmul.mubr.f32.gmra.mrb[0].mxu0 %v2397
        %v2498 = vpop.f32.mrb[0].mxu0
        %v2499 = vadd.f32 %v2241, %v2498
        %v2500 = vpop.f32.mrb[0].mxu0
        %2501 = vmatprep.mubr.f32.mxu0 0.0
        %2502 = vmatmul.mubr.f32.gmra.mrb[0].mxu0 %v2400
        %v2503 = vpop.f32.mrb[0].mxu0
        %v2504 = vadd.f32 %v2246, %v2503
        %v2505 = vpop.f32.mrb[0].mxu0
        %2506 = vdwg.mxu0
        %v2507 = vsub.f32 %v2469, %v2332
        %v2508 = vsub.f32 %v2474, %v2337
        %v2509 = vsub.f32 %v2479, %v2342
        %v2510 = vsub.f32 %v2484, %v2347
        %v2511 = vsub.f32 %v2489, %v2352
        %v2512 = vsub.f32 %v2494, %v2357
        %v2513 = vsub.f32 %v2499, %v2362
        %v2514 = vsub.f32 %v2504, %v2367
        %v2515 = vmul.f32 %v896, %v2370
        %v2516 = vmul.f32 %v897, %v2371
        %v2517 = vmul.f32 %v898, %v2370
        %v2518 = vmul.f32 %v899, %v2371
        %v2519 = vmul.f32 %v900, %v2372
        %v2520 = vmul.f32 %v901, %v2373
        %v2521 = vmul.f32 %v902, %v2372
        %v2522 = vmul.f32 %v903, %v2373
        %v2523 = vmul.f32 %v904, %v2374
        %v2524 = vmul.f32 %v905, %v2375
        %v2525 = vmul.f32 %v906, %v2374
        %v2526 = vmul.f32 %v907, %v2375
        %v2527 = vmul.f32 %v908, %v2376
        %v2528 = vmul.f32 %v909, %v2377
        %v2529 = vmul.f32 %v910, %v2376
        %v2530 = vmul.f32 %v911, %v2377
        %v2531 = vmul.f32 %v912, %v2507
        %v2532 = vmul.f32 %v913, %v2508
        %v2533 = vmul.f32 %v914, %v2507
        %v2534 = vmul.f32 %v915, %v2508
        %v2535 = vmul.f32 %v916, %v2509
        %v2536 = vmul.f32 %v917, %v2510
        %v2537 = vmul.f32 %v918, %v2509
        %v2538 = vmul.f32 %v919, %v2510
        %v2539 = vmul.f32 %v920, %v2511
        %v2540 = vmul.f32 %v921, %v2512
        %v2541 = vmul.f32 %v922, %v2511
        %v2542 = vmul.f32 %v923, %v2512
        %v2543 = vmul.f32 %v924, %v2513
        %v2544 = vmul.f32 %v925, %v2514
        %v2545 = vmul.f32 %v926, %v2513
        %v2546 = vmul.f32 %v927, %v2514
        %v2547 = vadd.f32 %v2515, %v2531
        %v2548 = vadd.f32 %v2516, %v2532
        %v2549 = vadd.f32 %v2517, %v2533
        %v2550 = vadd.f32 %v2518, %v2534
        %v2551 = vadd.f32 %v2519, %v2535
        %v2552 = vadd.f32 %v2520, %v2536
        %v2553 = vadd.f32 %v2521, %v2537
        %v2554 = vadd.f32 %v2522, %v2538
        %v2555 = vadd.f32 %v2523, %v2539
        %v2556 = vadd.f32 %v2524, %v2540
        %v2557 = vadd.f32 %v2525, %v2541
        %v2558 = vadd.f32 %v2526, %v2542
        %v2559 = vadd.f32 %v2527, %v2543
        %v2560 = vadd.f32 %v2528, %v2544
        %v2561 = vadd.f32 %v2529, %v2545
        %v2562 = vadd.f32 %v2530, %v2546
        %v2563 = vsel %vm976, %v2547, 0.0
        %v2564 = vsel %vm976, %v2551, 0.0
        %v2565 = vadd.f32 %v2563, %v2564
        %v2566 = vsel %vm976, %v2555, 0.0
        %v2567 = vadd.f32 %v2565, %v2566
        %v2568 = vsel %vm976, %v2559, 0.0
        %v2569 = vadd.f32 %v2567, %v2568
        %v2570 = vsel %vm976, %v2548, 0.0
        %v2571 = vsel %vm976, %v2552, 0.0
        %v2572 = vadd.f32 %v2570, %v2571
        %v2573 = vsel %vm976, %v2556, 0.0
        %v2574 = vadd.f32 %v2572, %v2573
        %v2575 = vsel %vm976, %v2560, 0.0
        %v2576 = vadd.f32 %v2574, %v2575
        %v2577 = vsel %vm976, %v2549, 0.0
        %v2578 = vsel %vm976, %v2553, 0.0
        %v2579 = vadd.f32 %v2577, %v2578
        %v2580 = vsel %vm976, %v2557, 0.0
        %v2581 = vadd.f32 %v2579, %v2580
        %v2582 = vsel %vm976, %v2561, 0.0
        %v2583 = vadd.f32 %v2581, %v2582
        %v2584 = vsel %vm976, %v2550, 0.0
        %v2585 = vsel %vm976, %v2554, 0.0
        %v2586 = vadd.f32 %v2584, %v2585
        %v2587 = vsel %vm976, %v2558, 0.0
        %v2588 = vadd.f32 %v2586, %v2587
        %v2589 = vsel %vm976, %v2562, 0.0
        %v2590 = vadd.f32 %v2588, %v2589
        %v2591 = vmul.f32 %v896, %v2507
        %v2592 = vmul.f32 %v897, %v2508
        %v2593 = vmul.f32 %v898, %v2507
        %v2594 = vmul.f32 %v899, %v2508
        %v2595 = vmul.f32 %v900, %v2509
        %v2596 = vmul.f32 %v901, %v2510
        %v2597 = vmul.f32 %v902, %v2509
        %v2598 = vmul.f32 %v903, %v2510
        %v2599 = vmul.f32 %v904, %v2511
        %v2600 = vmul.f32 %v905, %v2512
        %v2601 = vmul.f32 %v906, %v2511
        %v2602 = vmul.f32 %v907, %v2512
        %v2603 = vmul.f32 %v908, %v2513
        %v2604 = vmul.f32 %v909, %v2514
        %v2605 = vmul.f32 %v910, %v2513
        %v2606 = vmul.f32 %v911, %v2514
        %v2607 = vmul.f32 %v912, %v2370
        %v2608 = vmul.f32 %v913, %v2371
        %v2609 = vmul.f32 %v914, %v2370
        %v2610 = vmul.f32 %v915, %v2371
        %v2611 = vmul.f32 %v916, %v2372
        %v2612 = vmul.f32 %v917, %v2373
        %v2613 = vmul.f32 %v918, %v2372
        %v2614 = vmul.f32 %v919, %v2373
        %v2615 = vmul.f32 %v920, %v2374
        %v2616 = vmul.f32 %v921, %v2375
        %v2617 = vmul.f32 %v922, %v2374
        %v2618 = vmul.f32 %v923, %v2375
        %v2619 = vmul.f32 %v924, %v2376
        %v2620 = vmul.f32 %v925, %v2377
        %v2621 = vmul.f32 %v926, %v2376
        %v2622 = vmul.f32 %v927, %v2377
        %v2623 = vsub.f32 %v2591, %v2607
        %v2624 = vsub.f32 %v2592, %v2608
        %v2625 = vsub.f32 %v2593, %v2609
        %v2626 = vsub.f32 %v2594, %v2610
        %v2627 = vsub.f32 %v2595, %v2611
        %v2628 = vsub.f32 %v2596, %v2612
        %v2629 = vsub.f32 %v2597, %v2613
        %v2630 = vsub.f32 %v2598, %v2614
        %v2631 = vsub.f32 %v2599, %v2615
        %v2632 = vsub.f32 %v2600, %v2616
        %v2633 = vsub.f32 %v2601, %v2617
        %v2634 = vsub.f32 %v2602, %v2618
        %v2635 = vsub.f32 %v2603, %v2619
        %v2636 = vsub.f32 %v2604, %v2620
        %v2637 = vsub.f32 %v2605, %v2621
        %v2638 = vsub.f32 %v2606, %v2622
        %v2639 = vsel %vm976, %v2623, 0.0
        %v2640 = vsel %vm976, %v2627, 0.0
        %v2641 = vadd.f32 %v2639, %v2640
        %v2642 = vsel %vm976, %v2631, 0.0
        %v2643 = vadd.f32 %v2641, %v2642
        %v2644 = vsel %vm976, %v2635, 0.0
        %v2645 = vadd.f32 %v2643, %v2644
        %v2646 = vsel %vm976, %v2624, 0.0
        %v2647 = vsel %vm976, %v2628, 0.0
        %v2648 = vadd.f32 %v2646, %v2647
        %v2649 = vsel %vm976, %v2632, 0.0
        %v2650 = vadd.f32 %v2648, %v2649
        %v2651 = vsel %vm976, %v2636, 0.0
        %v2652 = vadd.f32 %v2650, %v2651
        %v2653 = vsel %vm976, %v2625, 0.0
        %v2654 = vsel %vm976, %v2629, 0.0
        %v2655 = vadd.f32 %v2653, %v2654
        %v2656 = vsel %vm976, %v2633, 0.0
        %v2657 = vadd.f32 %v2655, %v2656
        %v2658 = vsel %vm976, %v2637, 0.0
        %v2659 = vadd.f32 %v2657, %v2658
        %v2660 = vsel %vm976, %v2626, 0.0
        %v2661 = vsel %vm976, %v2630, 0.0
        %v2662 = vadd.f32 %v2660, %v2661
        %v2663 = vsel %vm976, %v2634, 0.0
        %v2664 = vadd.f32 %v2662, %v2663
        %v2665 = vsel %vm976, %v2638, 0.0
        %v2666 = vadd.f32 %v2664, %v2665
        %p2667 = scmp.eq.s32.totalorder %s54, 0
        // Predicated region
        $region129: #{tpu_custom_call.1} parent=79 // pred_check
          %p2668 = pneg %p2667
        $region130: #{tpu_custom_call.1} parent=79 // pred_check_branch
          %2670 = sbr.rel (%p2668) target = $region132
        $region131: #{tpu_custom_call.1} parent=79 // pred_region
          %2671 = vst.msk [vmem:[%s876] sm:$0xff] %vm976, %v2569
          %2672 = vst.msk [vmem:[%s876 + $0x8] sm:$0xff] %vm976, %v2576
          %2673 = vst.msk [vmem:[%s876 + $0x10] sm:$0xff] %vm976, %v2583
          %2674 = vst.msk [vmem:[%s876 + $0x18] sm:$0xff] %vm976, %v2590
          %2675 = vst.msk [vmem:[%s883] sm:$0xff] %vm976, %v2645
          %2676 = vst.msk [vmem:[%s883 + $0x8] sm:$0xff] %vm976, %v2652
          %2677 = vst.msk [vmem:[%s883 + $0x10] sm:$0xff] %vm976, %v2659
          %2678 = vst.msk [vmem:[%s883 + $0x18] sm:$0xff] %vm976, %v2666
        $region132: #{tpu_custom_call.1} parent=79 // pred_fallthru
          _
        %p2679 = scmp.gt.s32.totalorder %s54, 0
        // Predicated region
        $region133: #{tpu_custom_call.1} parent=79 // pred_check
          %p2680 = pneg %p2679
        $region134: #{tpu_custom_call.1} parent=79 // pred_check_branch
          %2682 = sbr.rel (%p2680) target = $region136
        $region135: #{tpu_custom_call.1} parent=79 // pred_region
          %v2683 = vld [vmem:[%s876] sm:$0xff]
          %v2684 = vld [vmem:[%s876 + $0x8] sm:$0xff]
          %v2685 = vld [vmem:[%s876 + $0x10] sm:$0xff]
          %v2686 = vld [vmem:[%s876 + $0x18] sm:$0xff]
          %v2687 = vadd.f32 %v2683, %v2569
          %v2688 = vadd.f32 %v2684, %v2576
          %v2689 = vadd.f32 %v2685, %v2583
          %v2690 = vadd.f32 %v2686, %v2590
          %2691 = vst.msk [vmem:[%s876] sm:$0xff] %vm976, %v2687
          %2692 = vst.msk [vmem:[%s876 + $0x8] sm:$0xff] %vm976, %v2688
          %2693 = vst.msk [vmem:[%s876 + $0x10] sm:$0xff] %vm976, %v2689
          %2694 = vst.msk [vmem:[%s876 + $0x18] sm:$0xff] %vm976, %v2690
          %v2695 = vld [vmem:[%s883] sm:$0xff]
          %v2696 = vld [vmem:[%s883 + $0x8] sm:$0xff]
          %v2697 = vld [vmem:[%s883 + $0x10] sm:$0xff]
          %v2698 = vld [vmem:[%s883 + $0x18] sm:$0xff]
          %v2699 = vadd.f32 %v2695, %v2645
          %v2700 = vadd.f32 %v2696, %v2652
          %v2701 = vadd.f32 %v2697, %v2659
          %v2702 = vadd.f32 %v2698, %v2666
          %2703 = vst.msk [vmem:[%s883] sm:$0xff] %vm976, %v2699
          %2704 = vst.msk [vmem:[%s883 + $0x8] sm:$0xff] %vm976, %v2700
          %2705 = vst.msk [vmem:[%s883 + $0x10] sm:$0xff] %vm976, %v2701
          %2706 = vst.msk [vmem:[%s883 + $0x18] sm:$0xff] %vm976, %v2702
        $region136: #{tpu_custom_call.1} parent=79 // pred_fallthru
          _
        // Predicated region
        $region137: #{tpu_custom_call.1} parent=79 // pred_check
          %p2707 = pneg %p2667
        $region138: #{tpu_custom_call.1} parent=79 // pred_check_branch
          %2709 = sbr.rel (%p2707) target = $region140
        $region139: #{tpu_custom_call.1} parent=79 // pred_region
          %s2710 = ssub.f32 1.0, %s887
          %v2711 = vstv %s887
          %v2712 = vmul.f32 %v2711, %v888
          %v2713 = vmul.f32 %v2711, %v889
          %v2714 = vmul.f32 %v2711, %v890
          %v2715 = vmul.f32 %v2711, %v891
          %v2716 = vld [vmem:[%s876] sm:$0xff]
          %v2717 = vld [vmem:[%s876 + $0x8] sm:$0xff]
          %v2718 = vld [vmem:[%s876 + $0x10] sm:$0xff]
          %v2719 = vld [vmem:[%s876 + $0x18] sm:$0xff]
          %v2720 = vstv %s2710
          %v2721 = vmul.f32 %v2720, %v2716
          %v2722 = vmul.f32 %v2720, %v2717
          %v2723 = vmul.f32 %v2720, %v2718
          %v2724 = vmul.f32 %v2720, %v2719
          %v2725 = vadd.f32 %v2712, %v2721
          %v2726 = vadd.f32 %v2713, %v2722
          %v2727 = vadd.f32 %v2714, %v2723
          %v2728 = vadd.f32 %v2715, %v2724
          %2729 = vst.msk [vmem:[%s876] sm:$0xff] %vm976, %v2725
          %2730 = vst.msk [vmem:[%s876 + $0x8] sm:$0xff] %vm976, %v2726
          %2731 = vst.msk [vmem:[%s876 + $0x10] sm:$0xff] %vm976, %v2727
          %2732 = vst.msk [vmem:[%s876 + $0x18] sm:$0xff] %vm976, %v2728
          %v2733 = vmul.f32 %v2711, %v892
          %v2734 = vmul.f32 %v2711, %v893
          %v2735 = vmul.f32 %v2711, %v894
          %v2736 = vmul.f32 %v2711, %v895
          %v2737 = vld [vmem:[%s883] sm:$0xff]
          %v2738 = vld [vmem:[%s883 + $0x8] sm:$0xff]
          %v2739 = vld [vmem:[%s883 + $0x10] sm:$0xff]
          %v2740 = vld [vmem:[%s883 + $0x18] sm:$0xff]
          %v2741 = vmul.f32 %v2720, %v2737
          %v2742 = vmul.f32 %v2720, %v2738
          %v2743 = vmul.f32 %v2720, %v2739
          %v2744 = vmul.f32 %v2720, %v2740
          %v2745 = vadd.f32 %v2733, %v2741
          %v2746 = vadd.f32 %v2734, %v2742
          %v2747 = vadd.f32 %v2735, %v2743
          %v2748 = vadd.f32 %v2736, %v2744
          %2749 = vst.msk [vmem:[%s883] sm:$0xff] %vm976, %v2745
          %2750 = vst.msk [vmem:[%s883 + $0x8] sm:$0xff] %vm976, %v2746
          %2751 = vst.msk [vmem:[%s883 + $0x10] sm:$0xff] %vm976, %v2747
          %2752 = vst.msk [vmem:[%s883 + $0x18] sm:$0xff] %vm976, %v2748
        $region140: #{tpu_custom_call.1} parent=79 // pred_fallthru
          _
        %s2753 = sand.u32 %s427, 1
        %s2754 = scalar_lea.sflag [#allocation4], %s2753
        %s2755 = sand.u32 %s427, 1
        %s2756 = smul.addr %s2755, 32
        %s2757 = scalar_lea.vmem [#allocation22], %s2756
        %s2758 = sand.u32 %s453, 1
        %s2759 = scalar_lea.sflag [#allocation24], %s2758
        %s2760 = sand.u32 %s453, 1
        %s2761 = smul.addr %s2760, 32
        %s2762 = scalar_lea.vmem [#allocation23], %s2761
        // Predicated region
        $region141: #{tpu_custom_call.1} parent=79 // pred_check
          %p2763 = pneg %p437
        $region142: #{tpu_custom_call.1} parent=79 // pred_check_branch
          %2765 = sbr.rel (%p2763) target = $region144
        $region143: #{tpu_custom_call.1} parent=79 // pred_region
          %s2767 = ssub.s32 512, 512
          %2768 = vsyncadd %s2754, %s2767
          %s2769 = smul.addr %s53, 4
          %s2770 = smul.addr %s2769, 128
          %s2771 = scalar_lea.hbm %s15, %s2770
          %s2772 = sshll.u32 %s2757, 4
          %s2773 = int_to_ptr.vmem [resolvable:$true] %s2772
          %2778 = dma.vmem_to_hbm [thread:$0]  %s2773, 512, %s2771, %s2754, 128, 128, 8
        $region144: #{tpu_custom_call.1} parent=79 // pred_fallthru
          _
        // Predicated region
        $region145: #{tpu_custom_call.1} parent=79 // pred_check
          %p2779 = pneg %p463
        $region146: #{tpu_custom_call.1} parent=79 // pred_check_branch
          %2781 = sbr.rel (%p2779) target = $region148
        $region147: #{tpu_custom_call.1} parent=79 // pred_region
          %s2783 = ssub.s32 512, 512
          %2784 = vsyncadd %s2759, %s2783
          %s2785 = smul.addr %s53, 4
          %s2786 = smul.addr %s2785, 128
          %s2787 = scalar_lea.hbm %s16, %s2786
          %s2788 = sshll.u32 %s2762, 4
          %s2789 = int_to_ptr.vmem [resolvable:$true] %s2788
          %2794 = dma.vmem_to_hbm [thread:$0]  %s2789, 512, %s2787, %s2759, 128, 128, 8
        $region148: #{tpu_custom_call.1} parent=79 // pred_fallthru
          _
      $region80: #{tpu_custom_call.1} parent=5 // pred_fallthru
        _
      %p2795 = scmp.le.s32.totalorder 2, %s44
      // Predicated region
      $region149: #{tpu_custom_call.1} parent=5 // pred_check
        %p2796 = pneg %p2795
      $region150: #{tpu_custom_call.1} parent=5 // pred_check_branch
        %2798 = sbr.rel (%p2796) target = $region152
      $region151: #{tpu_custom_call.1} parent=5 // pred_region
        %s2799 = ssub.s32 %s44, 2
        // Predicated region
        $region153: #{tpu_custom_call.1} parent=151 // pred_check
          %p2800 = pneg %p443
        $region154: #{tpu_custom_call.1} parent=151 // pred_check_branch
          %2802 = sbr.rel (%p2800) target = $region156
        $region155: #{tpu_custom_call.1} parent=151 // pred_region
          %s2803 = sand.u32 %s428, 1
          %s2804 = scalar_lea.sflag [#allocation4], %s2803
          %s2805 = sand.u32 %s428, 1
          %s2806 = smul.addr %s2805, 32
          %s2807 = scalar_lea.vmem [#allocation22], %s2806
          %2808 = dma.done %s2804, 512
        $region156: #{tpu_custom_call.1} parent=151 // pred_fallthru
          _
        // Predicated region
        $region157: #{tpu_custom_call.1} parent=151 // pred_check
          %p2809 = pneg %p469
        $region158: #{tpu_custom_call.1} parent=151 // pred_check_branch
          %2811 = sbr.rel (%p2809) target = $region160
        $region159: #{tpu_custom_call.1} parent=151 // pred_region
          %s2812 = sand.u32 %s454, 1
          %s2813 = scalar_lea.sflag [#allocation24], %s2812
          %s2814 = sand.u32 %s454, 1
          %s2815 = smul.addr %s2814, 32
          %s2816 = scalar_lea.vmem [#allocation23], %s2815
          %2817 = dma.done %s2813, 512
        $region160: #{tpu_custom_call.1} parent=151 // pred_fallthru
          _
      $region152: #{tpu_custom_call.1} parent=5 // pred_fallthru
        _
    $region6: #{tpu_custom_call.1} parent=1 // loop_footer
      %s48 = sadd.s32 1, %s44
    $region7: #{tpu_custom_call.1} parent=1 // loop_footer_branch
      %43 = sbr.rel target = $region3
    $region8: #{tpu_custom_call.1} parent=1 // loop_exit
      _
    %2818 = vsyncpa [#allocation3], 1
    %s2819 = scalar_lea.sflag [#allocation3], 1
    %2820 = vsyncpa %s2819, 1
    %2821 = vsyncpa [#allocation7], 1
    %s2822 = scalar_lea.sflag [#allocation7], 1
    %2823 = vsyncpa %s2822, 1
    %2824 = vsyncpa [#allocation10], 1
    %s2825 = scalar_lea.sflag [#allocation10], 1
    %2826 = vsyncpa %s2825, 1
    %2827 = vsyncpa [#allocation13], 1
    %s2828 = scalar_lea.sflag [#allocation13], 1
    %2829 = vsyncpa %s2828, 1
    %2830 = vsyncpa [#allocation16], 1
    %2831 = vsyncpa [#allocation19], 1
    %2832 = vsyncpa [#allocation4], 1
    %s2833 = scalar_lea.sflag [#allocation4], 1
    %2834 = vsyncpa %s2833, 1
    %2835 = vsyncpa [#allocation24], 1
    %s2836 = scalar_lea.sflag [#allocation24], 1
    %2837 = vsyncpa %s2836, 1
    %2838 = vsyncpa [#allocation5], 1
    %s2839 = scalar_lea.sflag [#allocation5], 1
    %2840 = vsyncpa %s2839, 1

</llo_original>
